<compile_context>
chip_gen: v5e
topology: v5e:2x2
jax: 0.10.0
libtpu: 0.0.40
codegen_flags: <defaults>
</compile_context>

<pallas_src>
import numpy as np
import jax
import jax.numpy as jnp
from jax import lax
from jax.experimental import pallas as pl
from jax.experimental.pallas import tpu as pltpu


def _make_fused_kernel(Cin, Cmid, oc, H, W):
    Hp, Wp = H + 2, W + 2
    P = Hp * Wp                 # flattened padded image length (lane axis)
    G = Wp + 1                  # guard width for shifted tap slices
    Wo = 2 * W

    taps9 = [(ky - 1) * Wp + (kx - 1) for ky in range(3) for kx in range(3)]
    taps4 = (0, 1, Wp, Wp + 1)  # polyphase y-shifts (dy,dx)=(0,0),(0,1),(1,0),(1,1)

    def kernel(x_ref, w1_ref, sb1_ref, w2_ref, sb2_ref, wph_ref, sb3_ref,
               smat_ref, mask_ref, skip_ref, o_ref, sg_ref, imc_ref):
        mask = mask_ref[...]                                    # (1, P) interior mask

        def conv3x3_bn_relu(src, ci, wmat, sb):
            # src: (ci, P) padded-flat image with zero borders -> (co, P)
            sg_ref[0:ci, 0:G] = jnp.zeros((ci, G), jnp.float32)
            sg_ref[0:ci, G:G + P] = src
            sg_ref[0:ci, G + P:G + P + G] = jnp.zeros((ci, G), jnp.float32)
            # im2col: stack the 9 tap-shifted copies on the contraction axis.
            for t, d in enumerate(taps9):
                imc_ref[t * ci:(t + 1) * ci, :] = sg_ref[0:ci, G + d:G + d + P]
            acc = jnp.dot(wmat, imc_ref[0:9 * ci, :],
                          preferred_element_type=jnp.float32)   # (co, P)
            y = acc * sb[0] + sb[1]                             # folded BatchNorm
            return jnp.maximum(y, 0.0) * mask                   # ReLU + zero borders

        x0 = x_ref[...]                                          # (Cin, P)
        y1 = conv3x3_bn_relu(x0, Cin, w1_ref[...], sb1_ref[...])
        y2 = conv3x3_bn_relu(y1, Cmid, w2_ref[...], sb2_ref[...])

        # --- ConvTranspose2d(k=3, stride=2, pad=1, out_pad=1): polyphase ---
        sg_ref[0:Cmid, G:G + P] = y2
        sg_ref[0:Cmid, G + P:G + P + G] = jnp.zeros((Cmid, G), jnp.float32)
        for k, d in enumerate(taps4):
            imc_ref[k * Cmid:(k + 1) * Cmid, :] = sg_ref[0:Cmid, G + d:G + d + P]
        u = jnp.dot(wph_ref[...], imc_ref[0:4 * Cmid, :],
                    preferred_element_type=jnp.float32)          # (4*oc, P)
        u = jnp.maximum(u * sb3_ref[0] + sb3_ref[1], 0.0)        # BN + ReLU

        # Width interleave of the 4 phases via tiny 0/1 spread matmuls; the row
        # interleave is free addressing into the lane-dense NCHW-flat output.
        s0 = smat_ref[0]                                         # (Wp, Wo) even cols
        s1 = smat_ref[1]                                         # (Wp, Wo) odd cols
        for i in range(H):
            ph = u[:, (i + 1) * Wp:(i + 2) * Wp]                 # (4*oc, Wp)
            pair = (jnp.dot(ph[0:2 * oc, :], s0, preferred_element_type=jnp.float32)
                    + jnp.dot(ph[2 * oc:4 * oc, :], s1,
                              preferred_element_type=jnp.float32))   # (2*oc, Wo)
            o_ref[0:oc, (2 * i) * Wo:(2 * i + 1) * Wo] = pair[0:oc, :]
            o_ref[0:oc, (2 * i + 1) * Wo:(2 * i + 2) * Wo] = pair[oc:2 * oc, :]

        o_ref[oc:2 * oc, :] = skip_ref[...]                      # fused channel concat

    return kernel


def _fold_bn(conv_bias, gamma, beta, mean, var, eps=1e-5):
    s = gamma / jnp.sqrt(var + eps)
    return s, beta + s * (conv_bias - mean)


def init_params(key, in_ch, out_ch):
    c_mid = out_ch * 2
    ks = jax.random.split(key, 9)

    def bn(k, c):
        k1, k2, k3, k4 = jax.random.split(k, 4)
        gamma = 1.0 + 0.1 * jax.random.normal(k1, (c,), jnp.float32)
        beta = 0.1 * jax.random.normal(k2, (c,), jnp.float32)
        mean = 0.1 * jax.random.normal(k3, (c,), jnp.float32)
        var = jax.random.uniform(k4, (c,), jnp.float32, 0.5, 1.5)
        return gamma, beta, mean, var

    w1 = 0.1 * jax.random.normal(ks[0], (3, 3, in_ch, c_mid), jnp.float32)   # HWIO
    b1 = 0.05 * jax.random.normal(ks[1], (c_mid,), jnp.float32)
    s1, fb1 = _fold_bn(b1, *bn(ks[2], c_mid))

    w2 = 0.1 * jax.random.normal(ks[3], (3, 3, c_mid, c_mid), jnp.float32)
    b2 = 0.05 * jax.random.normal(ks[4], (c_mid,), jnp.float32)
    s2, fb2 = _fold_bn(b2, *bn(ks[5], c_mid))

    # ConvTranspose2d weight (in=c_mid, out=out_ch, 3, 3) -> flipped HWIO forward kernel
    wt = 0.1 * jax.random.normal(ks[6], (c_mid, out_ch, 3, 3), jnp.float32)
    bt = 0.05 * jax.random.normal(ks[7], (out_ch,), jnp.float32)
    w3 = jnp.transpose(wt[:, :, ::-1, ::-1], (2, 3, 0, 1))                   # (3,3,c_mid,out_ch)
    s3, fb3 = _fold_bn(bt, *bn(ks[8], out_ch))

    return dict(w1=w1, s1=s1, b1=fb1, w2=w2, s2=s2, b2=fb2, w3=w3, s3=s3, b3=fb3)


def upsample_layer_forward(x_nchw, skip_nchw, params):
    x = x_nchw.astype(jnp.float32)
    skip = skip_nchw.astype(jnp.float32)
    N, Cin, H, W = x.shape
    oc = skip.shape[1]
    Cmid = params["w1"].shape[-1]
    Hp, Wp = H + 2, W + 2
    P = Hp * Wp
    G = Wp + 1
    Ho, Wo = 2 * H, 2 * W
    Cmax = max(Cin, Cmid)

    # Padded-flat NCHW input (one tiny pad + free reshapes; no NHWC transposes).
    xpf = jnp.pad(x, ((0, 0), (0, 0), (1, 1), (1, 1))).reshape(N, Cin, P)
    skip_f = skip.reshape(N, oc, Ho * Wo)

    def pack_conv(w):  # HWIO (3,3,ci,co) -> (co, 9*ci), col = (ky*3+kx)*ci + c
        co = w.shape[-1]
        return jnp.transpose(w, (3, 0, 1, 2)).reshape(co, -1)

    w1m = pack_conv(params["w1"])
    w2m = pack_conv(params["w2"])
    sb1 = jnp.stack([params["s1"], params["b1"]]).reshape(2, Cmid, 1)
    sb2 = jnp.stack([params["s2"], params["b2"]]).reshape(2, Cmid, 1)

    # Polyphase weights: rows = [phase(ev,ev); (od,ev); (ev,od); (od,od)] x out_ch,
    # K blocks = y shifted by (dy,dx) = (0,0),(0,1),(1,0),(1,1).
    w3 = params["w3"]  # (3,3,Cmid,oc) flipped kernel
    def phase_block(taps):
        B = jnp.zeros((oc, 4 * Cmid), jnp.float32)
        for k, ky, kx in taps:
            B = B.at[:, k * Cmid:(k + 1) * Cmid].set(w3[ky, kx].T)
        return B
    wph = jnp.concatenate([
        phase_block([(0, 1, 1)]),
        phase_block([(0, 0, 1), (2, 2, 1)]),
        phase_block([(0, 1, 0), (1, 1, 2)]),
        phase_block([(0, 0, 0), (1, 0, 2), (2, 2, 0), (3, 2, 2)]),
    ], axis=0)                                                   # (4*oc, 4*Cmid)
    sb3 = jnp.stack([jnp.tile(params["s3"], 4),
                     jnp.tile(params["b3"], 4)]).reshape(2, 4 * oc, 1)

    # Constant 0/1 width-spread matrices and interior mask (built at trace time).
    S_np = np.zeros((2, Wp, Wo), np.float32)
    for b in range(2):
        S_np[b, 1:W + 1, b::2] = np.eye(W, dtype=np.float32)
    m_np = np.zeros((1, Hp, Wp), np.float32)
    m_np[:, 1:H + 1, 1:W + 1] = 1.0
    smat = jnp.asarray(S_np)
    mask = jnp.asarray(m_np.reshape(1, P))

    kernel = _make_fused_kernel(Cin, Cmid, oc, H, W)
    out_flat = pl.pallas_call(
        kernel,
        out_shape=jax.ShapeDtypeStruct((N, 2 * oc, Ho * Wo), jnp.float32),
        grid=(N,),
        in_specs=[
            pl.BlockSpec((None, Cin, P), lambda n: (n, 0, 0)),
            pl.BlockSpec((Cmid, 9 * Cin), lambda n: (0, 0)),
            pl.BlockSpec((2, Cmid, 1), lambda n: (0, 0, 0)),
            pl.BlockSpec((Cmid, 9 * Cmid), lambda n: (0, 0)),
            pl.BlockSpec((2, Cmid, 1), lambda n: (0, 0, 0)),
            pl.BlockSpec((4 * oc, 4 * Cmid), lambda n: (0, 0)),
            pl.BlockSpec((2, 4 * oc, 1), lambda n: (0, 0, 0)),
            pl.BlockSpec((2, Wp, Wo), lambda n: (0, 0, 0)),
            pl.BlockSpec((1, P), lambda n: (0, 0)),
            pl.BlockSpec((None, oc, Ho * Wo), lambda n: (n, 0, 0)),
        ],
        out_specs=pl.BlockSpec((None, 2 * oc, Ho * Wo), lambda n: (n, 0, 0)),
        scratch_shapes=[
            pltpu.VMEM((Cmax, P + 2 * G), jnp.float32),   # guarded padded-flat image
            pltpu.VMEM((9 * Cmax, P), jnp.float32),       # im2col / polyphase RHS
        ],
        compiler_params=pltpu.CompilerParams(dimension_semantics=("parallel",)),
    )(xpf, w1m, sb1, w2m, sb2, wph, sb3, smat, mask, skip_f)

    return out_flat.reshape(N, 2 * oc, Ho, Wo)


def _ref_forward(x_nchw, skip_nchw, params):
    """Pure-JAX (lax.conv) reference for correctness checking."""
    x = jnp.transpose(x_nchw, (0, 2, 3, 1)).astype(jnp.float32)

    def cbr(v, w, s, b, lhs_dil=(1, 1), pad=((1, 1), (1, 1))):
        y = lax.conv_general_dilated(
            v, w, window_strides=(1, 1), padding=pad, lhs_dilation=lhs_dil,
            dimension_numbers=("NHWC", "HWIO", "NHWC"),
            precision=lax.Precision.HIGHEST)
        return jnp.maximum(y * s + b, 0.0)

    y = cbr(x, params["w1"], params["s1"], params["b1"])
    y = cbr(y, params["w2"], params["s2"], params["b2"])
    u = cbr(y, params["w3"], params["s3"], params["b3"],
            lhs_dil=(2, 2), pad=((1, 2), (1, 2)))
    u_nchw = jnp.transpose(u, (0, 3, 1, 2))
    return jnp.concatenate([u_nchw, skip_nchw.astype(jnp.float32)], axis=1)


if __name__ == "__main__":
    key = jax.random.PRNGKey(0)
    k_x, k_skip, k_p = jax.random.split(key, 3)

    N, in_ch, out_ch, H, W = 2, 4, 4, 16, 16
    x = jax.random.normal(k_x, (N, in_ch, H, W), jnp.float32)
    skip = jax.random.normal(k_skip, (N, out_ch, 2 * H, 2 * W), jnp.float32)
    params = init_params(k_p, in_ch, out_ch)

    out = jax.jit(upsample_layer_forward)(x, skip, params)
    out = jax.block_until_ready(out)

    assert out.shape == (N, 2 * out_ch, 2 * H, 2 * W), out.shape

    ref = _ref_forward(x, skip, params)
    np.testing.assert_allclose(np.asarray(out), np.asarray(ref), rtol=1e-2, atol=1e-2)

    print("KERNEL_OK")
</pallas_src>

<mosaic_0001>
module attributes {stable_mosaic.version = 11 : i64} {
  func.func @kernel(%arg0: i32, %arg1: memref<1x4x324xf32, #tpu.memory_space<vmem>>, %arg2: memref<8x36xf32, #tpu.memory_space<vmem>>, %arg3: memref<2x8x1xf32, #tpu.memory_space<vmem>>, %arg4: memref<8x72xf32, #tpu.memory_space<vmem>>, %arg5: memref<2x8x1xf32, #tpu.memory_space<vmem>>, %arg6: memref<16x32xf32, #tpu.memory_space<vmem>>, %arg7: memref<2x16x1xf32, #tpu.memory_space<vmem>>, %arg8: memref<2x18x32xf32, #tpu.memory_space<vmem>>, %arg9: memref<1x324xf32, #tpu.memory_space<vmem>>, %arg10: memref<1x4x1024xf32, #tpu.memory_space<vmem>>, %arg11: memref<1x8x1024xf32, #tpu.memory_space<vmem>>, %arg12: memref<8x362xf32, #tpu.memory_space<vmem>>, %arg13: memref<72x324xf32, #tpu.memory_space<vmem>>) attributes {dimension_semantics = [#tpu.dimension_semantics<parallel>], iteration_bounds = array<i64: 2>, scalar_prefetch = 0 : i64, scratch_operands = 2 : i64, tpu.core_type = #tpu.core_type<tc>, window_params = [{transform_indices = @transform_0, window_bounds = array<i64: 1, 4, 324>}, {pipeline_mode = #tpu.pipeline_mode<synchronous>, transform_indices = @transform_1, window_bounds = array<i64: 8, 36>}, {pipeline_mode = #tpu.pipeline_mode<synchronous>, transform_indices = @transform_2, window_bounds = array<i64: 2, 8, 1>}, {pipeline_mode = #tpu.pipeline_mode<synchronous>, transform_indices = @transform_3, window_bounds = array<i64: 8, 72>}, {pipeline_mode = #tpu.pipeline_mode<synchronous>, transform_indices = @transform_4, window_bounds = array<i64: 2, 8, 1>}, {pipeline_mode = #tpu.pipeline_mode<synchronous>, transform_indices = @transform_5, window_bounds = array<i64: 16, 32>}, {pipeline_mode = #tpu.pipeline_mode<synchronous>, transform_indices = @transform_6, window_bounds = array<i64: 2, 16, 1>}, {pipeline_mode = #tpu.pipeline_mode<synchronous>, transform_indices = @transform_7, window_bounds = array<i64: 2, 18, 32>}, {pipeline_mode = #tpu.pipeline_mode<synchronous>, transform_indices = @transform_8, window_bounds = array<i64: 1, 324>}, {transform_indices = @transform_9, window_bounds = array<i64: 1, 4, 1024>}, {transform_indices = @transform_10, window_bounds = array<i64: 1, 8, 1024>}]} {
    %c0 = arith.constant 0 : index
    %c0_0 = arith.constant 0 : index
    %0 = vector.load %arg9[%c0, %c0_0] : memref<1x324xf32, #tpu.memory_space<vmem>>, vector<1x324xf32>
    %c0_1 = arith.constant 0 : index
    %c0_2 = arith.constant 0 : index
    %c0_3 = arith.constant 0 : index
    %1 = vector.load %arg1[%c0_1, %c0_2, %c0_3] : memref<1x4x324xf32, #tpu.memory_space<vmem>>, vector<1x4x324xf32>
    %2 = vector.shape_cast %1 : vector<1x4x324xf32> to vector<4x324xf32>
    %c0_4 = arith.constant 0 : index
    %c0_5 = arith.constant 0 : index
    %3 = vector.load %arg2[%c0_4, %c0_5] : memref<8x36xf32, #tpu.memory_space<vmem>>, vector<8x36xf32>
    %c0_6 = arith.constant 0 : index
    %c0_7 = arith.constant 0 : index
    %c0_8 = arith.constant 0 : index
    %4 = vector.load %arg3[%c0_6, %c0_7, %c0_8] : memref<2x8x1xf32, #tpu.memory_space<vmem>>, vector<2x8x1xf32>
    %cst = arith.constant 0.000000e+00 : f32
    %5 = vector.broadcast %cst : f32 to vector<4x19xf32>
    %c0_9 = arith.constant 0 : index
    %c0_10 = arith.constant 0 : index
    %6 = vector.load %arg12[%c0_9, %c0_10] : memref<8x362xf32, #tpu.memory_space<vmem>>, vector<4x19xf32>
    tpu.vector_store %arg12[%c0_9, %c0_10], %5 {strides = array<i32>} : memref<8x362xf32, #tpu.memory_space<vmem>>, vector<4x19xf32>,
    %c0_11 = arith.constant 0 : index
    %c19 = arith.constant 19 : index
    %7 = vector.load %arg12[%c0_11, %c19] : memref<8x362xf32, #tpu.memory_space<vmem>>, vector<4x324xf32>
    tpu.vector_store %arg12[%c0_11, %c19], %2 {strides = array<i32>} : memref<8x362xf32, #tpu.memory_space<vmem>>, vector<4x324xf32>,
    %cst_12 = arith.constant 0.000000e+00 : f32
    %8 = vector.broadcast %cst_12 : f32 to vector<4x19xf32>
    %c0_13 = arith.constant 0 : index
    %c343 = arith.constant 343 : index
    %9 = vector.load %arg12[%c0_13, %c343] : memref<8x362xf32, #tpu.memory_space<vmem>>, vector<4x19xf32>
    tpu.vector_store %arg12[%c0_13, %c343], %8 {strides = array<i32>} : memref<8x362xf32, #tpu.memory_space<vmem>>, vector<4x19xf32>,
    %c0_14 = arith.constant 0 : index
    %c0_15 = arith.constant 0 : index
    %10 = vector.load %arg12[%c0_14, %c0_15] : memref<8x362xf32, #tpu.memory_space<vmem>>, vector<4x324xf32>
    %c0_16 = arith.constant 0 : index
    %c0_17 = arith.constant 0 : index
    %11 = vector.load %arg13[%c0_16, %c0_17] : memref<72x324xf32, #tpu.memory_space<vmem>>, vector<4x324xf32>
    tpu.vector_store %arg13[%c0_16, %c0_17], %10 {strides = array<i32>} : memref<72x324xf32, #tpu.memory_space<vmem>>, vector<4x324xf32>,
    %c0_18 = arith.constant 0 : index
    %c1 = arith.constant 1 : index
    %12 = vector.load %arg12[%c0_18, %c1] : memref<8x362xf32, #tpu.memory_space<vmem>>, vector<4x324xf32>
    %c4 = arith.constant 4 : index
    %c0_19 = arith.constant 0 : index
    %13 = vector.load %arg13[%c4, %c0_19] : memref<72x324xf32, #tpu.memory_space<vmem>>, vector<4x324xf32>
    tpu.vector_store %arg13[%c4, %c0_19], %12 {strides = array<i32>} : memref<72x324xf32, #tpu.memory_space<vmem>>, vector<4x324xf32>,
    %c0_20 = arith.constant 0 : index
    %c2 = arith.constant 2 : index
    %14 = vector.load %arg12[%c0_20, %c2] : memref<8x362xf32, #tpu.memory_space<vmem>>, vector<4x324xf32>
    %c8 = arith.constant 8 : index
    %c0_21 = arith.constant 0 : index
    %15 = vector.load %arg13[%c8, %c0_21] : memref<72x324xf32, #tpu.memory_space<vmem>>, vector<4x324xf32>
    tpu.vector_store %arg13[%c8, %c0_21], %14 {strides = array<i32>} : memref<72x324xf32, #tpu.memory_space<vmem>>, vector<4x324xf32>,
    %c0_22 = arith.constant 0 : index
    %c18 = arith.constant 18 : index
    %16 = vector.load %arg12[%c0_22, %c18] : memref<8x362xf32, #tpu.memory_space<vmem>>, vector<4x324xf32>
    %c12 = arith.constant 12 : index
    %c0_23 = arith.constant 0 : index
    %17 = vector.load %arg13[%c12, %c0_23] : memref<72x324xf32, #tpu.memory_space<vmem>>, vector<4x324xf32>
    tpu.vector_store %arg13[%c12, %c0_23], %16 {strides = array<i32>} : memref<72x324xf32, #tpu.memory_space<vmem>>, vector<4x324xf32>,
    %c0_24 = arith.constant 0 : index
    %c19_25 = arith.constant 19 : index
    %18 = vector.load %arg12[%c0_24, %c19_25] : memref<8x362xf32, #tpu.memory_space<vmem>>, vector<4x324xf32>
    %c16 = arith.constant 16 : index
    %c0_26 = arith.constant 0 : index
    %19 = vector.load %arg13[%c16, %c0_26] : memref<72x324xf32, #tpu.memory_space<vmem>>, vector<4x324xf32>
    tpu.vector_store %arg13[%c16, %c0_26], %18 {strides = array<i32>} : memref<72x324xf32, #tpu.memory_space<vmem>>, vector<4x324xf32>,
    %c0_27 = arith.constant 0 : index
    %c20 = arith.constant 20 : index
    %20 = vector.load %arg12[%c0_27, %c20] : memref<8x362xf32, #tpu.memory_space<vmem>>, vector<4x324xf32>
    %c20_28 = arith.constant 20 : index
    %c0_29 = arith.constant 0 : index
    %21 = vector.load %arg13[%c20_28, %c0_29] : memref<72x324xf32, #tpu.memory_space<vmem>>, vector<4x324xf32>
    tpu.vector_store %arg13[%c20_28, %c0_29], %20 {strides = array<i32>} : memref<72x324xf32, #tpu.memory_space<vmem>>, vector<4x324xf32>,
    %c0_30 = arith.constant 0 : index
    %c36 = arith.constant 36 : index
    %22 = vector.load %arg12[%c0_30, %c36] : memref<8x362xf32, #tpu.memory_space<vmem>>, vector<4x324xf32>
    %c24 = arith.constant 24 : index
    %c0_31 = arith.constant 0 : index
    %23 = vector.load %arg13[%c24, %c0_31] : memref<72x324xf32, #tpu.memory_space<vmem>>, vector<4x324xf32>
    tpu.vector_store %arg13[%c24, %c0_31], %22 {strides = array<i32>} : memref<72x324xf32, #tpu.memory_space<vmem>>, vector<4x324xf32>,
    %c0_32 = arith.constant 0 : index
    %c37 = arith.constant 37 : index
    %24 = vector.load %arg12[%c0_32, %c37] : memref<8x362xf32, #tpu.memory_space<vmem>>, vector<4x324xf32>
    %c28 = arith.constant 28 : index
    %c0_33 = arith.constant 0 : index
    %25 = vector.load %arg13[%c28, %c0_33] : memref<72x324xf32, #tpu.memory_space<vmem>>, vector<4x324xf32>
    tpu.vector_store %arg13[%c28, %c0_33], %24 {strides = array<i32>} : memref<72x324xf32, #tpu.memory_space<vmem>>, vector<4x324xf32>,
    %c0_34 = arith.constant 0 : index
    %c38 = arith.constant 38 : index
    %26 = vector.load %arg12[%c0_34, %c38] : memref<8x362xf32, #tpu.memory_space<vmem>>, vector<4x324xf32>
    %c32 = arith.constant 32 : index
    %c0_35 = arith.constant 0 : index
    %27 = vector.load %arg13[%c32, %c0_35] : memref<72x324xf32, #tpu.memory_space<vmem>>, vector<4x324xf32>
    tpu.vector_store %arg13[%c32, %c0_35], %26 {strides = array<i32>} : memref<72x324xf32, #tpu.memory_space<vmem>>, vector<4x324xf32>,
    %c0_36 = arith.constant 0 : index
    %c0_37 = arith.constant 0 : index
    %28 = vector.load %arg13[%c0_36, %c0_37] : memref<72x324xf32, #tpu.memory_space<vmem>>, vector<36x324xf32>
    %cst_38 = arith.constant dense<0.000000e+00> : vector<8x324xf32>
    %29 = tpu.matmul %3, %28, %cst_38 {dimension_numbers = #tpu.dot_dimension_numbers<[1], [0], [0], [1], [0, 0, 1, 1], [], []>} : vector<8x36xf32>, vector<36x324xf32>, vector<8x324xf32> -> vector<8x324xf32>
    %30 = vector.extract_strided_slice %4 {offsets = [0, 0, 0], sizes = [1, 8, 1], strides = [1, 1, 1]} : vector<2x8x1xf32> to vector<1x8x1xf32>
    %31 = vector.shape_cast %30 : vector<1x8x1xf32> to vector<8x1xf32>
    %32 = vector.broadcast %31 : vector<8x1xf32> to vector<8x324xf32>
    %33 = arith.mulf %29, %32 : vector<8x324xf32>
    %34 = vector.extract_strided_slice %4 {offsets = [1, 0, 0], sizes = [1, 8, 1], strides = [1, 1, 1]} : vector<2x8x1xf32> to vector<1x8x1xf32>
    %35 = vector.shape_cast %34 : vector<1x8x1xf32> to vector<8x1xf32>
    %36 = vector.broadcast %35 : vector<8x1xf32> to vector<8x324xf32>
    %37 = arith.addf %33, %36 : vector<8x324xf32>
    %cst_39 = arith.constant 0.000000e+00 : f32
    %38 = vector.broadcast %cst_39 : f32 to vector<8x324xf32>
    %39 = arith.maximumf %37, %38 : vector<8x324xf32>
    %40 = vector.broadcast %0 : vector<1x324xf32> to vector<8x324xf32>
    %41 = arith.mulf %39, %40 : vector<8x324xf32>
    %c0_40 = arith.constant 0 : index
    %c0_41 = arith.constant 0 : index
    %42 = vector.load %arg4[%c0_40, %c0_41] : memref<8x72xf32, #tpu.memory_space<vmem>>, vector<8x72xf32>
    %c0_42 = arith.constant 0 : index
    %c0_43 = arith.constant 0 : index
    %c0_44 = arith.constant 0 : index
    %43 = vector.load %arg5[%c0_42, %c0_43, %c0_44] : memref<2x8x1xf32, #tpu.memory_space<vmem>>, vector<2x8x1xf32>
    %cst_45 = arith.constant 0.000000e+00 : f32
    %44 = vector.broadcast %cst_45 : f32 to vector<8x19xf32>
    %c0_46 = arith.constant 0 : index
    %c0_47 = arith.constant 0 : index
    %45 = vector.load %arg12[%c0_46, %c0_47] : memref<8x362xf32, #tpu.memory_space<vmem>>, vector<8x19xf32>
    tpu.vector_store %arg12[%c0_46, %c0_47], %44 {strides = array<i32>} : memref<8x362xf32, #tpu.memory_space<vmem>>, vector<8x19xf32>,
    %c0_48 = arith.constant 0 : index
    %c19_49 = arith.constant 19 : index
    %46 = vector.load %arg12[%c0_48, %c19_49] : memref<8x362xf32, #tpu.memory_space<vmem>>, vector<8x324xf32>
    tpu.vector_store %arg12[%c0_48, %c19_49], %41 {strides = array<i32>} : memref<8x362xf32, #tpu.memory_space<vmem>>, vector<8x324xf32>,
    %cst_50 = arith.constant 0.000000e+00 : f32
    %47 = vector.broadcast %cst_50 : f32 to vector<8x19xf32>
    %c0_51 = arith.constant 0 : index
    %c343_52 = arith.constant 343 : index
    %48 = vector.load %arg12[%c0_51, %c343_52] : memref<8x362xf32, #tpu.memory_space<vmem>>, vector<8x19xf32>
    tpu.vector_store %arg12[%c0_51, %c343_52], %47 {strides = array<i32>} : memref<8x362xf32, #tpu.memory_space<vmem>>, vector<8x19xf32>,
    %c0_53 = arith.constant 0 : index
    %c0_54 = arith.constant 0 : index
    %49 = vector.load %arg12[%c0_53, %c0_54] : memref<8x362xf32, #tpu.memory_space<vmem>>, vector<8x324xf32>
    %c0_55 = arith.constant 0 : index
    %c0_56 = arith.constant 0 : index
    %50 = vector.load %arg13[%c0_55, %c0_56] : memref<72x324xf32, #tpu.memory_space<vmem>>, vector<8x324xf32>
    tpu.vector_store %arg13[%c0_55, %c0_56], %49 {strides = array<i32>} : memref<72x324xf32, #tpu.memory_space<vmem>>, vector<8x324xf32>,
    %c0_57 = arith.constant 0 : index
    %c1_58 = arith.constant 1 : index
    %51 = vector.load %arg12[%c0_57, %c1_58] : memref<8x362xf32, #tpu.memory_space<vmem>>, vector<8x324xf32>
    %c8_59 = arith.constant 8 : index
    %c0_60 = arith.constant 0 : index
    %52 = vector.load %arg13[%c8_59, %c0_60] : memref<72x324xf32, #tpu.memory_space<vmem>>, vector<8x324xf32>
    tpu.vector_store %arg13[%c8_59, %c0_60], %51 {strides = array<i32>} : memref<72x324xf32, #tpu.memory_space<vmem>>, vector<8x324xf32>,
    %c0_61 = arith.constant 0 : index
    %c2_62 = arith.constant 2 : index
    %53 = vector.load %arg12[%c0_61, %c2_62] : memref<8x362xf32, #tpu.memory_space<vmem>>, vector<8x324xf32>
    %c16_63 = arith.constant 16 : index
    %c0_64 = arith.constant 0 : index
    %54 = vector.load %arg13[%c16_63, %c0_64] : memref<72x324xf32, #tpu.memory_space<vmem>>, vector<8x324xf32>
    tpu.vector_store %arg13[%c16_63, %c0_64], %53 {strides = array<i32>} : memref<72x324xf32, #tpu.memory_space<vmem>>, vector<8x324xf32>,
    %c0_65 = arith.constant 0 : index
    %c18_66 = arith.constant 18 : index
    %55 = vector.load %arg12[%c0_65, %c18_66] : memref<8x362xf32, #tpu.memory_space<vmem>>, vector<8x324xf32>
    %c24_67 = arith.constant 24 : index
    %c0_68 = arith.constant 0 : index
    %56 = vector.load %arg13[%c24_67, %c0_68] : memref<72x324xf32, #tpu.memory_space<vmem>>, vector<8x324xf32>
    tpu.vector_store %arg13[%c24_67, %c0_68], %55 {strides = array<i32>} : memref<72x324xf32, #tpu.memory_space<vmem>>, vector<8x324xf32>,
    %c0_69 = arith.constant 0 : index
    %c19_70 = arith.constant 19 : index
    %57 = vector.load %arg12[%c0_69, %c19_70] : memref<8x362xf32, #tpu.memory_space<vmem>>, vector<8x324xf32>
    %c32_71 = arith.constant 32 : index
    %c0_72 = arith.constant 0 : index
    %58 = vector.load %arg13[%c32_71, %c0_72] : memref<72x324xf32, #tpu.memory_space<vmem>>, vector<8x324xf32>
    tpu.vector_store %arg13[%c32_71, %c0_72], %57 {strides = array<i32>} : memref<72x324xf32, #tpu.memory_space<vmem>>, vector<8x324xf32>,
    %c0_73 = arith.constant 0 : index
    %c20_74 = arith.constant 20 : index
    %59 = vector.load %arg12[%c0_73, %c20_74] : memref<8x362xf32, #tpu.memory_space<vmem>>, vector<8x324xf32>
    %c40 = arith.constant 40 : index
    %c0_75 = arith.constant 0 : index
    %60 = vector.load %arg13[%c40, %c0_75] : memref<72x324xf32, #tpu.memory_space<vmem>>, vector<8x324xf32>
    tpu.vector_store %arg13[%c40, %c0_75], %59 {strides = array<i32>} : memref<72x324xf32, #tpu.memory_space<vmem>>, vector<8x324xf32>,
    %c0_76 = arith.constant 0 : index
    %c36_77 = arith.constant 36 : index
    %61 = vector.load %arg12[%c0_76, %c36_77] : memref<8x362xf32, #tpu.memory_space<vmem>>, vector<8x324xf32>
    %c48 = arith.constant 48 : index
    %c0_78 = arith.constant 0 : index
    %62 = vector.load %arg13[%c48, %c0_78] : memref<72x324xf32, #tpu.memory_space<vmem>>, vector<8x324xf32>
    tpu.vector_store %arg13[%c48, %c0_78], %61 {strides = array<i32>} : memref<72x324xf32, #tpu.memory_space<vmem>>, vector<8x324xf32>,
    %c0_79 = arith.constant 0 : index
    %c37_80 = arith.constant 37 : index
    %63 = vector.load %arg12[%c0_79, %c37_80] : memref<8x362xf32, #tpu.memory_space<vmem>>, vector<8x324xf32>
    %c56 = arith.constant 56 : index
    %c0_81 = arith.constant 0 : index
    %64 = vector.load %arg13[%c56, %c0_81] : memref<72x324xf32, #tpu.memory_space<vmem>>, vector<8x324xf32>
    tpu.vector_store %arg13[%c56, %c0_81], %63 {strides = array<i32>} : memref<72x324xf32, #tpu.memory_space<vmem>>, vector<8x324xf32>,
    %c0_82 = arith.constant 0 : index
    %c38_83 = arith.constant 38 : index
    %65 = vector.load %arg12[%c0_82, %c38_83] : memref<8x362xf32, #tpu.memory_space<vmem>>, vector<8x324xf32>
    %c64 = arith.constant 64 : index
    %c0_84 = arith.constant 0 : index
    %66 = vector.load %arg13[%c64, %c0_84] : memref<72x324xf32, #tpu.memory_space<vmem>>, vector<8x324xf32>
    tpu.vector_store %arg13[%c64, %c0_84], %65 {strides = array<i32>} : memref<72x324xf32, #tpu.memory_space<vmem>>, vector<8x324xf32>,
    %c0_85 = arith.constant 0 : index
    %c0_86 = arith.constant 0 : index
    %67 = vector.load %arg13[%c0_85, %c0_86] : memref<72x324xf32, #tpu.memory_space<vmem>>, vector<72x324xf32>
    %cst_87 = arith.constant dense<0.000000e+00> : vector<8x324xf32>
    %68 = tpu.matmul %42, %67, %cst_87 {dimension_numbers = #tpu.dot_dimension_numbers<[1], [0], [0], [1], [0, 0, 1, 1], [], []>} : vector<8x72xf32>, vector<72x324xf32>, vector<8x324xf32> -> vector<8x324xf32>
    %69 = vector.extract_strided_slice %43 {offsets = [0, 0, 0], sizes = [1, 8, 1], strides = [1, 1, 1]} : vector<2x8x1xf32> to vector<1x8x1xf32>
    %70 = vector.shape_cast %69 : vector<1x8x1xf32> to vector<8x1xf32>
    %71 = vector.broadcast %70 : vector<8x1xf32> to vector<8x324xf32>
    %72 = arith.mulf %68, %71 : vector<8x324xf32>
    %73 = vector.extract_strided_slice %43 {offsets = [1, 0, 0], sizes = [1, 8, 1], strides = [1, 1, 1]} : vector<2x8x1xf32> to vector<1x8x1xf32>
    %74 = vector.shape_cast %73 : vector<1x8x1xf32> to vector<8x1xf32>
    %75 = vector.broadcast %74 : vector<8x1xf32> to vector<8x324xf32>
    %76 = arith.addf %72, %75 : vector<8x324xf32>
    %cst_88 = arith.constant 0.000000e+00 : f32
    %77 = vector.broadcast %cst_88 : f32 to vector<8x324xf32>
    %78 = arith.maximumf %76, %77 : vector<8x324xf32>
    %79 = vector.broadcast %0 : vector<1x324xf32> to vector<8x324xf32>
    %80 = arith.mulf %78, %79 : vector<8x324xf32>
    %c0_89 = arith.constant 0 : index
    %c19_90 = arith.constant 19 : index
    %81 = vector.load %arg12[%c0_89, %c19_90] : memref<8x362xf32, #tpu.memory_space<vmem>>, vector<8x324xf32>
    tpu.vector_store %arg12[%c0_89, %c19_90], %80 {strides = array<i32>} : memref<8x362xf32, #tpu.memory_space<vmem>>, vector<8x324xf32>,
    %cst_91 = arith.constant 0.000000e+00 : f32
    %82 = vector.broadcast %cst_91 : f32 to vector<8x19xf32>
    %c0_92 = arith.constant 0 : index
    %c343_93 = arith.constant 343 : index
    %83 = vector.load %arg12[%c0_92, %c343_93] : memref<8x362xf32, #tpu.memory_space<vmem>>, vector<8x19xf32>
    tpu.vector_store %arg12[%c0_92, %c343_93], %82 {strides = array<i32>} : memref<8x362xf32, #tpu.memory_space<vmem>>, vector<8x19xf32>,
    %c0_94 = arith.constant 0 : index
    %c19_95 = arith.constant 19 : index
    %84 = vector.load %arg12[%c0_94, %c19_95] : memref<8x362xf32, #tpu.memory_space<vmem>>, vector<8x324xf32>
    %c0_96 = arith.constant 0 : index
    %c0_97 = arith.constant 0 : index
    %85 = vector.load %arg13[%c0_96, %c0_97] : memref<72x324xf32, #tpu.memory_space<vmem>>, vector<8x324xf32>
    tpu.vector_store %arg13[%c0_96, %c0_97], %84 {strides = array<i32>} : memref<72x324xf32, #tpu.memory_space<vmem>>, vector<8x324xf32>,
    %c0_98 = arith.constant 0 : index
    %c20_99 = arith.constant 20 : index
    %86 = vector.load %arg12[%c0_98, %c20_99] : memref<8x362xf32, #tpu.memory_space<vmem>>, vector<8x324xf32>
    %c8_100 = arith.constant 8 : index
    %c0_101 = arith.constant 0 : index
    %87 = vector.load %arg13[%c8_100, %c0_101] : memref<72x324xf32, #tpu.memory_space<vmem>>, vector<8x324xf32>
    tpu.vector_store %arg13[%c8_100, %c0_101], %86 {strides = array<i32>} : memref<72x324xf32, #tpu.memory_space<vmem>>, vector<8x324xf32>,
    %c0_102 = arith.constant 0 : index
    %c37_103 = arith.constant 37 : index
    %88 = vector.load %arg12[%c0_102, %c37_103] : memref<8x362xf32, #tpu.memory_space<vmem>>, vector<8x324xf32>
    %c16_104 = arith.constant 16 : index
    %c0_105 = arith.constant 0 : index
    %89 = vector.load %arg13[%c16_104, %c0_105] : memref<72x324xf32, #tpu.memory_space<vmem>>, vector<8x324xf32>
    tpu.vector_store %arg13[%c16_104, %c0_105], %88 {strides = array<i32>} : memref<72x324xf32, #tpu.memory_space<vmem>>, vector<8x324xf32>,
    %c0_106 = arith.constant 0 : index
    %c38_107 = arith.constant 38 : index
    %90 = vector.load %arg12[%c0_106, %c38_107] : memref<8x362xf32, #tpu.memory_space<vmem>>, vector<8x324xf32>
    %c24_108 = arith.constant 24 : index
    %c0_109 = arith.constant 0 : index
    %91 = vector.load %arg13[%c24_108, %c0_109] : memref<72x324xf32, #tpu.memory_space<vmem>>, vector<8x324xf32>
    tpu.vector_store %arg13[%c24_108, %c0_109], %90 {strides = array<i32>} : memref<72x324xf32, #tpu.memory_space<vmem>>, vector<8x324xf32>,
    %c0_110 = arith.constant 0 : index
    %c0_111 = arith.constant 0 : index
    %92 = vector.load %arg6[%c0_110, %c0_111] : memref<16x32xf32, #tpu.memory_space<vmem>>, vector<16x32xf32>
    %c0_112 = arith.constant 0 : index
    %c0_113 = arith.constant 0 : index
    %93 = vector.load %arg13[%c0_112, %c0_113] : memref<72x324xf32, #tpu.memory_space<vmem>>, vector<32x324xf32>
    %cst_114 = arith.constant dense<0.000000e+00> : vector<16x324xf32>
    %94 = tpu.matmul %92, %93, %cst_114 {dimension_numbers = #tpu.dot_dimension_numbers<[1], [0], [0], [1], [0, 0, 1, 1], [], []>} : vector<16x32xf32>, vector<32x324xf32>, vector<16x324xf32> -> vector<16x324xf32>
    %c0_115 = arith.constant 0 : index
    %c0_116 = arith.constant 0 : index
    %c0_117 = arith.constant 0 : index
    %95 = vector.load %arg7[%c0_115, %c0_116, %c0_117] : memref<2x16x1xf32, #tpu.memory_space<vmem>>, vector<1x16x1xf32>
    %96 = vector.shape_cast %95 : vector<1x16x1xf32> to vector<16x1xf32>
    %97 = vector.broadcast %96 : vector<16x1xf32> to vector<16x324xf32>
    %98 = arith.mulf %94, %97 : vector<16x324xf32>
    %c1_118 = arith.constant 1 : index
    %c0_119 = arith.constant 0 : index
    %c0_120 = arith.constant 0 : index
    %99 = vector.load %arg7[%c1_118, %c0_119, %c0_120] : memref<2x16x1xf32, #tpu.memory_space<vmem>>, vector<1x16x1xf32>
    %100 = vector.shape_cast %99 : vector<1x16x1xf32> to vector<16x1xf32>
    %101 = vector.broadcast %100 : vector<16x1xf32> to vector<16x324xf32>
    %102 = arith.addf %98, %101 : vector<16x324xf32>
    %cst_121 = arith.constant 0.000000e+00 : f32
    %103 = vector.broadcast %cst_121 : f32 to vector<16x324xf32>
    %104 = arith.maximumf %102, %103 : vector<16x324xf32>
    %c0_122 = arith.constant 0 : index
    %c0_123 = arith.constant 0 : index
    %c0_124 = arith.constant 0 : index
    %105 = vector.load %arg8[%c0_122, %c0_123, %c0_124] : memref<2x18x32xf32, #tpu.memory_space<vmem>>, vector<1x18x32xf32>
    %106 = vector.shape_cast %105 : vector<1x18x32xf32> to vector<18x32xf32>
    %c1_125 = arith.constant 1 : index
    %c0_126 = arith.constant 0 : index
    %c0_127 = arith.constant 0 : index
    %107 = vector.load %arg8[%c1_125, %c0_126, %c0_127] : memref<2x18x32xf32, #tpu.memory_space<vmem>>, vector<1x18x32xf32>
    %108 = vector.shape_cast %107 : vector<1x18x32xf32> to vector<18x32xf32>
    %109 = vector.extract_strided_slice %104 {offsets = [0, 18], sizes = [16, 18], strides = [1, 1]} : vector<16x324xf32> to vector<16x18xf32>
    %110 = vector.extract_strided_slice %109 {offsets = [0, 0], sizes = [8, 18], strides = [1, 1]} : vector<16x18xf32> to vector<8x18xf32>
    %cst_128 = arith.constant dense<0.000000e+00> : vector<8x32xf32>
    %111 = tpu.matmul %110, %106, %cst_128 {dimension_numbers = #tpu.dot_dimension_numbers<[1], [0], [0], [1], [0, 0, 1, 1], [], []>} : vector<8x18xf32>, vector<18x32xf32>, vector<8x32xf32> -> vector<8x32xf32>
    %112 = vector.extract_strided_slice %109 {offsets = [8, 0], sizes = [8, 18], strides = [1, 1]} : vector<16x18xf32> to vector<8x18xf32>
    %cst_129 = arith.constant dense<0.000000e+00> : vector<8x32xf32>
    %113 = tpu.matmul %112, %108, %cst_129 {dimension_numbers = #tpu.dot_dimension_numbers<[1], [0], [0], [1], [0, 0, 1, 1], [], []>} : vector<8x18xf32>, vector<18x32xf32>, vector<8x32xf32> -> vector<8x32xf32>
    %114 = arith.addf %111, %113 : vector<8x32xf32>
    %115 = vector.extract_strided_slice %114 {offsets = [0, 0], sizes = [4, 32], strides = [1, 1]} : vector<8x32xf32> to vector<4x32xf32>
    %c0_130 = arith.constant 0 : index
    %c0_131 = arith.constant 0 : index
    %c0_132 = arith.constant 0 : index
    %116 = vector.load %arg11[%c0_130, %c0_131, %c0_132] : memref<1x8x1024xf32, #tpu.memory_space<vmem>>, vector<1x4x32xf32>
    %117 = vector.shape_cast %116 : vector<1x4x32xf32> to vector<4x32xf32>
    %118 = vector.shape_cast %115 : vector<4x32xf32> to vector<1x4x32xf32>
    tpu.vector_store %arg11[%c0_130, %c0_131, %c0_132], %118 {strides = array<i32>} : memref<1x8x1024xf32, #tpu.memory_space<vmem>>, vector<1x4x32xf32>,
    %119 = vector.extract_strided_slice %114 {offsets = [4, 0], sizes = [4, 32], strides = [1, 1]} : vector<8x32xf32> to vector<4x32xf32>
    %c0_133 = arith.constant 0 : index
    %c0_134 = arith.constant 0 : index
    %c32_135 = arith.constant 32 : index
    %120 = vector.load %arg11[%c0_133, %c0_134, %c32_135] : memref<1x8x1024xf32, #tpu.memory_space<vmem>>, vector<1x4x32xf32>
    %121 = vector.shape_cast %120 : vector<1x4x32xf32> to vector<4x32xf32>
    %122 = vector.shape_cast %119 : vector<4x32xf32> to vector<1x4x32xf32>
    tpu.vector_store %arg11[%c0_133, %c0_134, %c32_135], %122 {strides = array<i32>} : memref<1x8x1024xf32, #tpu.memory_space<vmem>>, vector<1x4x32xf32>,
    %123 = vector.extract_strided_slice %104 {offsets = [0, 36], sizes = [16, 18], strides = [1, 1]} : vector<16x324xf32> to vector<16x18xf32>
    %124 = vector.extract_strided_slice %123 {offsets = [0, 0], sizes = [8, 18], strides = [1, 1]} : vector<16x18xf32> to vector<8x18xf32>
    %cst_136 = arith.constant dense<0.000000e+00> : vector<8x32xf32>
    %125 = tpu.matmul %124, %106, %cst_136 {dimension_numbers = #tpu.dot_dimension_numbers<[1], [0], [0], [1], [0, 0, 1, 1], [], []>} : vector<8x18xf32>, vector<18x32xf32>, vector<8x32xf32> -> vector<8x32xf32>
    %126 = vector.extract_strided_slice %123 {offsets = [8, 0], sizes = [8, 18], strides = [1, 1]} : vector<16x18xf32> to vector<8x18xf32>
    %cst_137 = arith.constant dense<0.000000e+00> : vector<8x32xf32>
    %127 = tpu.matmul %126, %108, %cst_137 {dimension_numbers = #tpu.dot_dimension_numbers<[1], [0], [0], [1], [0, 0, 1, 1], [], []>} : vector<8x18xf32>, vector<18x32xf32>, vector<8x32xf32> -> vector<8x32xf32>
    %128 = arith.addf %125, %127 : vector<8x32xf32>
    %129 = vector.extract_strided_slice %128 {offsets = [0, 0], sizes = [4, 32], strides = [1, 1]} : vector<8x32xf32> to vector<4x32xf32>
    %c0_138 = arith.constant 0 : index
    %c0_139 = arith.constant 0 : index
    %c64_140 = arith.constant 64 : index
    %130 = vector.load %arg11[%c0_138, %c0_139, %c64_140] : memref<1x8x1024xf32, #tpu.memory_space<vmem>>, vector<1x4x32xf32>
    %131 = vector.shape_cast %130 : vector<1x4x32xf32> to vector<4x32xf32>
    %132 = vector.shape_cast %129 : vector<4x32xf32> to vector<1x4x32xf32>
    tpu.vector_store %arg11[%c0_138, %c0_139, %c64_140], %132 {strides = array<i32>} : memref<1x8x1024xf32, #tpu.memory_space<vmem>>, vector<1x4x32xf32>,
    %133 = vector.extract_strided_slice %128 {offsets = [4, 0], sizes = [4, 32], strides = [1, 1]} : vector<8x32xf32> to vector<4x32xf32>
    %c0_141 = arith.constant 0 : index
    %c0_142 = arith.constant 0 : index
    %c96 = arith.constant 96 : index
    %134 = vector.load %arg11[%c0_141, %c0_142, %c96] : memref<1x8x1024xf32, #tpu.memory_space<vmem>>, vector<1x4x32xf32>
    %135 = vector.shape_cast %134 : vector<1x4x32xf32> to vector<4x32xf32>
    %136 = vector.shape_cast %133 : vector<4x32xf32> to vector<1x4x32xf32>
    tpu.vector_store %arg11[%c0_141, %c0_142, %c96], %136 {strides = array<i32>} : memref<1x8x1024xf32, #tpu.memory_space<vmem>>, vector<1x4x32xf32>,
    %137 = vector.extract_strided_slice %104 {offsets = [0, 54], sizes = [16, 18], strides = [1, 1]} : vector<16x324xf32> to vector<16x18xf32>
    %138 = vector.extract_strided_slice %137 {offsets = [0, 0], sizes = [8, 18], strides = [1, 1]} : vector<16x18xf32> to vector<8x18xf32>
    %cst_143 = arith.constant dense<0.000000e+00> : vector<8x32xf32>
    %139 = tpu.matmul %138, %106, %cst_143 {dimension_numbers = #tpu.dot_dimension_numbers<[1], [0], [0], [1], [0, 0, 1, 1], [], []>} : vector<8x18xf32>, vector<18x32xf32>, vector<8x32xf32> -> vector<8x32xf32>
    %140 = vector.extract_strided_slice %137 {offsets = [8, 0], sizes = [8, 18], strides = [1, 1]} : vector<16x18xf32> to vector<8x18xf32>
    %cst_144 = arith.constant dense<0.000000e+00> : vector<8x32xf32>
    %141 = tpu.matmul %140, %108, %cst_144 {dimension_numbers = #tpu.dot_dimension_numbers<[1], [0], [0], [1], [0, 0, 1, 1], [], []>} : vector<8x18xf32>, vector<18x32xf32>, vector<8x32xf32> -> vector<8x32xf32>
    %142 = arith.addf %139, %141 : vector<8x32xf32>
    %143 = vector.extract_strided_slice %142 {offsets = [0, 0], sizes = [4, 32], strides = [1, 1]} : vector<8x32xf32> to vector<4x32xf32>
    %c0_145 = arith.constant 0 : index
    %c0_146 = arith.constant 0 : index
    %c128 = arith.constant 128 : index
    %144 = vector.load %arg11[%c0_145, %c0_146, %c128] : memref<1x8x1024xf32, #tpu.memory_space<vmem>>, vector<1x4x32xf32>
    %145 = vector.shape_cast %144 : vector<1x4x32xf32> to vector<4x32xf32>
    %146 = vector.shape_cast %143 : vector<4x32xf32> to vector<1x4x32xf32>
    tpu.vector_store %arg11[%c0_145, %c0_146, %c128], %146 {strides = array<i32>} : memref<1x8x1024xf32, #tpu.memory_space<vmem>>, vector<1x4x32xf32>,
    %147 = vector.extract_strided_slice %142 {offsets = [4, 0], sizes = [4, 32], strides = [1, 1]} : vector<8x32xf32> to vector<4x32xf32>
    %c0_147 = arith.constant 0 : index
    %c0_148 = arith.constant 0 : index
    %c160 = arith.constant 160 : index
    %148 = vector.load %arg11[%c0_147, %c0_148, %c160] : memref<1x8x1024xf32, #tpu.memory_space<vmem>>, vector<1x4x32xf32>
    %149 = vector.shape_cast %148 : vector<1x4x32xf32> to vector<4x32xf32>
    %150 = vector.shape_cast %147 : vector<4x32xf32> to vector<1x4x32xf32>
    tpu.vector_store %arg11[%c0_147, %c0_148, %c160], %150 {strides = array<i32>} : memref<1x8x1024xf32, #tpu.memory_space<vmem>>, vector<1x4x32xf32>,
    %151 = vector.extract_strided_slice %104 {offsets = [0, 72], sizes = [16, 18], strides = [1, 1]} : vector<16x324xf32> to vector<16x18xf32>
    %152 = vector.extract_strided_slice %151 {offsets = [0, 0], sizes = [8, 18], strides = [1, 1]} : vector<16x18xf32> to vector<8x18xf32>
    %cst_149 = arith.constant dense<0.000000e+00> : vector<8x32xf32>
    %153 = tpu.matmul %152, %106, %cst_149 {dimension_numbers = #tpu.dot_dimension_numbers<[1], [0], [0], [1], [0, 0, 1, 1], [], []>} : vector<8x18xf32>, vector<18x32xf32>, vector<8x32xf32> -> vector<8x32xf32>
    %154 = vector.extract_strided_slice %151 {offsets = [8, 0], sizes = [8, 18], strides = [1, 1]} : vector<16x18xf32> to vector<8x18xf32>
    %cst_150 = arith.constant dense<0.000000e+00> : vector<8x32xf32>
    %155 = tpu.matmul %154, %108, %cst_150 {dimension_numbers = #tpu.dot_dimension_numbers<[1], [0], [0], [1], [0, 0, 1, 1], [], []>} : vector<8x18xf32>, vector<18x32xf32>, vector<8x32xf32> -> vector<8x32xf32>
    %156 = arith.addf %153, %155 : vector<8x32xf32>
    %157 = vector.extract_strided_slice %156 {offsets = [0, 0], sizes = [4, 32], strides = [1, 1]} : vector<8x32xf32> to vector<4x32xf32>
    %c0_151 = arith.constant 0 : index
    %c0_152 = arith.constant 0 : index
    %c192 = arith.constant 192 : index
    %158 = vector.load %arg11[%c0_151, %c0_152, %c192] : memref<1x8x1024xf32, #tpu.memory_space<vmem>>, vector<1x4x32xf32>
    %159 = vector.shape_cast %158 : vector<1x4x32xf32> to vector<4x32xf32>
    %160 = vector.shape_cast %157 : vector<4x32xf32> to vector<1x4x32xf32>
    tpu.vector_store %arg11[%c0_151, %c0_152, %c192], %160 {strides = array<i32>} : memref<1x8x1024xf32, #tpu.memory_space<vmem>>, vector<1x4x32xf32>,
    %161 = vector.extract_strided_slice %156 {offsets = [4, 0], sizes = [4, 32], strides = [1, 1]} : vector<8x32xf32> to vector<4x32xf32>
    %c0_153 = arith.constant 0 : index
    %c0_154 = arith.constant 0 : index
    %c224 = arith.constant 224 : index
    %162 = vector.load %arg11[%c0_153, %c0_154, %c224] : memref<1x8x1024xf32, #tpu.memory_space<vmem>>, vector<1x4x32xf32>
    %163 = vector.shape_cast %162 : vector<1x4x32xf32> to vector<4x32xf32>
    %164 = vector.shape_cast %161 : vector<4x32xf32> to vector<1x4x32xf32>
    tpu.vector_store %arg11[%c0_153, %c0_154, %c224], %164 {strides = array<i32>} : memref<1x8x1024xf32, #tpu.memory_space<vmem>>, vector<1x4x32xf32>,
    %165 = vector.extract_strided_slice %104 {offsets = [0, 90], sizes = [16, 18], strides = [1, 1]} : vector<16x324xf32> to vector<16x18xf32>
    %166 = vector.extract_strided_slice %165 {offsets = [0, 0], sizes = [8, 18], strides = [1, 1]} : vector<16x18xf32> to vector<8x18xf32>
    %cst_155 = arith.constant dense<0.000000e+00> : vector<8x32xf32>
    %167 = tpu.matmul %166, %106, %cst_155 {dimension_numbers = #tpu.dot_dimension_numbers<[1], [0], [0], [1], [0, 0, 1, 1], [], []>} : vector<8x18xf32>, vector<18x32xf32>, vector<8x32xf32> -> vector<8x32xf32>
    %168 = vector.extract_strided_slice %165 {offsets = [8, 0], sizes = [8, 18], strides = [1, 1]} : vector<16x18xf32> to vector<8x18xf32>
    %cst_156 = arith.constant dense<0.000000e+00> : vector<8x32xf32>
    %169 = tpu.matmul %168, %108, %cst_156 {dimension_numbers = #tpu.dot_dimension_numbers<[1], [0], [0], [1], [0, 0, 1, 1], [], []>} : vector<8x18xf32>, vector<18x32xf32>, vector<8x32xf32> -> vector<8x32xf32>
    %170 = arith.addf %167, %169 : vector<8x32xf32>
    %171 = vector.extract_strided_slice %170 {offsets = [0, 0], sizes = [4, 32], strides = [1, 1]} : vector<8x32xf32> to vector<4x32xf32>
    %c0_157 = arith.constant 0 : index
    %c0_158 = arith.constant 0 : index
    %c256 = arith.constant 256 : index
    %172 = vector.load %arg11[%c0_157, %c0_158, %c256] : memref<1x8x1024xf32, #tpu.memory_space<vmem>>, vector<1x4x32xf32>
    %173 = vector.shape_cast %172 : vector<1x4x32xf32> to vector<4x32xf32>
    %174 = vector.shape_cast %171 : vector<4x32xf32> to vector<1x4x32xf32>
    tpu.vector_store %arg11[%c0_157, %c0_158, %c256], %174 {strides = array<i32>} : memref<1x8x1024xf32, #tpu.memory_space<vmem>>, vector<1x4x32xf32>,
    %175 = vector.extract_strided_slice %170 {offsets = [4, 0], sizes = [4, 32], strides = [1, 1]} : vector<8x32xf32> to vector<4x32xf32>
    %c0_159 = arith.constant 0 : index
    %c0_160 = arith.constant 0 : index
    %c288 = arith.constant 288 : index
    %176 = vector.load %arg11[%c0_159, %c0_160, %c288] : memref<1x8x1024xf32, #tpu.memory_space<vmem>>, vector<1x4x32xf32>
    %177 = vector.shape_cast %176 : vector<1x4x32xf32> to vector<4x32xf32>
    %178 = vector.shape_cast %175 : vector<4x32xf32> to vector<1x4x32xf32>
    tpu.vector_store %arg11[%c0_159, %c0_160, %c288], %178 {strides = array<i32>} : memref<1x8x1024xf32, #tpu.memory_space<vmem>>, vector<1x4x32xf32>,
    %179 = vector.extract_strided_slice %104 {offsets = [0, 108], sizes = [16, 18], strides = [1, 1]} : vector<16x324xf32> to vector<16x18xf32>
    %180 = vector.extract_strided_slice %179 {offsets = [0, 0], sizes = [8, 18], strides = [1, 1]} : vector<16x18xf32> to vector<8x18xf32>
    %cst_161 = arith.constant dense<0.000000e+00> : vector<8x32xf32>
    %181 = tpu.matmul %180, %106, %cst_161 {dimension_numbers = #tpu.dot_dimension_numbers<[1], [0], [0], [1], [0, 0, 1, 1], [], []>} : vector<8x18xf32>, vector<18x32xf32>, vector<8x32xf32> -> vector<8x32xf32>
    %182 = vector.extract_strided_slice %179 {offsets = [8, 0], sizes = [8, 18], strides = [1, 1]} : vector<16x18xf32> to vector<8x18xf32>
    %cst_162 = arith.constant dense<0.000000e+00> : vector<8x32xf32>
    %183 = tpu.matmul %182, %108, %cst_162 {dimension_numbers = #tpu.dot_dimension_numbers<[1], [0], [0], [1], [0, 0, 1, 1], [], []>} : vector<8x18xf32>, vector<18x32xf32>, vector<8x32xf32> -> vector<8x32xf32>
    %184 = arith.addf %181, %183 : vector<8x32xf32>
    %185 = vector.extract_strided_slice %184 {offsets = [0, 0], sizes = [4, 32], strides = [1, 1]} : vector<8x32xf32> to vector<4x32xf32>
    %c0_163 = arith.constant 0 : index
    %c0_164 = arith.constant 0 : index
    %c320 = arith.constant 320 : index
    %186 = vector.load %arg11[%c0_163, %c0_164, %c320] : memref<1x8x1024xf32, #tpu.memory_space<vmem>>, vector<1x4x32xf32>
    %187 = vector.shape_cast %186 : vector<1x4x32xf32> to vector<4x32xf32>
    %188 = vector.shape_cast %185 : vector<4x32xf32> to vector<1x4x32xf32>
    tpu.vector_store %arg11[%c0_163, %c0_164, %c320], %188 {strides = array<i32>} : memref<1x8x1024xf32, #tpu.memory_space<vmem>>, vector<1x4x32xf32>,
    %189 = vector.extract_strided_slice %184 {offsets = [4, 0], sizes = [4, 32], strides = [1, 1]} : vector<8x32xf32> to vector<4x32xf32>
    %c0_165 = arith.constant 0 : index
    %c0_166 = arith.constant 0 : index
    %c352 = arith.constant 352 : index
    %190 = vector.load %arg11[%c0_165, %c0_166, %c352] : memref<1x8x1024xf32, #tpu.memory_space<vmem>>, vector<1x4x32xf32>
    %191 = vector.shape_cast %190 : vector<1x4x32xf32> to vector<4x32xf32>
    %192 = vector.shape_cast %189 : vector<4x32xf32> to vector<1x4x32xf32>
    tpu.vector_store %arg11[%c0_165, %c0_166, %c352], %192 {strides = array<i32>} : memref<1x8x1024xf32, #tpu.memory_space<vmem>>, vector<1x4x32xf32>,
    %193 = vector.extract_strided_slice %104 {offsets = [0, 126], sizes = [16, 18], strides = [1, 1]} : vector<16x324xf32> to vector<16x18xf32>
    %194 = vector.extract_strided_slice %193 {offsets = [0, 0], sizes = [8, 18], strides = [1, 1]} : vector<16x18xf32> to vector<8x18xf32>
    %cst_167 = arith.constant dense<0.000000e+00> : vector<8x32xf32>
    %195 = tpu.matmul %194, %106, %cst_167 {dimension_numbers = #tpu.dot_dimension_numbers<[1], [0], [0], [1], [0, 0, 1, 1], [], []>} : vector<8x18xf32>, vector<18x32xf32>, vector<8x32xf32> -> vector<8x32xf32>
    %196 = vector.extract_strided_slice %193 {offsets = [8, 0], sizes = [8, 18], strides = [1, 1]} : vector<16x18xf32> to vector<8x18xf32>
    %cst_168 = arith.constant dense<0.000000e+00> : vector<8x32xf32>
    %197 = tpu.matmul %196, %108, %cst_168 {dimension_numbers = #tpu.dot_dimension_numbers<[1], [0], [0], [1], [0, 0, 1, 1], [], []>} : vector<8x18xf32>, vector<18x32xf32>, vector<8x32xf32> -> vector<8x32xf32>
    %198 = arith.addf %195, %197 : vector<8x32xf32>
    %199 = vector.extract_strided_slice %198 {offsets = [0, 0], sizes = [4, 32], strides = [1, 1]} : vector<8x32xf32> to vector<4x32xf32>
    %c0_169 = arith.constant 0 : index
    %c0_170 = arith.constant 0 : index
    %c384 = arith.constant 384 : index
    %200 = vector.load %arg11[%c0_169, %c0_170, %c384] : memref<1x8x1024xf32, #tpu.memory_space<vmem>>, vector<1x4x32xf32>
    %201 = vector.shape_cast %200 : vector<1x4x32xf32> to vector<4x32xf32>
    %202 = vector.shape_cast %199 : vector<4x32xf32> to vector<1x4x32xf32>
    tpu.vector_store %arg11[%c0_169, %c0_170, %c384], %202 {strides = array<i32>} : memref<1x8x1024xf32, #tpu.memory_space<vmem>>, vector<1x4x32xf32>,
    %203 = vector.extract_strided_slice %198 {offsets = [4, 0], sizes = [4, 32], strides = [1, 1]} : vector<8x32xf32> to vector<4x32xf32>
    %c0_171 = arith.constant 0 : index
    %c0_172 = arith.constant 0 : index
    %c416 = arith.constant 416 : index
    %204 = vector.load %arg11[%c0_171, %c0_172, %c416] : memref<1x8x1024xf32, #tpu.memory_space<vmem>>, vector<1x4x32xf32>
    %205 = vector.shape_cast %204 : vector<1x4x32xf32> to vector<4x32xf32>
    %206 = vector.shape_cast %203 : vector<4x32xf32> to vector<1x4x32xf32>
    tpu.vector_store %arg11[%c0_171, %c0_172, %c416], %206 {strides = array<i32>} : memref<1x8x1024xf32, #tpu.memory_space<vmem>>, vector<1x4x32xf32>,
    %207 = vector.extract_strided_slice %104 {offsets = [0, 144], sizes = [16, 18], strides = [1, 1]} : vector<16x324xf32> to vector<16x18xf32>
    %208 = vector.extract_strided_slice %207 {offsets = [0, 0], sizes = [8, 18], strides = [1, 1]} : vector<16x18xf32> to vector<8x18xf32>
    %cst_173 = arith.constant dense<0.000000e+00> : vector<8x32xf32>
    %209 = tpu.matmul %208, %106, %cst_173 {dimension_numbers = #tpu.dot_dimension_numbers<[1], [0], [0], [1], [0, 0, 1, 1], [], []>} : vector<8x18xf32>, vector<18x32xf32>, vector<8x32xf32> -> vector<8x32xf32>
    %210 = vector.extract_strided_slice %207 {offsets = [8, 0], sizes = [8, 18], strides = [1, 1]} : vector<16x18xf32> to vector<8x18xf32>
    %cst_174 = arith.constant dense<0.000000e+00> : vector<8x32xf32>
    %211 = tpu.matmul %210, %108, %cst_174 {dimension_numbers = #tpu.dot_dimension_numbers<[1], [0], [0], [1], [0, 0, 1, 1], [], []>} : vector<8x18xf32>, vector<18x32xf32>, vector<8x32xf32> -> vector<8x32xf32>
    %212 = arith.addf %209, %211 : vector<8x32xf32>
    %213 = vector.extract_strided_slice %212 {offsets = [0, 0], sizes = [4, 32], strides = [1, 1]} : vector<8x32xf32> to vector<4x32xf32>
    %c0_175 = arith.constant 0 : index
    %c0_176 = arith.constant 0 : index
    %c448 = arith.constant 448 : index
    %214 = vector.load %arg11[%c0_175, %c0_176, %c448] : memref<1x8x1024xf32, #tpu.memory_space<vmem>>, vector<1x4x32xf32>
    %215 = vector.shape_cast %214 : vector<1x4x32xf32> to vector<4x32xf32>
    %216 = vector.shape_cast %213 : vector<4x32xf32> to vector<1x4x32xf32>
    tpu.vector_store %arg11[%c0_175, %c0_176, %c448], %216 {strides = array<i32>} : memref<1x8x1024xf32, #tpu.memory_space<vmem>>, vector<1x4x32xf32>,
    %217 = vector.extract_strided_slice %212 {offsets = [4, 0], sizes = [4, 32], strides = [1, 1]} : vector<8x32xf32> to vector<4x32xf32>
    %c0_177 = arith.constant 0 : index
    %c0_178 = arith.constant 0 : index
    %c480 = arith.constant 480 : index
    %218 = vector.load %arg11[%c0_177, %c0_178, %c480] : memref<1x8x1024xf32, #tpu.memory_space<vmem>>, vector<1x4x32xf32>
    %219 = vector.shape_cast %218 : vector<1x4x32xf32> to vector<4x32xf32>
    %220 = vector.shape_cast %217 : vector<4x32xf32> to vector<1x4x32xf32>
    tpu.vector_store %arg11[%c0_177, %c0_178, %c480], %220 {strides = array<i32>} : memref<1x8x1024xf32, #tpu.memory_space<vmem>>, vector<1x4x32xf32>,
    %221 = vector.extract_strided_slice %104 {offsets = [0, 162], sizes = [16, 18], strides = [1, 1]} : vector<16x324xf32> to vector<16x18xf32>
    %222 = vector.extract_strided_slice %221 {offsets = [0, 0], sizes = [8, 18], strides = [1, 1]} : vector<16x18xf32> to vector<8x18xf32>
    %cst_179 = arith.constant dense<0.000000e+00> : vector<8x32xf32>
    %223 = tpu.matmul %222, %106, %cst_179 {dimension_numbers = #tpu.dot_dimension_numbers<[1], [0], [0], [1], [0, 0, 1, 1], [], []>} : vector<8x18xf32>, vector<18x32xf32>, vector<8x32xf32> -> vector<8x32xf32>
    %224 = vector.extract_strided_slice %221 {offsets = [8, 0], sizes = [8, 18], strides = [1, 1]} : vector<16x18xf32> to vector<8x18xf32>
    %cst_180 = arith.constant dense<0.000000e+00> : vector<8x32xf32>
    %225 = tpu.matmul %224, %108, %cst_180 {dimension_numbers = #tpu.dot_dimension_numbers<[1], [0], [0], [1], [0, 0, 1, 1], [], []>} : vector<8x18xf32>, vector<18x32xf32>, vector<8x32xf32> -> vector<8x32xf32>
    %226 = arith.addf %223, %225 : vector<8x32xf32>
    %227 = vector.extract_strided_slice %226 {offsets = [0, 0], sizes = [4, 32], strides = [1, 1]} : vector<8x32xf32> to vector<4x32xf32>
    %c0_181 = arith.constant 0 : index
    %c0_182 = arith.constant 0 : index
    %c512 = arith.constant 512 : index
    %228 = vector.load %arg11[%c0_181, %c0_182, %c512] : memref<1x8x1024xf32, #tpu.memory_space<vmem>>, vector<1x4x32xf32>
    %229 = vector.shape_cast %228 : vector<1x4x32xf32> to vector<4x32xf32>
    %230 = vector.shape_cast %227 : vector<4x32xf32> to vector<1x4x32xf32>
    tpu.vector_store %arg11[%c0_181, %c0_182, %c512], %230 {strides = array<i32>} : memref<1x8x1024xf32, #tpu.memory_space<vmem>>, vector<1x4x32xf32>,
    %231 = vector.extract_strided_slice %226 {offsets = [4, 0], sizes = [4, 32], strides = [1, 1]} : vector<8x32xf32> to vector<4x32xf32>
    %c0_183 = arith.constant 0 : index
    %c0_184 = arith.constant 0 : index
    %c544 = arith.constant 544 : index
    %232 = vector.load %arg11[%c0_183, %c0_184, %c544] : memref<1x8x1024xf32, #tpu.memory_space<vmem>>, vector<1x4x32xf32>
    %233 = vector.shape_cast %232 : vector<1x4x32xf32> to vector<4x32xf32>
    %234 = vector.shape_cast %231 : vector<4x32xf32> to vector<1x4x32xf32>
    tpu.vector_store %arg11[%c0_183, %c0_184, %c544], %234 {strides = array<i32>} : memref<1x8x1024xf32, #tpu.memory_space<vmem>>, vector<1x4x32xf32>,
    %235 = vector.extract_strided_slice %104 {offsets = [0, 180], sizes = [16, 18], strides = [1, 1]} : vector<16x324xf32> to vector<16x18xf32>
    %236 = vector.extract_strided_slice %235 {offsets = [0, 0], sizes = [8, 18], strides = [1, 1]} : vector<16x18xf32> to vector<8x18xf32>
    %cst_185 = arith.constant dense<0.000000e+00> : vector<8x32xf32>
    %237 = tpu.matmul %236, %106, %cst_185 {dimension_numbers = #tpu.dot_dimension_numbers<[1], [0], [0], [1], [0, 0, 1, 1], [], []>} : vector<8x18xf32>, vector<18x32xf32>, vector<8x32xf32> -> vector<8x32xf32>
    %238 = vector.extract_strided_slice %235 {offsets = [8, 0], sizes = [8, 18], strides = [1, 1]} : vector<16x18xf32> to vector<8x18xf32>
    %cst_186 = arith.constant dense<0.000000e+00> : vector<8x32xf32>
    %239 = tpu.matmul %238, %108, %cst_186 {dimension_numbers = #tpu.dot_dimension_numbers<[1], [0], [0], [1], [0, 0, 1, 1], [], []>} : vector<8x18xf32>, vector<18x32xf32>, vector<8x32xf32> -> vector<8x32xf32>
    %240 = arith.addf %237, %239 : vector<8x32xf32>
    %241 = vector.extract_strided_slice %240 {offsets = [0, 0], sizes = [4, 32], strides = [1, 1]} : vector<8x32xf32> to vector<4x32xf32>
    %c0_187 = arith.constant 0 : index
    %c0_188 = arith.constant 0 : index
    %c576 = arith.constant 576 : index
    %242 = vector.load %arg11[%c0_187, %c0_188, %c576] : memref<1x8x1024xf32, #tpu.memory_space<vmem>>, vector<1x4x32xf32>
    %243 = vector.shape_cast %242 : vector<1x4x32xf32> to vector<4x32xf32>
    %244 = vector.shape_cast %241 : vector<4x32xf32> to vector<1x4x32xf32>
    tpu.vector_store %arg11[%c0_187, %c0_188, %c576], %244 {strides = array<i32>} : memref<1x8x1024xf32, #tpu.memory_space<vmem>>, vector<1x4x32xf32>,
    %245 = vector.extract_strided_slice %240 {offsets = [4, 0], sizes = [4, 32], strides = [1, 1]} : vector<8x32xf32> to vector<4x32xf32>
    %c0_189 = arith.constant 0 : index
    %c0_190 = arith.constant 0 : index
    %c608 = arith.constant 608 : index
    %246 = vector.load %arg11[%c0_189, %c0_190, %c608] : memref<1x8x1024xf32, #tpu.memory_space<vmem>>, vector<1x4x32xf32>
    %247 = vector.shape_cast %246 : vector<1x4x32xf32> to vector<4x32xf32>
    %248 = vector.shape_cast %245 : vector<4x32xf32> to vector<1x4x32xf32>
    tpu.vector_store %arg11[%c0_189, %c0_190, %c608], %248 {strides = array<i32>} : memref<1x8x1024xf32, #tpu.memory_space<vmem>>, vector<1x4x32xf32>,
    %249 = vector.extract_strided_slice %104 {offsets = [0, 198], sizes = [16, 18], strides = [1, 1]} : vector<16x324xf32> to vector<16x18xf32>
    %250 = vector.extract_strided_slice %249 {offsets = [0, 0], sizes = [8, 18], strides = [1, 1]} : vector<16x18xf32> to vector<8x18xf32>
    %cst_191 = arith.constant dense<0.000000e+00> : vector<8x32xf32>
    %251 = tpu.matmul %250, %106, %cst_191 {dimension_numbers = #tpu.dot_dimension_numbers<[1], [0], [0], [1], [0, 0, 1, 1], [], []>} : vector<8x18xf32>, vector<18x32xf32>, vector<8x32xf32> -> vector<8x32xf32>
    %252 = vector.extract_strided_slice %249 {offsets = [8, 0], sizes = [8, 18], strides = [1, 1]} : vector<16x18xf32> to vector<8x18xf32>
    %cst_192 = arith.constant dense<0.000000e+00> : vector<8x32xf32>
    %253 = tpu.matmul %252, %108, %cst_192 {dimension_numbers = #tpu.dot_dimension_numbers<[1], [0], [0], [1], [0, 0, 1, 1], [], []>} : vector<8x18xf32>, vector<18x32xf32>, vector<8x32xf32> -> vector<8x32xf32>
    %254 = arith.addf %251, %253 : vector<8x32xf32>
    %255 = vector.extract_strided_slice %254 {offsets = [0, 0], sizes = [4, 32], strides = [1, 1]} : vector<8x32xf32> to vector<4x32xf32>
    %c0_193 = arith.constant 0 : index
    %c0_194 = arith.constant 0 : index
    %c640 = arith.constant 640 : index
    %256 = vector.load %arg11[%c0_193, %c0_194, %c640] : memref<1x8x1024xf32, #tpu.memory_space<vmem>>, vector<1x4x32xf32>
    %257 = vector.shape_cast %256 : vector<1x4x32xf32> to vector<4x32xf32>
    %258 = vector.shape_cast %255 : vector<4x32xf32> to vector<1x4x32xf32>
    tpu.vector_store %arg11[%c0_193, %c0_194, %c640], %258 {strides = array<i32>} : memref<1x8x1024xf32, #tpu.memory_space<vmem>>, vector<1x4x32xf32>,
    %259 = vector.extract_strided_slice %254 {offsets = [4, 0], sizes = [4, 32], strides = [1, 1]} : vector<8x32xf32> to vector<4x32xf32>
    %c0_195 = arith.constant 0 : index
    %c0_196 = arith.constant 0 : index
    %c672 = arith.constant 672 : index
    %260 = vector.load %arg11[%c0_195, %c0_196, %c672] : memref<1x8x1024xf32, #tpu.memory_space<vmem>>, vector<1x4x32xf32>
    %261 = vector.shape_cast %260 : vector<1x4x32xf32> to vector<4x32xf32>
    %262 = vector.shape_cast %259 : vector<4x32xf32> to vector<1x4x32xf32>
    tpu.vector_store %arg11[%c0_195, %c0_196, %c672], %262 {strides = array<i32>} : memref<1x8x1024xf32, #tpu.memory_space<vmem>>, vector<1x4x32xf32>,
    %263 = vector.extract_strided_slice %104 {offsets = [0, 216], sizes = [16, 18], strides = [1, 1]} : vector<16x324xf32> to vector<16x18xf32>
    %264 = vector.extract_strided_slice %263 {offsets = [0, 0], sizes = [8, 18], strides = [1, 1]} : vector<16x18xf32> to vector<8x18xf32>
    %cst_197 = arith.constant dense<0.000000e+00> : vector<8x32xf32>
    %265 = tpu.matmul %264, %106, %cst_197 {dimension_numbers = #tpu.dot_dimension_numbers<[1], [0], [0], [1], [0, 0, 1, 1], [], []>} : vector<8x18xf32>, vector<18x32xf32>, vector<8x32xf32> -> vector<8x32xf32>
    %266 = vector.extract_strided_slice %263 {offsets = [8, 0], sizes = [8, 18], strides = [1, 1]} : vector<16x18xf32> to vector<8x18xf32>
    %cst_198 = arith.constant dense<0.000000e+00> : vector<8x32xf32>
    %267 = tpu.matmul %266, %108, %cst_198 {dimension_numbers = #tpu.dot_dimension_numbers<[1], [0], [0], [1], [0, 0, 1, 1], [], []>} : vector<8x18xf32>, vector<18x32xf32>, vector<8x32xf32> -> vector<8x32xf32>
    %268 = arith.addf %265, %267 : vector<8x32xf32>
    %269 = vector.extract_strided_slice %268 {offsets = [0, 0], sizes = [4, 32], strides = [1, 1]} : vector<8x32xf32> to vector<4x32xf32>
    %c0_199 = arith.constant 0 : index
    %c0_200 = arith.constant 0 : index
    %c704 = arith.constant 704 : index
    %270 = vector.load %arg11[%c0_199, %c0_200, %c704] : memref<1x8x1024xf32, #tpu.memory_space<vmem>>, vector<1x4x32xf32>
    %271 = vector.shape_cast %270 : vector<1x4x32xf32> to vector<4x32xf32>
    %272 = vector.shape_cast %269 : vector<4x32xf32> to vector<1x4x32xf32>
    tpu.vector_store %arg11[%c0_199, %c0_200, %c704], %272 {strides = array<i32>} : memref<1x8x1024xf32, #tpu.memory_space<vmem>>, vector<1x4x32xf32>,
    %273 = vector.extract_strided_slice %268 {offsets = [4, 0], sizes = [4, 32], strides = [1, 1]} : vector<8x32xf32> to vector<4x32xf32>
    %c0_201 = arith.constant 0 : index
    %c0_202 = arith.constant 0 : index
    %c736 = arith.constant 736 : index
    %274 = vector.load %arg11[%c0_201, %c0_202, %c736] : memref<1x8x1024xf32, #tpu.memory_space<vmem>>, vector<1x4x32xf32>
    %275 = vector.shape_cast %274 : vector<1x4x32xf32> to vector<4x32xf32>
    %276 = vector.shape_cast %273 : vector<4x32xf32> to vector<1x4x32xf32>
    tpu.vector_store %arg11[%c0_201, %c0_202, %c736], %276 {strides = array<i32>} : memref<1x8x1024xf32, #tpu.memory_space<vmem>>, vector<1x4x32xf32>,
    %277 = vector.extract_strided_slice %104 {offsets = [0, 234], sizes = [16, 18], strides = [1, 1]} : vector<16x324xf32> to vector<16x18xf32>
    %278 = vector.extract_strided_slice %277 {offsets = [0, 0], sizes = [8, 18], strides = [1, 1]} : vector<16x18xf32> to vector<8x18xf32>
    %cst_203 = arith.constant dense<0.000000e+00> : vector<8x32xf32>
    %279 = tpu.matmul %278, %106, %cst_203 {dimension_numbers = #tpu.dot_dimension_numbers<[1], [0], [0], [1], [0, 0, 1, 1], [], []>} : vector<8x18xf32>, vector<18x32xf32>, vector<8x32xf32> -> vector<8x32xf32>
    %280 = vector.extract_strided_slice %277 {offsets = [8, 0], sizes = [8, 18], strides = [1, 1]} : vector<16x18xf32> to vector<8x18xf32>
    %cst_204 = arith.constant dense<0.000000e+00> : vector<8x32xf32>
    %281 = tpu.matmul %280, %108, %cst_204 {dimension_numbers = #tpu.dot_dimension_numbers<[1], [0], [0], [1], [0, 0, 1, 1], [], []>} : vector<8x18xf32>, vector<18x32xf32>, vector<8x32xf32> -> vector<8x32xf32>
    %282 = arith.addf %279, %281 : vector<8x32xf32>
    %283 = vector.extract_strided_slice %282 {offsets = [0, 0], sizes = [4, 32], strides = [1, 1]} : vector<8x32xf32> to vector<4x32xf32>
    %c0_205 = arith.constant 0 : index
    %c0_206 = arith.constant 0 : index
    %c768 = arith.constant 768 : index
    %284 = vector.load %arg11[%c0_205, %c0_206, %c768] : memref<1x8x1024xf32, #tpu.memory_space<vmem>>, vector<1x4x32xf32>
    %285 = vector.shape_cast %284 : vector<1x4x32xf32> to vector<4x32xf32>
    %286 = vector.shape_cast %283 : vector<4x32xf32> to vector<1x4x32xf32>
    tpu.vector_store %arg11[%c0_205, %c0_206, %c768], %286 {strides = array<i32>} : memref<1x8x1024xf32, #tpu.memory_space<vmem>>, vector<1x4x32xf32>,
    %287 = vector.extract_strided_slice %282 {offsets = [4, 0], sizes = [4, 32], strides = [1, 1]} : vector<8x32xf32> to vector<4x32xf32>
    %c0_207 = arith.constant 0 : index
    %c0_208 = arith.constant 0 : index
    %c800 = arith.constant 800 : index
    %288 = vector.load %arg11[%c0_207, %c0_208, %c800] : memref<1x8x1024xf32, #tpu.memory_space<vmem>>, vector<1x4x32xf32>
    %289 = vector.shape_cast %288 : vector<1x4x32xf32> to vector<4x32xf32>
    %290 = vector.shape_cast %287 : vector<4x32xf32> to vector<1x4x32xf32>
    tpu.vector_store %arg11[%c0_207, %c0_208, %c800], %290 {strides = array<i32>} : memref<1x8x1024xf32, #tpu.memory_space<vmem>>, vector<1x4x32xf32>,
    %291 = vector.extract_strided_slice %104 {offsets = [0, 252], sizes = [16, 18], strides = [1, 1]} : vector<16x324xf32> to vector<16x18xf32>
    %292 = vector.extract_strided_slice %291 {offsets = [0, 0], sizes = [8, 18], strides = [1, 1]} : vector<16x18xf32> to vector<8x18xf32>
    %cst_209 = arith.constant dense<0.000000e+00> : vector<8x32xf32>
    %293 = tpu.matmul %292, %106, %cst_209 {dimension_numbers = #tpu.dot_dimension_numbers<[1], [0], [0], [1], [0, 0, 1, 1], [], []>} : vector<8x18xf32>, vector<18x32xf32>, vector<8x32xf32> -> vector<8x32xf32>
    %294 = vector.extract_strided_slice %291 {offsets = [8, 0], sizes = [8, 18], strides = [1, 1]} : vector<16x18xf32> to vector<8x18xf32>
    %cst_210 = arith.constant dense<0.000000e+00> : vector<8x32xf32>
    %295 = tpu.matmul %294, %108, %cst_210 {dimension_numbers = #tpu.dot_dimension_numbers<[1], [0], [0], [1], [0, 0, 1, 1], [], []>} : vector<8x18xf32>, vector<18x32xf32>, vector<8x32xf32> -> vector<8x32xf32>
    %296 = arith.addf %293, %295 : vector<8x32xf32>
    %297 = vector.extract_strided_slice %296 {offsets = [0, 0], sizes = [4, 32], strides = [1, 1]} : vector<8x32xf32> to vector<4x32xf32>
    %c0_211 = arith.constant 0 : index
    %c0_212 = arith.constant 0 : index
    %c832 = arith.constant 832 : index
    %298 = vector.load %arg11[%c0_211, %c0_212, %c832] : memref<1x8x1024xf32, #tpu.memory_space<vmem>>, vector<1x4x32xf32>
    %299 = vector.shape_cast %298 : vector<1x4x32xf32> to vector<4x32xf32>
    %300 = vector.shape_cast %297 : vector<4x32xf32> to vector<1x4x32xf32>
    tpu.vector_store %arg11[%c0_211, %c0_212, %c832], %300 {strides = array<i32>} : memref<1x8x1024xf32, #tpu.memory_space<vmem>>, vector<1x4x32xf32>,
    %301 = vector.extract_strided_slice %296 {offsets = [4, 0], sizes = [4, 32], strides = [1, 1]} : vector<8x32xf32> to vector<4x32xf32>
    %c0_213 = arith.constant 0 : index
    %c0_214 = arith.constant 0 : index
    %c864 = arith.constant 864 : index
    %302 = vector.load %arg11[%c0_213, %c0_214, %c864] : memref<1x8x1024xf32, #tpu.memory_space<vmem>>, vector<1x4x32xf32>
    %303 = vector.shape_cast %302 : vector<1x4x32xf32> to vector<4x32xf32>
    %304 = vector.shape_cast %301 : vector<4x32xf32> to vector<1x4x32xf32>
    tpu.vector_store %arg11[%c0_213, %c0_214, %c864], %304 {strides = array<i32>} : memref<1x8x1024xf32, #tpu.memory_space<vmem>>, vector<1x4x32xf32>,
    %305 = vector.extract_strided_slice %104 {offsets = [0, 270], sizes = [16, 18], strides = [1, 1]} : vector<16x324xf32> to vector<16x18xf32>
    %306 = vector.extract_strided_slice %305 {offsets = [0, 0], sizes = [8, 18], strides = [1, 1]} : vector<16x18xf32> to vector<8x18xf32>
    %cst_215 = arith.constant dense<0.000000e+00> : vector<8x32xf32>
    %307 = tpu.matmul %306, %106, %cst_215 {dimension_numbers = #tpu.dot_dimension_numbers<[1], [0], [0], [1], [0, 0, 1, 1], [], []>} : vector<8x18xf32>, vector<18x32xf32>, vector<8x32xf32> -> vector<8x32xf32>
    %308 = vector.extract_strided_slice %305 {offsets = [8, 0], sizes = [8, 18], strides = [1, 1]} : vector<16x18xf32> to vector<8x18xf32>
    %cst_216 = arith.constant dense<0.000000e+00> : vector<8x32xf32>
    %309 = tpu.matmul %308, %108, %cst_216 {dimension_numbers = #tpu.dot_dimension_numbers<[1], [0], [0], [1], [0, 0, 1, 1], [], []>} : vector<8x18xf32>, vector<18x32xf32>, vector<8x32xf32> -> vector<8x32xf32>
    %310 = arith.addf %307, %309 : vector<8x32xf32>
    %311 = vector.extract_strided_slice %310 {offsets = [0, 0], sizes = [4, 32], strides = [1, 1]} : vector<8x32xf32> to vector<4x32xf32>
    %c0_217 = arith.constant 0 : index
    %c0_218 = arith.constant 0 : index
    %c896 = arith.constant 896 : index
    %312 = vector.load %arg11[%c0_217, %c0_218, %c896] : memref<1x8x1024xf32, #tpu.memory_space<vmem>>, vector<1x4x32xf32>
    %313 = vector.shape_cast %312 : vector<1x4x32xf32> to vector<4x32xf32>
    %314 = vector.shape_cast %311 : vector<4x32xf32> to vector<1x4x32xf32>
    tpu.vector_store %arg11[%c0_217, %c0_218, %c896], %314 {strides = array<i32>} : memref<1x8x1024xf32, #tpu.memory_space<vmem>>, vector<1x4x32xf32>,
    %315 = vector.extract_strided_slice %310 {offsets = [4, 0], sizes = [4, 32], strides = [1, 1]} : vector<8x32xf32> to vector<4x32xf32>
    %c0_219 = arith.constant 0 : index
    %c0_220 = arith.constant 0 : index
    %c928 = arith.constant 928 : index
    %316 = vector.load %arg11[%c0_219, %c0_220, %c928] : memref<1x8x1024xf32, #tpu.memory_space<vmem>>, vector<1x4x32xf32>
    %317 = vector.shape_cast %316 : vector<1x4x32xf32> to vector<4x32xf32>
    %318 = vector.shape_cast %315 : vector<4x32xf32> to vector<1x4x32xf32>
    tpu.vector_store %arg11[%c0_219, %c0_220, %c928], %318 {strides = array<i32>} : memref<1x8x1024xf32, #tpu.memory_space<vmem>>, vector<1x4x32xf32>,
    %319 = vector.extract_strided_slice %104 {offsets = [0, 288], sizes = [16, 18], strides = [1, 1]} : vector<16x324xf32> to vector<16x18xf32>
    %320 = vector.extract_strided_slice %319 {offsets = [0, 0], sizes = [8, 18], strides = [1, 1]} : vector<16x18xf32> to vector<8x18xf32>
    %cst_221 = arith.constant dense<0.000000e+00> : vector<8x32xf32>
    %321 = tpu.matmul %320, %106, %cst_221 {dimension_numbers = #tpu.dot_dimension_numbers<[1], [0], [0], [1], [0, 0, 1, 1], [], []>} : vector<8x18xf32>, vector<18x32xf32>, vector<8x32xf32> -> vector<8x32xf32>
    %322 = vector.extract_strided_slice %319 {offsets = [8, 0], sizes = [8, 18], strides = [1, 1]} : vector<16x18xf32> to vector<8x18xf32>
    %cst_222 = arith.constant dense<0.000000e+00> : vector<8x32xf32>
    %323 = tpu.matmul %322, %108, %cst_222 {dimension_numbers = #tpu.dot_dimension_numbers<[1], [0], [0], [1], [0, 0, 1, 1], [], []>} : vector<8x18xf32>, vector<18x32xf32>, vector<8x32xf32> -> vector<8x32xf32>
    %324 = arith.addf %321, %323 : vector<8x32xf32>
    %325 = vector.extract_strided_slice %324 {offsets = [0, 0], sizes = [4, 32], strides = [1, 1]} : vector<8x32xf32> to vector<4x32xf32>
    %c0_223 = arith.constant 0 : index
    %c0_224 = arith.constant 0 : index
    %c960 = arith.constant 960 : index
    %326 = vector.load %arg11[%c0_223, %c0_224, %c960] : memref<1x8x1024xf32, #tpu.memory_space<vmem>>, vector<1x4x32xf32>
    %327 = vector.shape_cast %326 : vector<1x4x32xf32> to vector<4x32xf32>
    %328 = vector.shape_cast %325 : vector<4x32xf32> to vector<1x4x32xf32>
    tpu.vector_store %arg11[%c0_223, %c0_224, %c960], %328 {strides = array<i32>} : memref<1x8x1024xf32, #tpu.memory_space<vmem>>, vector<1x4x32xf32>,
    %329 = vector.extract_strided_slice %324 {offsets = [4, 0], sizes = [4, 32], strides = [1, 1]} : vector<8x32xf32> to vector<4x32xf32>
    %c0_225 = arith.constant 0 : index
    %c0_226 = arith.constant 0 : index
    %c992 = arith.constant 992 : index
    %330 = vector.load %arg11[%c0_225, %c0_226, %c992] : memref<1x8x1024xf32, #tpu.memory_space<vmem>>, vector<1x4x32xf32>
    %331 = vector.shape_cast %330 : vector<1x4x32xf32> to vector<4x32xf32>
    %332 = vector.shape_cast %329 : vector<4x32xf32> to vector<1x4x32xf32>
    tpu.vector_store %arg11[%c0_225, %c0_226, %c992], %332 {strides = array<i32>} : memref<1x8x1024xf32, #tpu.memory_space<vmem>>, vector<1x4x32xf32>,
    %c0_227 = arith.constant 0 : index
    %c0_228 = arith.constant 0 : index
    %c0_229 = arith.constant 0 : index
    %333 = vector.load %arg10[%c0_227, %c0_228, %c0_229] : memref<1x4x1024xf32, #tpu.memory_space<vmem>>, vector<1x4x1024xf32>
    %334 = vector.shape_cast %333 : vector<1x4x1024xf32> to vector<4x1024xf32>
    %c0_230 = arith.constant 0 : index
    %c4_231 = arith.constant 4 : index
    %c0_232 = arith.constant 0 : index
    %335 = vector.load %arg11[%c0_230, %c4_231, %c0_232] : memref<1x8x1024xf32, #tpu.memory_space<vmem>>, vector<1x4x1024xf32>
    %336 = vector.shape_cast %335 : vector<1x4x1024xf32> to vector<4x1024xf32>
    %337 = vector.shape_cast %334 : vector<4x1024xf32> to vector<1x4x1024xf32>
    tpu.vector_store %arg11[%c0_230, %c4_231, %c0_232], %337 {strides = array<i32>} : memref<1x8x1024xf32, #tpu.memory_space<vmem>>, vector<1x4x1024xf32>,
    return
  }
  func.func @transform_0(%arg0: i32) -> (i32, i32, i32) {
    %c0_i32 = arith.constant 0 : i32
    %c0_i32_0 = arith.constant 0 : i32
    %c0_i32_1 = arith.constant 0 : i32
    return %arg0, %c0_i32, %c0_i32_0 : i32, i32, i32
  }
  func.func @transform_1(%arg0: i32) -> (i32, i32) {
    %c0_i32 = arith.constant 0 : i32
    %c0_i32_0 = arith.constant 0 : i32
    %c0_i32_1 = arith.constant 0 : i32
    return %c0_i32, %c0_i32_0 : i32, i32
  }
  func.func @transform_2(%arg0: i32) -> (i32, i32, i32) {
    %c0_i32 = arith.constant 0 : i32
    %c0_i32_0 = arith.constant 0 : i32
    %c0_i32_1 = arith.constant 0 : i32
    %c0_i32_2 = arith.constant 0 : i32
    return %c0_i32, %c0_i32_0, %c0_i32_1 : i32, i32, i32
  }
  func.func @transform_3(%arg0: i32) -> (i32, i32) {
    %c0_i32 = arith.constant 0 : i32
    %c0_i32_0 = arith.constant 0 : i32
    %c0_i32_1 = arith.constant 0 : i32
    return %c0_i32, %c0_i32_0 : i32, i32
  }
  func.func @transform_4(%arg0: i32) -> (i32, i32, i32) {
    %c0_i32 = arith.constant 0 : i32
    %c0_i32_0 = arith.constant 0 : i32
    %c0_i32_1 = arith.constant 0 : i32
    %c0_i32_2 = arith.constant 0 : i32
    return %c0_i32, %c0_i32_0, %c0_i32_1 : i32, i32, i32
  }
  func.func @transform_5(%arg0: i32) -> (i32, i32) {
    %c0_i32 = arith.constant 0 : i32
    %c0_i32_0 = arith.constant 0 : i32
    %c0_i32_1 = arith.constant 0 : i32
    return %c0_i32, %c0_i32_0 : i32, i32
  }
  func.func @transform_6(%arg0: i32) -> (i32, i32, i32) {
    %c0_i32 = arith.constant 0 : i32
    %c0_i32_0 = arith.constant 0 : i32
    %c0_i32_1 = arith.constant 0 : i32
    %c0_i32_2 = arith.constant 0 : i32
    return %c0_i32, %c0_i32_0, %c0_i32_1 : i32, i32, i32
  }
  func.func @transform_7(%arg0: i32) -> (i32, i32, i32) {
    %c0_i32 = arith.constant 0 : i32
    %c0_i32_0 = arith.constant 0 : i32
    %c0_i32_1 = arith.constant 0 : i32
    %c0_i32_2 = arith.constant 0 : i32
    return %c0_i32, %c0_i32_0, %c0_i32_1 : i32, i32, i32
  }
  func.func @transform_8(%arg0: i32) -> (i32, i32) {
    %c0_i32 = arith.constant 0 : i32
    %c0_i32_0 = arith.constant 0 : i32
    %c0_i32_1 = arith.constant 0 : i32
    return %c0_i32, %c0_i32_0 : i32, i32
  }
  func.func @transform_9(%arg0: i32) -> (i32, i32, i32) {
    %c0_i32 = arith.constant 0 : i32
    %c0_i32_0 = arith.constant 0 : i32
    %c0_i32_1 = arith.constant 0 : i32
    return %arg0, %c0_i32, %c0_i32_0 : i32, i32, i32
  }
  func.func @transform_10(%arg0: i32) -> (i32, i32, i32) {
    %c0_i32 = arith.constant 0 : i32
    %c0_i32_0 = arith.constant 0 : i32
    %c0_i32_1 = arith.constant 0 : i32
    return %arg0, %c0_i32, %c0_i32_0 : i32, i32, i32
  }
}

</mosaic_0001>

<llo_original>
// kernel: tile.17
$region0: #{tile.17}
  #allocation0 [shape = 's32[1]{0}', space=sflag, size = 0x4, scoped, tag = 'scoped memory for tile.17']
  %s0 = inlined_call_operand.vmem [shape: f32[4], index: 0, kind: input, shape index: {}]
  %s1 = inlined_call_operand.vmem [shape: f32[4,4], index: 1, kind: output, shape index: {}]
  // Predicated region
  $region2: #{tile.17} parent=0 // pred_check
    _
  $region3: #{tile.17} parent=0 // pred_check_branch
    %3 = sbr.rel (0) target = $region5
  $region4: #{tile.17} parent=0 // pred_region
    _
  $region5: #{tile.17} parent=0 // pred_fallthru
    _
  %v4 = vld [vmem:[%s0] ss:$0 sm:$0xff]
  %5 = vst [vmem:[%s1] sm:$0xf] %v4

// kernel: tile.19
$region0: #{tile.19}
  %s0 = inlined_call_operand.vmem [shape: f32[4,4], index: 0, kind: input, shape index: {}]
  %s1 = inlined_call_operand.vmem [shape: f32[1,16], index: 1, kind: output, shape index: {}]
  $region1: #{tile.19} parent=0
    #allocation0 [shape = 'u8[4096]{0}', space=vmem, size = 0x1000, scoped, tag = 'scoped mem for output reshape']
    #allocation1 [shape = 'u8[4096]{0}', space=vmem, size = 0x1000, scoped, tag = 'scoped mem for input reshape']
    %s3 = ssub.s32 16, 1
    %v4 = vld [vmem:[%s0] sm:%s3]
    %5 = vst [vmem:[#allocation1] sm:%s3] %v4
    %v6 = vld [vmem:[#allocation1] sm:$0x1]
    %vm7 = vcmask 31744
    %8 = vst.msk [vmem:[#allocation0] sm:$0x1] %vm7, %v6
    %s9 = scalar_lea.vmem [#allocation1], 3
    %v10 = vld [vmem:[%s9] sm:$0x1]
    %11 = vrot.lane.b32.xlu0 %v10, 12
    %v12 = vpop.permute.xlu0 %11
    %vm13 = vcmask 130144
    %14 = vst.msk [vmem:[#allocation0] sm:$0x1] %vm13, %v12
    %s15 = scalar_lea.vmem [#allocation1], 2
    %v16 = vld [vmem:[%s15] sm:$0x1]
    %17 = vrot.lane.b32.xlu0 %v16, 8
    %v18 = vpop.permute.xlu0 %17
    %vm19 = vcmask 97344
    %20 = vst.msk [vmem:[#allocation0] sm:$0x1] %vm19, %v18
    %s21 = scalar_lea.vmem [#allocation1], 1
    %v22 = vld [vmem:[%s21] sm:$0x1]
    %23 = vrot.lane.b32.xlu0 %v22, 4
    %v24 = vpop.permute.xlu0 %23
    %vm25 = vcmask 64544
    %26 = vst.msk [vmem:[#allocation0] sm:$0x1] %vm25, %v24
    %s28 = ssub.s32 2, 1
    %v29 = vld [vmem:[#allocation0] sm:%s28]
    %s31 = ssub.s32 2, 1
    %32 = vst [vmem:[%s1] sm:%s31] %v29

// kernel: upsample_layer_forward.1
$region0: #{upsample_layer_forward.1}
  #allocation0 [shape = 'u32[]', space=smem, size = 0x4, offset = 0x4, fixed_abs, tag = 'smem constant byte address 0x4 - core index']
  #allocation1 [shape = 'u32[72,128]{1,0:T(1,128)}', space=vmem, size = 0x9000, scoped, tag = 'internal scratch']
  #allocation2 [shape = 'f32[8,362]{1,0:T(8,128)}', space=vmem, size = 0x3000, scoped, tag = 'scratch operand']
  #allocation3 [shape = 'f32[72,324]{1,0:T(8,128)}', space=vmem, size = 0x1b000, scoped, tag = 'scratch operand']
  %s0 = inlined_call_operand.vmem [shape: f32[2,4,324], index: 0, kind: input, shape index: {}]
  %s1 = inlined_call_operand.vmem [shape: f32[8,36], index: 1, kind: input, shape index: {}]
  %s2 = inlined_call_operand.vmem [shape: f32[2,8,1], index: 2, kind: input, shape index: {}]
  %s3 = inlined_call_operand.vmem [shape: f32[8,72], index: 3, kind: input, shape index: {}]
  %s4 = inlined_call_operand.vmem [shape: f32[2,8,1], index: 4, kind: input, shape index: {}]
  %s5 = inlined_call_operand.vmem [shape: f32[16,32], index: 5, kind: input, shape index: {}]
  %s6 = inlined_call_operand.vmem [shape: f32[2,16,1], index: 6, kind: input, shape index: {}]
  %s7 = inlined_call_operand.vmem [shape: f32[2,18,32], index: 7, kind: input, shape index: {}]
  %s8 = inlined_call_operand.vmem [shape: f32[1,324], index: 8, kind: input, shape index: {}]
  %s9 = inlined_call_operand.vmem [shape: f32[2,4,1024], index: 9, kind: input, shape index: {}]
  %s10 = inlined_call_operand.vmem [shape: f32[2,8,1024], index: 10, kind: output, shape index: {}]
  %s11 = sld [smem:[#allocation0]]
  $region73: #{upsample_layer_forward.1} parent=0
    _
  %s13 = ssub.s32 1, %s11
  %s14 = scalar_select 0, %s13, %s11
  loop: start=0, step=1, limit=4
  $region2: #{upsample_layer_forward.1} parent=0 // loop_pre_header
    _
  $region3: #{upsample_layer_forward.1} parent=0 // loop_header
    %s16 = sphi 0, %s20
    %p17 = scmp.ge.s32.totalorder %s16, 4
    %s26 = sphi 0, %s28
    %s29 = sphi 0, %s26
    %s30 = sphi 0, %s29
    %s46 = sphi 0, %s30
    %s50 = sphi 0, %s50
    %s52 = sphi 0, %s50
    %s53 = sphi 0, %s52
    %s67 = sphi 0, %s53
    %s71 = sphi 0, %s71
    %s73 = sphi 0, %s71
    %s74 = sphi 0, %s73
    %s88 = sphi 0, %s74
    %s92 = sphi 0, %s92
    %s94 = sphi 0, %s92
    %s95 = sphi 0, %s94
    %s109 = sphi 0, %s95
    %s113 = sphi 0, %s113
    %s115 = sphi 0, %s113
    %s116 = sphi 0, %s115
    %s130 = sphi 0, %s116
    %s134 = sphi 0, %s134
    %s136 = sphi 0, %s134
    %s137 = sphi 0, %s136
    %s151 = sphi 0, %s137
    %s155 = sphi 0, %s155
    %s157 = sphi 0, %s155
    %s158 = sphi 0, %s157
    %s172 = sphi 0, %s158
    %s176 = sphi 0, %s176
    %s178 = sphi 0, %s176
    %s179 = sphi 0, %s178
    %s193 = sphi 0, %s179
    %s197 = sphi 0, %s197
    %s199 = sphi 0, %s197
    %s200 = sphi 0, %s199
    %s214 = sphi 0, %s200
    %s220 = sphi 0, %s222
    %s223 = sphi 0, %s220
    %s224 = sphi 0, %s223
    %s240 = sphi 0, %s224
    %s246 = sphi 0, %s248
    %s249 = sphi 0, %s246
    %s250 = sphi 0, %s249
    %s266 = sphi 0, %s250
  $region4: #{upsample_layer_forward.1} parent=0 // loop_header_branch
    %19 = sbr.rel (%p17) target = $region8
  $region5: #{upsample_layer_forward.1} parent=0 // loop_body
    %s21 = ssub.s32 %s16, 1
    %s22 = ssub.s32 %s16, 2
    %s23 = sadd.s32 %s16, 1
    %s24 = ssub.s32 %s16, %s23
    %p25 = scmp.eq.s32.totalorder %s24, 0
    %s27 = sadd.s32 %s26, 1
    %s28 = scalar_select %p25, %s26, %s27
    %p31 = pneg %p25
    %p32 = scmp.eq.s32.totalorder %s16, 1
    %p33 = por %p31, %p32
    %p34 = scmp.ne.s32.totalorder %s26, %s29
    %p35 = scmp.eq.s32.totalorder %s16, 0
    %p36 = por %p34, %p35
    %p37 = scmp.ne.s32.totalorder %s26, %s29
    %p38 = scmp.eq.s32.totalorder %s21, 1
    %p39 = por %p37, %p38
    %p40 = scmp.ne.s32.totalorder %s29, %s30
    %p41 = scmp.eq.s32.totalorder %s21, 0
    %p42 = por %p40, %p41
    %p43 = scmp.ne.s32.totalorder %s29, %s30
    %p44 = scmp.eq.s32.totalorder %s22, 1
    %p45 = por %p43, %p44
    %p47 = scmp.ne.s32.totalorder %s30, %s46
    %p48 = scmp.eq.s32.totalorder %s22, 0
    %p49 = por %p47, %p48
    %s51 = sadd.s32 %s50, 1
    %p54 = scmp.eq.s32.totalorder %s16, 1
    %p55 = scmp.ne.s32.totalorder %s50, %s52
    %p56 = scmp.eq.s32.totalorder %s16, 0
    %p57 = por %p55, %p56
    %p58 = scmp.ne.s32.totalorder %s50, %s52
    %p59 = scmp.eq.s32.totalorder %s21, 1
    %p60 = por %p58, %p59
    %p61 = scmp.ne.s32.totalorder %s52, %s53
    %p62 = scmp.eq.s32.totalorder %s21, 0
    %p63 = por %p61, %p62
    %p64 = scmp.ne.s32.totalorder %s52, %s53
    %p65 = scmp.eq.s32.totalorder %s22, 1
    %p66 = por %p64, %p65
    %p68 = scmp.ne.s32.totalorder %s53, %s67
    %p69 = scmp.eq.s32.totalorder %s22, 0
    %p70 = por %p68, %p69
    %s72 = sadd.s32 %s71, 1
    %p75 = scmp.eq.s32.totalorder %s16, 1
    %p76 = scmp.ne.s32.totalorder %s71, %s73
    %p77 = scmp.eq.s32.totalorder %s16, 0
    %p78 = por %p76, %p77
    %p79 = scmp.ne.s32.totalorder %s71, %s73
    %p80 = scmp.eq.s32.totalorder %s21, 1
    %p81 = por %p79, %p80
    %p82 = scmp.ne.s32.totalorder %s73, %s74
    %p83 = scmp.eq.s32.totalorder %s21, 0
    %p84 = por %p82, %p83
    %p85 = scmp.ne.s32.totalorder %s73, %s74
    %p86 = scmp.eq.s32.totalorder %s22, 1
    %p87 = por %p85, %p86
    %p89 = scmp.ne.s32.totalorder %s74, %s88
    %p90 = scmp.eq.s32.totalorder %s22, 0
    %p91 = por %p89, %p90
    %s93 = sadd.s32 %s92, 1
    %p96 = scmp.eq.s32.totalorder %s16, 1
    %p97 = scmp.ne.s32.totalorder %s92, %s94
    %p98 = scmp.eq.s32.totalorder %s16, 0
    %p99 = por %p97, %p98
    %p100 = scmp.ne.s32.totalorder %s92, %s94
    %p101 = scmp.eq.s32.totalorder %s21, 1
    %p102 = por %p100, %p101
    %p103 = scmp.ne.s32.totalorder %s94, %s95
    %p104 = scmp.eq.s32.totalorder %s21, 0
    %p105 = por %p103, %p104
    %p106 = scmp.ne.s32.totalorder %s94, %s95
    %p107 = scmp.eq.s32.totalorder %s22, 1
    %p108 = por %p106, %p107
    %p110 = scmp.ne.s32.totalorder %s95, %s109
    %p111 = scmp.eq.s32.totalorder %s22, 0
    %p112 = por %p110, %p111
    %s114 = sadd.s32 %s113, 1
    %p117 = scmp.eq.s32.totalorder %s16, 1
    %p118 = scmp.ne.s32.totalorder %s113, %s115
    %p119 = scmp.eq.s32.totalorder %s16, 0
    %p120 = por %p118, %p119
    %p121 = scmp.ne.s32.totalorder %s113, %s115
    %p122 = scmp.eq.s32.totalorder %s21, 1
    %p123 = por %p121, %p122
    %p124 = scmp.ne.s32.totalorder %s115, %s116
    %p125 = scmp.eq.s32.totalorder %s21, 0
    %p126 = por %p124, %p125
    %p127 = scmp.ne.s32.totalorder %s115, %s116
    %p128 = scmp.eq.s32.totalorder %s22, 1
    %p129 = por %p127, %p128
    %p131 = scmp.ne.s32.totalorder %s116, %s130
    %p132 = scmp.eq.s32.totalorder %s22, 0
    %p133 = por %p131, %p132
    %s135 = sadd.s32 %s134, 1
    %p138 = scmp.eq.s32.totalorder %s16, 1
    %p139 = scmp.ne.s32.totalorder %s134, %s136
    %p140 = scmp.eq.s32.totalorder %s16, 0
    %p141 = por %p139, %p140
    %p142 = scmp.ne.s32.totalorder %s134, %s136
    %p143 = scmp.eq.s32.totalorder %s21, 1
    %p144 = por %p142, %p143
    %p145 = scmp.ne.s32.totalorder %s136, %s137
    %p146 = scmp.eq.s32.totalorder %s21, 0
    %p147 = por %p145, %p146
    %p148 = scmp.ne.s32.totalorder %s136, %s137
    %p149 = scmp.eq.s32.totalorder %s22, 1
    %p150 = por %p148, %p149
    %p152 = scmp.ne.s32.totalorder %s137, %s151
    %p153 = scmp.eq.s32.totalorder %s22, 0
    %p154 = por %p152, %p153
    %s156 = sadd.s32 %s155, 1
    %p159 = scmp.eq.s32.totalorder %s16, 1
    %p160 = scmp.ne.s32.totalorder %s155, %s157
    %p161 = scmp.eq.s32.totalorder %s16, 0
    %p162 = por %p160, %p161
    %p163 = scmp.ne.s32.totalorder %s155, %s157
    %p164 = scmp.eq.s32.totalorder %s21, 1
    %p165 = por %p163, %p164
    %p166 = scmp.ne.s32.totalorder %s157, %s158
    %p167 = scmp.eq.s32.totalorder %s21, 0
    %p168 = por %p166, %p167
    %p169 = scmp.ne.s32.totalorder %s157, %s158
    %p170 = scmp.eq.s32.totalorder %s22, 1
    %p171 = por %p169, %p170
    %p173 = scmp.ne.s32.totalorder %s158, %s172
    %p174 = scmp.eq.s32.totalorder %s22, 0
    %p175 = por %p173, %p174
    %s177 = sadd.s32 %s176, 1
    %p180 = scmp.eq.s32.totalorder %s16, 1
    %p181 = scmp.ne.s32.totalorder %s176, %s178
    %p182 = scmp.eq.s32.totalorder %s16, 0
    %p183 = por %p181, %p182
    %p184 = scmp.ne.s32.totalorder %s176, %s178
    %p185 = scmp.eq.s32.totalorder %s21, 1
    %p186 = por %p184, %p185
    %p187 = scmp.ne.s32.totalorder %s178, %s179
    %p188 = scmp.eq.s32.totalorder %s21, 0
    %p189 = por %p187, %p188
    %p190 = scmp.ne.s32.totalorder %s178, %s179
    %p191 = scmp.eq.s32.totalorder %s22, 1
    %p192 = por %p190, %p191
    %p194 = scmp.ne.s32.totalorder %s179, %s193
    %p195 = scmp.eq.s32.totalorder %s22, 0
    %p196 = por %p194, %p195
    %s198 = sadd.s32 %s197, 1
    %p201 = scmp.eq.s32.totalorder %s16, 1
    %p202 = scmp.ne.s32.totalorder %s197, %s199
    %p203 = scmp.eq.s32.totalorder %s16, 0
    %p204 = por %p202, %p203
    %p205 = scmp.ne.s32.totalorder %s197, %s199
    %p206 = scmp.eq.s32.totalorder %s21, 1
    %p207 = por %p205, %p206
    %p208 = scmp.ne.s32.totalorder %s199, %s200
    %p209 = scmp.eq.s32.totalorder %s21, 0
    %p210 = por %p208, %p209
    %p211 = scmp.ne.s32.totalorder %s199, %s200
    %p212 = scmp.eq.s32.totalorder %s22, 1
    %p213 = por %p211, %p212
    %p215 = scmp.ne.s32.totalorder %s200, %s214
    %p216 = scmp.eq.s32.totalorder %s22, 0
    %p217 = por %p215, %p216
    %s218 = ssub.s32 %s16, %s23
    %p219 = scmp.eq.s32.totalorder %s218, 0
    %s221 = sadd.s32 %s220, 1
    %s222 = scalar_select %p219, %s220, %s221
    %p225 = pneg %p219
    %p226 = scmp.eq.s32.totalorder %s16, 1
    %p227 = por %p225, %p226
    %p228 = scmp.ne.s32.totalorder %s220, %s223
    %p229 = scmp.eq.s32.totalorder %s16, 0
    %p230 = por %p228, %p229
    %p231 = scmp.ne.s32.totalorder %s220, %s223
    %p232 = scmp.eq.s32.totalorder %s21, 1
    %p233 = por %p231, %p232
    %p234 = scmp.ne.s32.totalorder %s223, %s224
    %p235 = scmp.eq.s32.totalorder %s21, 0
    %p236 = por %p234, %p235
    %p237 = scmp.ne.s32.totalorder %s223, %s224
    %p238 = scmp.eq.s32.totalorder %s22, 1
    %p239 = por %p237, %p238
    %p241 = scmp.ne.s32.totalorder %s224, %s240
    %p242 = scmp.eq.s32.totalorder %s22, 0
    %p243 = por %p241, %p242
    %s244 = ssub.s32 %s16, %s23
    %p245 = scmp.eq.s32.totalorder %s244, 0
    %s247 = sadd.s32 %s246, 1
    %s248 = scalar_select %p245, %s246, %s247
    %p251 = pneg %p245
    %p252 = scmp.eq.s32.totalorder %s16, 1
    %p253 = por %p251, %p252
    %p254 = scmp.ne.s32.totalorder %s246, %s249
    %p255 = scmp.eq.s32.totalorder %s16, 0
    %p256 = por %p254, %p255
    %p257 = scmp.ne.s32.totalorder %s246, %s249
    %p258 = scmp.eq.s32.totalorder %s21, 1
    %p259 = por %p257, %p258
    %p260 = scmp.ne.s32.totalorder %s249, %s250
    %p261 = scmp.eq.s32.totalorder %s21, 0
    %p262 = por %p260, %p261
    %p263 = scmp.ne.s32.totalorder %s249, %s250
    %p264 = scmp.eq.s32.totalorder %s22, 1
    %p265 = por %p263, %p264
    %p267 = scmp.ne.s32.totalorder %s250, %s266
    %p268 = scmp.eq.s32.totalorder %s22, 0
    %p269 = por %p267, %p268
    %p270 = scmp.le.s32.totalorder 1, %s16
    %p271 = scmp.lt.s32.totalorder %s16, 3
    %p272 = pnand %p270, %p271
    %p273 = pneg %p272
    // Predicated region
    $region9: #{upsample_layer_forward.1} parent=5 // pred_check
      _
    $region10: #{upsample_layer_forward.1} parent=5 // pred_check_branch
      %275 = sbr.rel (%p272) target = $region12
    $region11: #{upsample_layer_forward.1} parent=5 // pred_region
      %s276 = ssub.s32 %s16, 1
      // Predicated region
      $region13: #{upsample_layer_forward.1} parent=11 // pred_check
        %p277 = pneg %p63
      $region14: #{upsample_layer_forward.1} parent=11 // pred_check_branch
        %279 = sbr.rel (%p277) target = $region16
      $region15: #{upsample_layer_forward.1} parent=11 // pred_region
        _
      $region16: #{upsample_layer_forward.1} parent=11 // pred_fallthru
        _
      // Predicated region
      $region17: #{upsample_layer_forward.1} parent=11 // pred_check
        %p280 = pneg %p84
      $region18: #{upsample_layer_forward.1} parent=11 // pred_check_branch
        %282 = sbr.rel (%p280) target = $region20
      $region19: #{upsample_layer_forward.1} parent=11 // pred_region
        _
      $region20: #{upsample_layer_forward.1} parent=11 // pred_fallthru
        _
      // Predicated region
      $region21: #{upsample_layer_forward.1} parent=11 // pred_check
        %p283 = pneg %p105
      $region22: #{upsample_layer_forward.1} parent=11 // pred_check_branch
        %285 = sbr.rel (%p283) target = $region24
      $region23: #{upsample_layer_forward.1} parent=11 // pred_region
        _
      $region24: #{upsample_layer_forward.1} parent=11 // pred_fallthru
        _
      // Predicated region
      $region25: #{upsample_layer_forward.1} parent=11 // pred_check
        %p286 = pneg %p126
      $region26: #{upsample_layer_forward.1} parent=11 // pred_check_branch
        %288 = sbr.rel (%p286) target = $region28
      $region27: #{upsample_layer_forward.1} parent=11 // pred_region
        _
      $region28: #{upsample_layer_forward.1} parent=11 // pred_fallthru
        _
      // Predicated region
      $region29: #{upsample_layer_forward.1} parent=11 // pred_check
        %p289 = pneg %p147
      $region30: #{upsample_layer_forward.1} parent=11 // pred_check_branch
        %291 = sbr.rel (%p289) target = $region32
      $region31: #{upsample_layer_forward.1} parent=11 // pred_region
        _
      $region32: #{upsample_layer_forward.1} parent=11 // pred_fallthru
        _
      // Predicated region
      $region33: #{upsample_layer_forward.1} parent=11 // pred_check
        %p292 = pneg %p168
      $region34: #{upsample_layer_forward.1} parent=11 // pred_check_branch
        %294 = sbr.rel (%p292) target = $region36
      $region35: #{upsample_layer_forward.1} parent=11 // pred_region
        _
      $region36: #{upsample_layer_forward.1} parent=11 // pred_fallthru
        _
      // Predicated region
      $region37: #{upsample_layer_forward.1} parent=11 // pred_check
        %p295 = pneg %p189
      $region38: #{upsample_layer_forward.1} parent=11 // pred_check_branch
        %297 = sbr.rel (%p295) target = $region40
      $region39: #{upsample_layer_forward.1} parent=11 // pred_region
        _
      $region40: #{upsample_layer_forward.1} parent=11 // pred_fallthru
        _
      // Predicated region
      $region41: #{upsample_layer_forward.1} parent=11 // pred_check
        %p298 = pneg %p210
      $region42: #{upsample_layer_forward.1} parent=11 // pred_check_branch
        %300 = sbr.rel (%p298) target = $region44
      $region43: #{upsample_layer_forward.1} parent=11 // pred_region
        _
      $region44: #{upsample_layer_forward.1} parent=11 // pred_fallthru
        _
    $region12: #{upsample_layer_forward.1} parent=5 // pred_fallthru
      _
    %p301 = scmp.lt.s32.totalorder %s16, 2
    // Predicated region
    $region45: #{upsample_layer_forward.1} parent=5 // pred_check
      %p302 = pneg %p301
    $region46: #{upsample_layer_forward.1} parent=5 // pred_check_branch
      %304 = sbr.rel (%p302) target = $region48
    $region47: #{upsample_layer_forward.1} parent=5 // pred_region
      // Predicated region
      $region49: #{upsample_layer_forward.1} parent=47 // pred_check
        %p305 = pneg %p36
      $region50: #{upsample_layer_forward.1} parent=47 // pred_check_branch
        %307 = sbr.rel (%p305) target = $region52
      $region51: #{upsample_layer_forward.1} parent=47 // pred_region
        %p308 = scmp.lt.s32.totalorder %s16, 1
        %s309 = scalar_select %p308, %s16, 1
        %s310 = smul.addr %s309, 3
        %s311 = smul.addr %s310, 4
        %s312 = scalar_lea.vmem %s0, %s311
      $region52: #{upsample_layer_forward.1} parent=47 // pred_fallthru
        _
      // Predicated region
      $region53: #{upsample_layer_forward.1} parent=47 // pred_check
        %p313 = pneg %p230
      $region54: #{upsample_layer_forward.1} parent=47 // pred_check_branch
        %315 = sbr.rel (%p313) target = $region56
      $region55: #{upsample_layer_forward.1} parent=47 // pred_region
        %p316 = scmp.lt.s32.totalorder %s16, 1
        %s317 = scalar_select %p316, %s16, 1
        %s318 = smul.addr %s317, 8
        %s319 = smul.addr %s318, 4
        %s320 = scalar_lea.vmem %s9, %s319
      $region56: #{upsample_layer_forward.1} parent=47 // pred_fallthru
        _
    $region48: #{upsample_layer_forward.1} parent=5 // pred_fallthru
      _
    %p321 = scmp.le.s32.totalorder 1, %s16
    %p322 = scmp.lt.s32.totalorder %s16, 3
    %p323 = pnand %p321, %p322
    %p324 = pneg %p323
    // Predicated region
    $region57: #{upsample_layer_forward.1} parent=5 // pred_check
      _
    $region58: #{upsample_layer_forward.1} parent=5 // pred_check_branch
      %326 = sbr.rel (%p323) target = $region60
    $region59: #{upsample_layer_forward.1} parent=5 // pred_region
      %s327 = ssub.s32 %s16, 1
      %p328 = scmp.lt.s32.totalorder %s21, 1
      %s329 = scalar_select %p328, %s21, 1
      %s330 = smul.addr %s329, 3
      %s331 = smul.addr %s330, 4
      %s332 = scalar_lea.vmem %s0, %s331
      %p333 = pneg %p42
      %p334 = pneg %p39
      %p335 = pneg %p63
      %p336 = pneg %p60
      %p337 = pneg %p84
      %p338 = pneg %p81
      %p339 = pneg %p105
      %p340 = pneg %p102
      %p341 = pneg %p126
      %p342 = pneg %p123
      %p343 = pneg %p147
      %p344 = pneg %p144
      %p345 = pneg %p168
      %p346 = pneg %p165
      %p347 = pneg %p189
      %p348 = pneg %p186
      %p349 = pneg %p210
      %p350 = pneg %p207
      %p351 = scmp.lt.s32.totalorder %s21, 1
      %s352 = scalar_select %p351, %s21, 1
      %s353 = smul.addr %s352, 8
      %s354 = smul.addr %s353, 4
      %s355 = scalar_lea.vmem %s9, %s354
      %p356 = pneg %p236
      %p357 = pneg %p233
      %p358 = pneg %p262
      %p359 = pneg %p259
      %p360 = scmp.lt.s32.totalorder %s21, 1
      %s361 = scalar_select %p360, %s21, 1
      %s362 = smul.addr %s361, 8
      %s363 = smul.addr %s362, 8
      %s364 = scalar_lea.vmem %s10, %s363
      %p365 = scmp.lt.s32.totalorder %s21, 1
      %s366 = scalar_select %p365, %s21, 1
      %s367 = smul.addr %s366, 3
      %s368 = smul.addr %s367, 4
      %s369 = scalar_lea.vmem %s0, %s368
      %p370 = scmp.lt.s32.totalorder %s21, 1
      %s371 = scalar_select %p370, %s21, 1
      %s372 = smul.addr %s371, 8
      %s373 = smul.addr %s372, 4
      %s374 = scalar_lea.vmem %s9, %s373
      %p375 = scmp.lt.s32.totalorder %s21, 1
      %s376 = scalar_select %p375, %s21, 1
      %s377 = smul.addr %s376, 8
      %s378 = smul.addr %s377, 8
      %s379 = scalar_lea.vmem %s10, %s378
      %v380 = vld [vmem:[%s8] sm:$0x7]
      %v381 = vld [vmem:[%s369] sm:$0xff]
      %v382 = vld [vmem:[%s369 + $0x8] sm:$0xf]
      %v383 = vld [vmem:[%s1] sm:$0xff]
      %v384 = vld [vmem:[%s2] sm:$0xff]
      %v385 = vld [vmem:[%s2 + $0x8] sm:$0xff]
      %vm386 = vcmask 150528
      %387 = vst.msk [vmem:[#allocation2] sm:$0xf] %vm386, 0.0
      %390 = vst [vmem:[#allocation1] ss:$2 sm:$0xff] %v381
      %s391 = scalar_lea.vmem [#allocation1], 16
      %392 = vst [vmem:[%s391] ss:$2 sm:$0xff] %v382
      %v393 = vld.sshfl [vmem:[#allocation1] sm:$0xff pattern:$0x75316420]
      %v394 = vld.sshfl [vmem:[#allocation1 + $0x8] sm:$0xff pattern:$0x75316420]
      %v395 = vld.sshfl [vmem:[#allocation1 + $0x10] sm:$0xff pattern:$0x75316420]
      %396 = vrot.lane.b32.xlu0 %v393, 19
      %v397 = vpop.permute.xlu0 %396
      %398 = vrot.lane.b32.xlu0 %v394, 19
      %v399 = vpop.permute.xlu0 %398
      %400 = vrot.lane.b32.xlu0 %v395, 19
      %v401 = vpop.permute.xlu0 %400
      %vm402 = vcmask 154624
      %v403 = vsel %vm402, %v397, %v399
      %v404 = vsel %vm402, %v399, %v401
      %vm408 = vcmask 1043608
      %409 = vst.msk [vmem:[#allocation2] sm:$0xf] %vm408, %v397
      %410 = vst [vmem:[#allocation2 + $0x8] sm:$0xf] %v403
      %vm411 = vcmask 707584
      %412 = vst.msk [vmem:[#allocation2 + $0x10] sm:$0xf] %vm411, %v404
      %vm413 = vcmask 863928
      %414 = vst.msk [vmem:[#allocation2 + $0x10] sm:$0xf] %vm413, 0.0
      %v415 = vld [vmem:[#allocation2] sm:$0xf]
      %v416 = vld [vmem:[#allocation2 + $0x8] sm:$0xf]
      %v417 = vld [vmem:[#allocation2 + $0x10] sm:$0xf]
      %418 = vst [vmem:[#allocation3] sm:$0xf] %v415
      %419 = vst [vmem:[#allocation3 + $0x8] sm:$0xf] %v416
      %vm420 = vcmask 551936
      %421 = vst.msk [vmem:[#allocation3 + $0x10] sm:$0xf] %vm420, %v417
      %v422 = vld [vmem:[#allocation2] sm:$0xf]
      %v423 = vld [vmem:[#allocation2 + $0x8] sm:$0xf]
      %v424 = vld [vmem:[#allocation2 + $0x10] sm:$0xf]
      %v428 = vrot.slane %v422, 4
      %v429 = vrot.slane %v423, 4
      %v430 = vrot.slane %v424, 4
      %431 = vrot.lane.b32.xlu0 %v428, 127
      %v432 = vpop.permute.xlu0 %431
      %433 = vrot.lane.b32.xlu0 %v429, 127
      %v434 = vpop.permute.xlu0 %433
      %435 = vrot.lane.b32.xlu0 %v430, 127
      %v436 = vpop.permute.xlu0 %435
      %vm437 = vcmask 1039360
      %v438 = vsel %vm437, %v432, %v434
      %v439 = vsel %vm437, %v434, %v436
      %443 = vst [vmem:[#allocation3] sm:$0xf0] %v438
      %444 = vst [vmem:[#allocation3 + $0x8] sm:$0xf0] %v439
      %vm445 = vcmask 556036
      %446 = vst.msk [vmem:[#allocation3 + $0x10] sm:$0xf0] %vm445, %v436
      %v447 = vld [vmem:[#allocation2] sm:$0xf]
      %v448 = vld [vmem:[#allocation2 + $0x8] sm:$0xf]
      %v449 = vld [vmem:[#allocation2 + $0x10] sm:$0xf]
      %453 = vrot.lane.b32.xlu0 %v447, 126
      %v454 = vpop.permute.xlu0 %453
      %455 = vrot.lane.b32.xlu0 %v448, 126
      %v456 = vpop.permute.xlu0 %455
      %457 = vrot.lane.b32.xlu0 %v449, 126
      %v458 = vpop.permute.xlu0 %457
      %vm459 = vcmask 1031168
      %v460 = vsel %vm459, %v454, %v456
      %v461 = vsel %vm459, %v456, %v458
      %465 = vst [vmem:[#allocation3 + $0x18] sm:$0xf] %v460
      %466 = vst [vmem:[#allocation3 + $0x20] sm:$0xf] %v461
      %467 = vst.msk [vmem:[#allocation3 + $0x28] sm:$0xf] %vm420, %v458
      %v468 = vld [vmem:[#allocation2] sm:$0xf]
      %v469 = vld [vmem:[#allocation2 + $0x8] sm:$0xf]
      %v470 = vld [vmem:[#allocation2 + $0x10] sm:$0xf]
      %v474 = vrot.slane %v468, 4
      %v475 = vrot.slane %v469, 4
      %v476 = vrot.slane %v470, 4
      %477 = vrot.lane.b32.xlu0 %v474, 110
      %v478 = vpop.permute.xlu0 %477
      %479 = vrot.lane.b32.xlu0 %v475, 110
      %v480 = vpop.permute.xlu0 %479
      %481 = vrot.lane.b32.xlu0 %v476, 110
      %v482 = vpop.permute.xlu0 %481
      %vm483 = vcmask 900096
      %v484 = vsel %vm483, %v478, %v480
      %v485 = vsel %vm483, %v480, %v482
      %489 = vst [vmem:[#allocation3 + $0x18] sm:$0xf0] %v484
      %490 = vst [vmem:[#allocation3 + $0x20] sm:$0xf0] %v485
      %491 = vst.msk [vmem:[#allocation3 + $0x28] sm:$0xf0] %vm445, %v482
      %v492 = vld [vmem:[#allocation2] sm:$0xf]
      %v493 = vld [vmem:[#allocation2 + $0x8] sm:$0xf]
      %v494 = vld [vmem:[#allocation2 + $0x10] sm:$0xf]
      %498 = vrot.lane.b32.xlu0 %v492, 109
      %v499 = vpop.permute.xlu0 %498
      %500 = vrot.lane.b32.xlu0 %v493, 109
      %v501 = vpop.permute.xlu0 %500
      %502 = vrot.lane.b32.xlu0 %v494, 109
      %v503 = vpop.permute.xlu0 %502
      %vm504 = vcmask 891904
      %v505 = vsel %vm504, %v499, %v501
      %v506 = vsel %vm504, %v501, %v503
      %510 = vst [vmem:[#allocation3 + $0x30] sm:$0xf] %v505
      %511 = vst [vmem:[#allocation3 + $0x38] sm:$0xf] %v506
      %512 = vst.msk [vmem:[#allocation3 + $0x40] sm:$0xf] %vm420, %v503
      %v513 = vld [vmem:[#allocation2] sm:$0xf]
      %v514 = vld [vmem:[#allocation2 + $0x8] sm:$0xf]
      %v515 = vld [vmem:[#allocation2 + $0x10] sm:$0xf]
      %v519 = vrot.slane %v513, 4
      %v520 = vrot.slane %v514, 4
      %v521 = vrot.slane %v515, 4
      %522 = vrot.lane.b32.xlu0 %v519, 108
      %v523 = vpop.permute.xlu0 %522
      %524 = vrot.lane.b32.xlu0 %v520, 108
      %v525 = vpop.permute.xlu0 %524
      %526 = vrot.lane.b32.xlu0 %v521, 108
      %v527 = vpop.permute.xlu0 %526
      %vm528 = vcmask 883712
      %v529 = vsel %vm528, %v523, %v525
      %v530 = vsel %vm528, %v525, %v527
      %534 = vst [vmem:[#allocation3 + $0x30] sm:$0xf0] %v529
      %535 = vst [vmem:[#allocation3 + $0x38] sm:$0xf0] %v530
      %536 = vst.msk [vmem:[#allocation3 + $0x40] sm:$0xf0] %vm445, %v527
      %v537 = vld [vmem:[#allocation2] sm:$0xf]
      %v538 = vld [vmem:[#allocation2 + $0x8] sm:$0xf]
      %v539 = vld [vmem:[#allocation2 + $0x10] sm:$0xf]
      %543 = vrot.lane.b32.xlu0 %v537, 92
      %v544 = vpop.permute.xlu0 %543
      %545 = vrot.lane.b32.xlu0 %v538, 92
      %v546 = vpop.permute.xlu0 %545
      %547 = vrot.lane.b32.xlu0 %v539, 92
      %v548 = vpop.permute.xlu0 %547
      %vm549 = vcmask 752640
      %v550 = vsel %vm549, %v544, %v546
      %v551 = vsel %vm549, %v546, %v548
      %555 = vst [vmem:[#allocation3 + $0x48] sm:$0xf] %v550
      %556 = vst [vmem:[#allocation3 + $0x50] sm:$0xf] %v551
      %557 = vst.msk [vmem:[#allocation3 + $0x58] sm:$0xf] %vm420, %v548
      %v558 = vld [vmem:[#allocation2] sm:$0xf]
      %v559 = vld [vmem:[#allocation2 + $0x8] sm:$0xf]
      %v560 = vld [vmem:[#allocation2 + $0x10] sm:$0xf]
      %v564 = vrot.slane %v558, 4
      %v565 = vrot.slane %v559, 4
      %v566 = vrot.slane %v560, 4
      %567 = vrot.lane.b32.xlu0 %v564, 91
      %v568 = vpop.permute.xlu0 %567
      %569 = vrot.lane.b32.xlu0 %v565, 91
      %v570 = vpop.permute.xlu0 %569
      %571 = vrot.lane.b32.xlu0 %v566, 91
      %v572 = vpop.permute.xlu0 %571
      %vm573 = vcmask 744448
      %v574 = vsel %vm573, %v568, %v570
      %v575 = vsel %vm573, %v570, %v572
      %579 = vst [vmem:[#allocation3 + $0x48] sm:$0xf0] %v574
      %580 = vst [vmem:[#allocation3 + $0x50] sm:$0xf0] %v575
      %581 = vst.msk [vmem:[#allocation3 + $0x58] sm:$0xf0] %vm445, %v572
      %v582 = vld [vmem:[#allocation2] sm:$0xf]
      %v583 = vld [vmem:[#allocation2 + $0x8] sm:$0xf]
      %v584 = vld [vmem:[#allocation2 + $0x10] sm:$0xf]
      %588 = vrot.lane.b32.xlu0 %v582, 90
      %v589 = vpop.permute.xlu0 %588
      %590 = vrot.lane.b32.xlu0 %v583, 90
      %v591 = vpop.permute.xlu0 %590
      %592 = vrot.lane.b32.xlu0 %v584, 90
      %v593 = vpop.permute.xlu0 %592
      %vm594 = vcmask 736256
      %v595 = vsel %vm594, %v589, %v591
      %v596 = vsel %vm594, %v591, %v593
      %600 = vst [vmem:[#allocation3 + $0x60] sm:$0xf] %v595
      %601 = vst [vmem:[#allocation3 + $0x68] sm:$0xf] %v596
      %602 = vst.msk [vmem:[#allocation3 + $0x70] sm:$0xf] %vm420, %v593
      %v603 = vld [vmem:[#allocation3] sm:$0xff]
      %v604 = vld [vmem:[#allocation3 + $0x8] sm:$0xff]
      %v605 = vld [vmem:[#allocation3 + $0x10] sm:$0xff]
      %v606 = vld [vmem:[#allocation3 + $0x18] sm:$0xff]
      %v607 = vld [vmem:[#allocation3 + $0x20] sm:$0xff]
      %v608 = vld [vmem:[#allocation3 + $0x28] sm:$0xff]
      %v609 = vld [vmem:[#allocation3 + $0x30] sm:$0xff]
      %v610 = vld [vmem:[#allocation3 + $0x38] sm:$0xff]
      %v611 = vld [vmem:[#allocation3 + $0x40] sm:$0xff]
      %v612 = vld [vmem:[#allocation3 + $0x48] sm:$0xff]
      %v613 = vld [vmem:[#allocation3 + $0x50] sm:$0xff]
      %v614 = vld [vmem:[#allocation3 + $0x58] sm:$0xff]
      %v615 = vld [vmem:[#allocation3 + $0x60] sm:$0xf]
      %v616 = vld [vmem:[#allocation3 + $0x68] sm:$0xf]
      %v617 = vld [vmem:[#allocation3 + $0x70] sm:$0xf]
      %vm618 = vcmask 293888
      %v620 = vsel %vm618, %v383, 0
      %vm622 = vcmask 1043456
      %v624 = vsel %vm622, %v615, 0
      %v627 = vsel %vm622, %v616, 0
      %v630 = vsel %vm622, %v617, 0
      %632 = vmatpush.msra.mxu0 0.0
      %633 = vmatpush.msra.mxu0 0.0
      %634 = vmatpush.msra.mxu0 0.0
      %635 = vmatpush.msra.mxu0 0.0
      %636 = vmatpush.msra.mxu0 0.0
      %637 = vmatpush.msra.mxu0 0.0
      %638 = vmatpush.msra.mxu0 0.0
      %639 = vmatpush.msra.mxu0 0.0
      %640 = vmatpush.msra.mxu0 0.0
      %641 = vmatpush.msra.mxu0 0.0
      %642 = vmatpush.msra.mxu0 0.0
      %643 = vmatpush.msra.mxu0 %v624
      %644 = vmatpush.msra.mxu0 %v612
      %645 = vmatpush.msra.mxu0 %v609
      %646 = vmatpush.msra.mxu0 %v606
      %647 = vmatpush.msra.mxu0 %v603
      %648 = vmatmul.f32.gmra.mxu0 %v620
      %v649 = vpop.f32.mrf.mxu0
      %v650 = vadd.f32 0.0, %v649
      %651 = vdwg.mxu0
      %652 = vmatpush.msra.mxu0 0.0
      %653 = vmatpush.msra.mxu0 0.0
      %654 = vmatpush.msra.mxu0 0.0
      %655 = vmatpush.msra.mxu0 0.0
      %656 = vmatpush.msra.mxu0 0.0
      %657 = vmatpush.msra.mxu0 0.0
      %658 = vmatpush.msra.mxu0 0.0
      %659 = vmatpush.msra.mxu0 0.0
      %660 = vmatpush.msra.mxu0 0.0
      %661 = vmatpush.msra.mxu0 0.0
      %662 = vmatpush.msra.mxu0 0.0
      %663 = vmatpush.msra.mxu0 %v627
      %664 = vmatpush.msra.mxu0 %v613
      %665 = vmatpush.msra.mxu0 %v610
      %666 = vmatpush.msra.mxu0 %v607
      %667 = vmatpush.msra.mxu0 %v604
      %668 = vmatmul.f32.gmra.mxu0 %v620
      %v669 = vpop.f32.mrf.mxu0
      %v670 = vadd.f32 0.0, %v669
      %671 = vdwg.mxu0
      %672 = vmatpush.msra.mxu0 0.0
      %673 = vmatpush.msra.mxu0 0.0
      %674 = vmatpush.msra.mxu0 0.0
      %675 = vmatpush.msra.mxu0 0.0
      %676 = vmatpush.msra.mxu0 0.0
      %677 = vmatpush.msra.mxu0 0.0
      %678 = vmatpush.msra.mxu0 0.0
      %679 = vmatpush.msra.mxu0 0.0
      %680 = vmatpush.msra.mxu0 0.0
      %681 = vmatpush.msra.mxu0 0.0
      %682 = vmatpush.msra.mxu0 0.0
      %683 = vmatpush.msra.mxu0 %v630
      %684 = vmatpush.msra.mxu0 %v614
      %685 = vmatpush.msra.mxu0 %v611
      %686 = vmatpush.msra.mxu0 %v608
      %687 = vmatpush.msra.mxu0 %v605
      %688 = vmatmul.f32.gmra.mxu0 %v620
      %v689 = vpop.f32.mrf.mxu0
      %v690 = vadd.f32 0.0, %v689
      %691 = vdwg.mxu0
      %693 = vset.pattern.permute.xlu0 0
      %694 = vperm.xlu0 %693, %v384
      %v695 = vpop.permute.xlu0 %694
      %v697 = vmul.f32 %v650, %v695
      %v698 = vmul.f32 %v670, %v695
      %v699 = vmul.f32 %v690, %v695
      %701 = vset.pattern.permute.xlu0 0
      %702 = vperm.xlu0 %701, %v385
      %v703 = vpop.permute.xlu0 %702
      %v705 = vadd.f32 %v697, %v703
      %v706 = vadd.f32 %v698, %v703
      %v707 = vadd.f32 %v699, %v703
      %v708 = vmax.f32 %v705, 0.0
      %v709 = vmax.f32 %v706, 0.0
      %v710 = vmax.f32 %v707, 0.0
      %v712 = vperm.slane %v380, 0
      %v713 = vperm.slane %v380, 1
      %v714 = vperm.slane %v380, 2
      %v718 = vmul.f32 %v708, %v712
      %v719 = vmul.f32 %v709, %v713
      %v720 = vmul.f32 %v710, %v714
      %v721 = vld [vmem:[%s3] sm:$0xff]
      %v722 = vld [vmem:[%s4] sm:$0xff]
      %v723 = vld [vmem:[%s4 + $0x8] sm:$0xff]
      %724 = vst.msk [vmem:[#allocation2] sm:$0xff] %vm402, 0.0
      %728 = vrot.lane.b32.xlu0 %v718, 19
      %v729 = vpop.permute.xlu0 %728
      %730 = vrot.lane.b32.xlu0 %v719, 19
      %v731 = vpop.permute.xlu0 %730
      %732 = vrot.lane.b32.xlu0 %v720, 19
      %v733 = vpop.permute.xlu0 %732
      %v734 = vsel %vm402, %v729, %v731
      %v735 = vsel %vm402, %v731, %v733
      %vm739 = vcmask 1047704
      %740 = vst.msk [vmem:[#allocation2] sm:$0xff] %vm739, %v729
      %741 = vst [vmem:[#allocation2 + $0x8] sm:$0xff] %v734
      %vm742 = vcmask 711680
      %743 = vst.msk [vmem:[#allocation2 + $0x10] sm:$0xff] %vm742, %v735
      %vm744 = vcmask 868024
      %745 = vst.msk [vmem:[#allocation2 + $0x10] sm:$0xff] %vm744, 0.0
      %v746 = vld [vmem:[#allocation2] sm:$0xff]
      %v747 = vld [vmem:[#allocation2 + $0x8] sm:$0xff]
      %v748 = vld [vmem:[#allocation2 + $0x10] sm:$0xff]
      %749 = vst [vmem:[#allocation3] sm:$0xff] %v746
      %750 = vst [vmem:[#allocation3 + $0x8] sm:$0xff] %v747
      %vm751 = vcmask 556032
      %752 = vst.msk [vmem:[#allocation3 + $0x10] sm:$0xff] %vm751, %v748
      %v753 = vld [vmem:[#allocation2] sm:$0xff]
      %v754 = vld [vmem:[#allocation2 + $0x8] sm:$0xff]
      %v755 = vld [vmem:[#allocation2 + $0x10] sm:$0xff]
      %759 = vrot.lane.b32.xlu0 %v753, 127
      %v760 = vpop.permute.xlu0 %759
      %761 = vrot.lane.b32.xlu0 %v754, 127
      %v762 = vpop.permute.xlu0 %761
      %763 = vrot.lane.b32.xlu0 %v755, 127
      %v764 = vpop.permute.xlu0 %763
      %v765 = vsel %vm437, %v760, %v762
      %v766 = vsel %vm437, %v762, %v764
      %770 = vst [vmem:[#allocation3 + $0x18] sm:$0xff] %v765
      %771 = vst [vmem:[#allocation3 + $0x20] sm:$0xff] %v766
      %772 = vst.msk [vmem:[#allocation3 + $0x28] sm:$0xff] %vm751, %v764
      %v773 = vld [vmem:[#allocation2] sm:$0xff]
      %v774 = vld [vmem:[#allocation2 + $0x8] sm:$0xff]
      %v775 = vld [vmem:[#allocation2 + $0x10] sm:$0xff]
      %779 = vrot.lane.b32.xlu0 %v773, 126
      %v780 = vpop.permute.xlu0 %779
      %781 = vrot.lane.b32.xlu0 %v774, 126
      %v782 = vpop.permute.xlu0 %781
      %783 = vrot.lane.b32.xlu0 %v775, 126
      %v784 = vpop.permute.xlu0 %783
      %v785 = vsel %vm459, %v780, %v782
      %v786 = vsel %vm459, %v782, %v784
      %790 = vst [vmem:[#allocation3 + $0x30] sm:$0xff] %v785
      %791 = vst [vmem:[#allocation3 + $0x38] sm:$0xff] %v786
      %792 = vst.msk [vmem:[#allocation3 + $0x40] sm:$0xff] %vm751, %v784
      %v793 = vld [vmem:[#allocation2] sm:$0xff]
      %v794 = vld [vmem:[#allocation2 + $0x8] sm:$0xff]
      %v795 = vld [vmem:[#allocation2 + $0x10] sm:$0xff]
      %799 = vrot.lane.b32.xlu0 %v793, 110
      %v800 = vpop.permute.xlu0 %799
      %801 = vrot.lane.b32.xlu0 %v794, 110
      %v802 = vpop.permute.xlu0 %801
      %803 = vrot.lane.b32.xlu0 %v795, 110
      %v804 = vpop.permute.xlu0 %803
      %v805 = vsel %vm483, %v800, %v802
      %v806 = vsel %vm483, %v802, %v804
      %810 = vst [vmem:[#allocation3 + $0x48] sm:$0xff] %v805
      %811 = vst [vmem:[#allocation3 + $0x50] sm:$0xff] %v806
      %812 = vst.msk [vmem:[#allocation3 + $0x58] sm:$0xff] %vm751, %v804
      %v813 = vld [vmem:[#allocation2] sm:$0xff]
      %v814 = vld [vmem:[#allocation2 + $0x8] sm:$0xff]
      %v815 = vld [vmem:[#allocation2 + $0x10] sm:$0xff]
      %819 = vrot.lane.b32.xlu0 %v813, 109
      %v820 = vpop.permute.xlu0 %819
      %821 = vrot.lane.b32.xlu0 %v814, 109
      %v822 = vpop.permute.xlu0 %821
      %823 = vrot.lane.b32.xlu0 %v815, 109
      %v824 = vpop.permute.xlu0 %823
      %v825 = vsel %vm504, %v820, %v822
      %v826 = vsel %vm504, %v822, %v824
      %830 = vst [vmem:[#allocation3 + $0x60] sm:$0xff] %v825
      %831 = vst [vmem:[#allocation3 + $0x68] sm:$0xff] %v826
      %832 = vst.msk [vmem:[#allocation3 + $0x70] sm:$0xff] %vm751, %v824
      %v833 = vld [vmem:[#allocation2] sm:$0xff]
      %v834 = vld [vmem:[#allocation2 + $0x8] sm:$0xff]
      %v835 = vld [vmem:[#allocation2 + $0x10] sm:$0xff]
      %839 = vrot.lane.b32.xlu0 %v833, 108
      %v840 = vpop.permute.xlu0 %839
      %841 = vrot.lane.b32.xlu0 %v834, 108
      %v842 = vpop.permute.xlu0 %841
      %843 = vrot.lane.b32.xlu0 %v835, 108
      %v844 = vpop.permute.xlu0 %843
      %v845 = vsel %vm528, %v840, %v842
      %v846 = vsel %vm528, %v842, %v844
      %850 = vst [vmem:[#allocation3 + $0x78] sm:$0xff] %v845
      %851 = vst [vmem:[#allocation3 + $0x80] sm:$0xff] %v846
      %852 = vst.msk [vmem:[#allocation3 + $0x88] sm:$0xff] %vm751, %v844
      %v853 = vld [vmem:[#allocation2] sm:$0xff]
      %v854 = vld [vmem:[#allocation2 + $0x8] sm:$0xff]
      %v855 = vld [vmem:[#allocation2 + $0x10] sm:$0xff]
      %859 = vrot.lane.b32.xlu0 %v853, 92
      %v860 = vpop.permute.xlu0 %859
      %861 = vrot.lane.b32.xlu0 %v854, 92
      %v862 = vpop.permute.xlu0 %861
      %863 = vrot.lane.b32.xlu0 %v855, 92
      %v864 = vpop.permute.xlu0 %863
      %v865 = vsel %vm549, %v860, %v862
      %v866 = vsel %vm549, %v862, %v864
      %870 = vst [vmem:[#allocation3 + $0x90] sm:$0xff] %v865
      %871 = vst [vmem:[#allocation3 + $0x98] sm:$0xff] %v866
      %872 = vst.msk [vmem:[#allocation3 + $0xa0] sm:$0xff] %vm751, %v864
      %v873 = vld [vmem:[#allocation2] sm:$0xff]
      %v874 = vld [vmem:[#allocation2 + $0x8] sm:$0xff]
      %v875 = vld [vmem:[#allocation2 + $0x10] sm:$0xff]
      %879 = vrot.lane.b32.xlu0 %v873, 91
      %v880 = vpop.permute.xlu0 %879
      %881 = vrot.lane.b32.xlu0 %v874, 91
      %v882 = vpop.permute.xlu0 %881
      %883 = vrot.lane.b32.xlu0 %v875, 91
      %v884 = vpop.permute.xlu0 %883
      %v885 = vsel %vm573, %v880, %v882
      %v886 = vsel %vm573, %v882, %v884
      %890 = vst [vmem:[#allocation3 + $0xa8] sm:$0xff] %v885
      %891 = vst [vmem:[#allocation3 + $0xb0] sm:$0xff] %v886
      %892 = vst.msk [vmem:[#allocation3 + $0xb8] sm:$0xff] %vm751, %v884
      %v893 = vld [vmem:[#allocation2] sm:$0xff]
      %v894 = vld [vmem:[#allocation2 + $0x8] sm:$0xff]
      %v895 = vld [vmem:[#allocation2 + $0x10] sm:$0xff]
      %899 = vrot.lane.b32.xlu0 %v893, 90
      %v900 = vpop.permute.xlu0 %899
      %901 = vrot.lane.b32.xlu0 %v894, 90
      %v902 = vpop.permute.xlu0 %901
      %903 = vrot.lane.b32.xlu0 %v895, 90
      %v904 = vpop.permute.xlu0 %903
      %v905 = vsel %vm594, %v900, %v902
      %v906 = vsel %vm594, %v902, %v904
      %910 = vst [vmem:[#allocation3 + $0xc0] sm:$0xff] %v905
      %911 = vst [vmem:[#allocation3 + $0xc8] sm:$0xff] %v906
      %912 = vst.msk [vmem:[#allocation3 + $0xd0] sm:$0xff] %vm751, %v904
      %v913 = vld [vmem:[#allocation3] sm:$0xff]
      %v914 = vld [vmem:[#allocation3 + $0x8] sm:$0xff]
      %v915 = vld [vmem:[#allocation3 + $0x10] sm:$0xff]
      %v916 = vld [vmem:[#allocation3 + $0x18] sm:$0xff]
      %v917 = vld [vmem:[#allocation3 + $0x20] sm:$0xff]
      %v918 = vld [vmem:[#allocation3 + $0x28] sm:$0xff]
      %v919 = vld [vmem:[#allocation3 + $0x30] sm:$0xff]
      %v920 = vld [vmem:[#allocation3 + $0x38] sm:$0xff]
      %v921 = vld [vmem:[#allocation3 + $0x40] sm:$0xff]
      %v922 = vld [vmem:[#allocation3 + $0x48] sm:$0xff]
      %v923 = vld [vmem:[#allocation3 + $0x50] sm:$0xff]
      %v924 = vld [vmem:[#allocation3 + $0x58] sm:$0xff]
      %v925 = vld [vmem:[#allocation3 + $0x60] sm:$0xff]
      %v926 = vld [vmem:[#allocation3 + $0x68] sm:$0xff]
      %v927 = vld [vmem:[#allocation3 + $0x70] sm:$0xff]
      %v928 = vld [vmem:[#allocation3 + $0x78] sm:$0xff]
      %v929 = vld [vmem:[#allocation3 + $0x80] sm:$0xff]
      %v930 = vld [vmem:[#allocation3 + $0x88] sm:$0xff]
      %v931 = vld [vmem:[#allocation3 + $0x90] sm:$0xff]
      %v932 = vld [vmem:[#allocation3 + $0x98] sm:$0xff]
      %v933 = vld [vmem:[#allocation3 + $0xa0] sm:$0xff]
      %v934 = vld [vmem:[#allocation3 + $0xa8] sm:$0xff]
      %v935 = vld [vmem:[#allocation3 + $0xb0] sm:$0xff]
      %v936 = vld [vmem:[#allocation3 + $0xb8] sm:$0xff]
      %v937 = vld [vmem:[#allocation3 + $0xc0] sm:$0xff]
      %v938 = vld [vmem:[#allocation3 + $0xc8] sm:$0xff]
      %v939 = vld [vmem:[#allocation3 + $0xd0] sm:$0xff]
      %vm940 = vcmask 588800
      %v942 = vsel %vm940, %v721, 0
      %944 = vmatpush.msra.mxu0 0.0
      %945 = vmatpush.msra.mxu0 0.0
      %946 = vmatpush.msra.mxu0 0.0
      %947 = vmatpush.msra.mxu0 0.0
      %948 = vmatpush.msra.mxu0 0.0
      %949 = vmatpush.msra.mxu0 0.0
      %950 = vmatpush.msra.mxu0 0.0
      %951 = vmatpush.msra.mxu0 %v937
      %952 = vmatpush.msra.mxu0 %v934
      %953 = vmatpush.msra.mxu0 %v931
      %954 = vmatpush.msra.mxu0 %v928
      %955 = vmatpush.msra.mxu0 %v925
      %956 = vmatpush.msra.mxu0 %v922
      %957 = vmatpush.msra.mxu0 %v919
      %958 = vmatpush.msra.mxu0 %v916
      %959 = vmatpush.msra.mxu0 %v913
      %960 = vmatmul.f32.gmra.mxu0 %v942
      %v961 = vpop.f32.mrf.mxu0
      %v962 = vadd.f32 0.0, %v961
      %963 = vdwg.mxu0
      %964 = vmatpush.msra.mxu0 0.0
      %965 = vmatpush.msra.mxu0 0.0
      %966 = vmatpush.msra.mxu0 0.0
      %967 = vmatpush.msra.mxu0 0.0
      %968 = vmatpush.msra.mxu0 0.0
      %969 = vmatpush.msra.mxu0 0.0
      %970 = vmatpush.msra.mxu0 0.0
      %971 = vmatpush.msra.mxu0 %v938
      %972 = vmatpush.msra.mxu0 %v935
      %973 = vmatpush.msra.mxu0 %v932
      %974 = vmatpush.msra.mxu0 %v929
      %975 = vmatpush.msra.mxu0 %v926
      %976 = vmatpush.msra.mxu0 %v923
      %977 = vmatpush.msra.mxu0 %v920
      %978 = vmatpush.msra.mxu0 %v917
      %979 = vmatpush.msra.mxu0 %v914
      %980 = vmatmul.f32.gmra.mxu0 %v942
      %v981 = vpop.f32.mrf.mxu0
      %v982 = vadd.f32 0.0, %v981
      %983 = vdwg.mxu0
      %984 = vmatpush.msra.mxu0 0.0
      %985 = vmatpush.msra.mxu0 0.0
      %986 = vmatpush.msra.mxu0 0.0
      %987 = vmatpush.msra.mxu0 0.0
      %988 = vmatpush.msra.mxu0 0.0
      %989 = vmatpush.msra.mxu0 0.0
      %990 = vmatpush.msra.mxu0 0.0
      %991 = vmatpush.msra.mxu0 %v939
      %992 = vmatpush.msra.mxu0 %v936
      %993 = vmatpush.msra.mxu0 %v933
      %994 = vmatpush.msra.mxu0 %v930
      %995 = vmatpush.msra.mxu0 %v927
      %996 = vmatpush.msra.mxu0 %v924
      %997 = vmatpush.msra.mxu0 %v921
      %998 = vmatpush.msra.mxu0 %v918
      %999 = vmatpush.msra.mxu0 %v915
      %1000 = vmatmul.f32.gmra.mxu0 %v942
      %v1001 = vpop.f32.mrf.mxu0
      %v1002 = vadd.f32 0.0, %v1001
      %1003 = vdwg.mxu0
      %1005 = vset.pattern.permute.xlu0 0
      %1006 = vperm.xlu0 %1005, %v722
      %v1007 = vpop.permute.xlu0 %1006
      %v1009 = vmul.f32 %v962, %v1007
      %v1010 = vmul.f32 %v982, %v1007
      %v1011 = vmul.f32 %v1002, %v1007
      %1013 = vset.pattern.permute.xlu0 0
      %1014 = vperm.xlu0 %1013, %v723
      %v1015 = vpop.permute.xlu0 %1014
      %v1017 = vadd.f32 %v1009, %v1015
      %v1018 = vadd.f32 %v1010, %v1015
      %v1019 = vadd.f32 %v1011, %v1015
      %v1020 = vmax.f32 %v1017, 0.0
      %v1021 = vmax.f32 %v1018, 0.0
      %v1022 = vmax.f32 %v1019, 0.0
      %v1023 = vmul.f32 %v1020, %v712
      %v1024 = vmul.f32 %v1021, %v713
      %v1025 = vmul.f32 %v1022, %v714
      %1029 = vrot.lane.b32.xlu0 %v1023, 19
      %v1030 = vpop.permute.xlu0 %1029
      %1031 = vrot.lane.b32.xlu0 %v1024, 19
      %v1032 = vpop.permute.xlu0 %1031
      %1033 = vrot.lane.b32.xlu0 %v1025, 19
      %v1034 = vpop.permute.xlu0 %1033
      %v1035 = vsel %vm402, %v1030, %v1032
      %v1036 = vsel %vm402, %v1032, %v1034
      %1040 = vst.msk [vmem:[#allocation2] sm:$0xff] %vm739, %v1030
      %1041 = vst [vmem:[#allocation2 + $0x8] sm:$0xff] %v1035
      %1042 = vst.msk [vmem:[#allocation2 + $0x10] sm:$0xff] %vm742, %v1036
      %1043 = vst.msk [vmem:[#allocation2 + $0x10] sm:$0xff] %vm744, 0.0
      %v1044 = vld [vmem:[#allocation2] sm:$0xff]
      %v1045 = vld [vmem:[#allocation2 + $0x8] sm:$0xff]
      %v1046 = vld [vmem:[#allocation2 + $0x10] sm:$0xff]
      %1050 = vrot.lane.b32.xlu0 %v1044, 109
      %v1051 = vpop.permute.xlu0 %1050
      %1052 = vrot.lane.b32.xlu0 %v1045, 109
      %v1053 = vpop.permute.xlu0 %1052
      %1054 = vrot.lane.b32.xlu0 %v1046, 109
      %v1055 = vpop.permute.xlu0 %1054
      %v1056 = vsel %vm504, %v1051, %v1053
      %v1057 = vsel %vm504, %v1053, %v1055
      %1061 = vst [vmem:[#allocation3] sm:$0xff] %v1056
      %1062 = vst [vmem:[#allocation3 + $0x8] sm:$0xff] %v1057
      %1063 = vst.msk [vmem:[#allocation3 + $0x10] sm:$0xff] %vm751, %v1055
      %v1064 = vld [vmem:[#allocation2] sm:$0xff]
      %v1065 = vld [vmem:[#allocation2 + $0x8] sm:$0xff]
      %v1066 = vld [vmem:[#allocation2 + $0x10] sm:$0xff]
      %1070 = vrot.lane.b32.xlu0 %v1064, 108
      %v1071 = vpop.permute.xlu0 %1070
      %1072 = vrot.lane.b32.xlu0 %v1065, 108
      %v1073 = vpop.permute.xlu0 %1072
      %1074 = vrot.lane.b32.xlu0 %v1066, 108
      %v1075 = vpop.permute.xlu0 %1074
      %v1076 = vsel %vm528, %v1071, %v1073
      %v1077 = vsel %vm528, %v1073, %v1075
      %1081 = vst [vmem:[#allocation3 + $0x18] sm:$0xff] %v1076
      %1082 = vst [vmem:[#allocation3 + $0x20] sm:$0xff] %v1077
      %1083 = vst.msk [vmem:[#allocation3 + $0x28] sm:$0xff] %vm751, %v1075
      %v1084 = vld [vmem:[#allocation2] sm:$0xff]
      %v1085 = vld [vmem:[#allocation2 + $0x8] sm:$0xff]
      %v1086 = vld [vmem:[#allocation2 + $0x10] sm:$0xff]
      %1090 = vrot.lane.b32.xlu0 %v1084, 91
      %v1091 = vpop.permute.xlu0 %1090
      %1092 = vrot.lane.b32.xlu0 %v1085, 91
      %v1093 = vpop.permute.xlu0 %1092
      %1094 = vrot.lane.b32.xlu0 %v1086, 91
      %v1095 = vpop.permute.xlu0 %1094
      %v1096 = vsel %vm573, %v1091, %v1093
      %v1097 = vsel %vm573, %v1093, %v1095
      %1101 = vst [vmem:[#allocation3 + $0x30] sm:$0xff] %v1096
      %1102 = vst [vmem:[#allocation3 + $0x38] sm:$0xff] %v1097
      %1103 = vst.msk [vmem:[#allocation3 + $0x40] sm:$0xff] %vm751, %v1095
      %v1104 = vld [vmem:[#allocation2] sm:$0xff]
      %v1105 = vld [vmem:[#allocation2 + $0x8] sm:$0xff]
      %v1106 = vld [vmem:[#allocation2 + $0x10] sm:$0xff]
      %1110 = vrot.lane.b32.xlu0 %v1104, 90
      %v1111 = vpop.permute.xlu0 %1110
      %1112 = vrot.lane.b32.xlu0 %v1105, 90
      %v1113 = vpop.permute.xlu0 %1112
      %1114 = vrot.lane.b32.xlu0 %v1106, 90
      %v1115 = vpop.permute.xlu0 %1114
      %v1116 = vsel %vm594, %v1111, %v1113
      %v1117 = vsel %vm594, %v1113, %v1115
      %1121 = vst [vmem:[#allocation3 + $0x48] sm:$0xff] %v1116
      %1122 = vst [vmem:[#allocation3 + $0x50] sm:$0xff] %v1117
      %1123 = vst.msk [vmem:[#allocation3 + $0x58] sm:$0xff] %vm751, %v1115
      %v1124 = vld [vmem:[%s5] sm:$0xff]
      %v1125 = vld [vmem:[%s5 + $0x8] sm:$0xff]
      %v1126 = vld [vmem:[#allocation3] sm:$0xff]
      %v1127 = vld [vmem:[#allocation3 + $0x8] sm:$0xff]
      %v1128 = vld [vmem:[#allocation3 + $0x10] sm:$0xff]
      %v1129 = vld [vmem:[#allocation3 + $0x18] sm:$0xff]
      %v1130 = vld [vmem:[#allocation3 + $0x20] sm:$0xff]
      %v1131 = vld [vmem:[#allocation3 + $0x28] sm:$0xff]
      %v1132 = vld [vmem:[#allocation3 + $0x30] sm:$0xff]
      %v1133 = vld [vmem:[#allocation3 + $0x38] sm:$0xff]
      %v1134 = vld [vmem:[#allocation3 + $0x40] sm:$0xff]
      %v1135 = vld [vmem:[#allocation3 + $0x48] sm:$0xff]
      %v1136 = vld [vmem:[#allocation3 + $0x50] sm:$0xff]
      %v1137 = vld [vmem:[#allocation3 + $0x58] sm:$0xff]
      %vm1138 = vcmask 261120
      %v1140 = vsel %vm1138, %v1124, 0
      %v1143 = vsel %vm1138, %v1125, 0
      %1145 = vmatpush.msra.mxu0 0.0
      %1146 = vmatpush.msra.mxu0 0.0
      %1147 = vmatpush.msra.mxu0 0.0
      %1148 = vmatpush.msra.mxu0 0.0
      %1149 = vmatpush.msra.mxu0 0.0
      %1150 = vmatpush.msra.mxu0 0.0
      %1151 = vmatpush.msra.mxu0 0.0
      %1152 = vmatpush.msra.mxu0 0.0
      %1153 = vmatpush.msra.mxu0 0.0
      %1154 = vmatpush.msra.mxu0 0.0
      %1155 = vmatpush.msra.mxu0 0.0
      %1156 = vmatpush.msra.mxu0 0.0
      %1157 = vmatpush.msra.mxu0 %v1135
      %1158 = vmatpush.msra.mxu0 %v1132
      %1159 = vmatpush.msra.mxu0 %v1129
      %1160 = vmatpush.msra.mxu0 %v1126
      %1161 = vmatmul.f32.gmra.mxu0 %v1140
      %v1162 = vpop.f32.mrf.mxu0
      %v1163 = vadd.f32 0.0, %v1162
      %1164 = vmatmul.f32.gmra.mxu0 %v1143
      %v1165 = vpop.f32.mrf.mxu0
      %v1166 = vadd.f32 0.0, %v1165
      %1167 = vdwg.mxu0
      %1168 = vmatpush.msra.mxu0 0.0
      %1169 = vmatpush.msra.mxu0 0.0
      %1170 = vmatpush.msra.mxu0 0.0
      %1171 = vmatpush.msra.mxu0 0.0
      %1172 = vmatpush.msra.mxu0 0.0
      %1173 = vmatpush.msra.mxu0 0.0
      %1174 = vmatpush.msra.mxu0 0.0
      %1175 = vmatpush.msra.mxu0 0.0
      %1176 = vmatpush.msra.mxu0 0.0
      %1177 = vmatpush.msra.mxu0 0.0
      %1178 = vmatpush.msra.mxu0 0.0
      %1179 = vmatpush.msra.mxu0 0.0
      %1180 = vmatpush.msra.mxu0 %v1136
      %1181 = vmatpush.msra.mxu0 %v1133
      %1182 = vmatpush.msra.mxu0 %v1130
      %1183 = vmatpush.msra.mxu0 %v1127
      %1184 = vmatmul.f32.gmra.mxu0 %v1140
      %v1185 = vpop.f32.mrf.mxu0
      %v1186 = vadd.f32 0.0, %v1185
      %1187 = vmatmul.f32.gmra.mxu0 %v1143
      %v1188 = vpop.f32.mrf.mxu0
      %v1189 = vadd.f32 0.0, %v1188
      %1190 = vdwg.mxu0
      %1191 = vmatpush.msra.mxu0 0.0
      %1192 = vmatpush.msra.mxu0 0.0
      %1193 = vmatpush.msra.mxu0 0.0
      %1194 = vmatpush.msra.mxu0 0.0
      %1195 = vmatpush.msra.mxu0 0.0
      %1196 = vmatpush.msra.mxu0 0.0
      %1197 = vmatpush.msra.mxu0 0.0
      %1198 = vmatpush.msra.mxu0 0.0
      %1199 = vmatpush.msra.mxu0 0.0
      %1200 = vmatpush.msra.mxu0 0.0
      %1201 = vmatpush.msra.mxu0 0.0
      %1202 = vmatpush.msra.mxu0 0.0
      %1203 = vmatpush.msra.mxu0 %v1137
      %1204 = vmatpush.msra.mxu0 %v1134
      %1205 = vmatpush.msra.mxu0 %v1131
      %1206 = vmatpush.msra.mxu0 %v1128
      %1207 = vmatmul.f32.gmra.mxu0 %v1140
      %v1208 = vpop.f32.mrf.mxu0
      %v1209 = vadd.f32 0.0, %v1208
      %1210 = vmatmul.f32.gmra.mxu0 %v1143
      %v1211 = vpop.f32.mrf.mxu0
      %v1212 = vadd.f32 0.0, %v1211
      %1213 = vdwg.mxu0
      %v1214 = vld [vmem:[%s6] sm:$0xff]
      %v1215 = vld [vmem:[%s6 + $0x8] sm:$0xff]
      %1217 = vset.pattern.permute.xlu0 0
      %1218 = vperm.xlu0 %1217, %v1214
      %v1219 = vpop.permute.xlu0 %1218
      %1222 = vset.pattern.permute.xlu0 0
      %1223 = vperm.xlu0 %1222, %v1215
      %v1224 = vpop.permute.xlu0 %1223
      %v1226 = vmul.f32 %v1163, %v1219
      %v1227 = vmul.f32 %v1186, %v1219
      %v1228 = vmul.f32 %v1209, %v1219
      %v1229 = vmul.f32 %v1166, %v1224
      %v1230 = vmul.f32 %v1189, %v1224
      %v1231 = vmul.f32 %v1212, %v1224
      %s1232 = scalar_lea.vmem %s6, 16
      %v1233 = vld [vmem:[%s1232] sm:$0xff]
      %v1234 = vld [vmem:[%s1232 + $0x8] sm:$0xff]
      %1236 = vset.pattern.permute.xlu0 0
      %1237 = vperm.xlu0 %1236, %v1233
      %v1238 = vpop.permute.xlu0 %1237
      %1241 = vset.pattern.permute.xlu0 0
      %1242 = vperm.xlu0 %1241, %v1234
      %v1243 = vpop.permute.xlu0 %1242
      %v1245 = vadd.f32 %v1226, %v1238
      %v1246 = vadd.f32 %v1227, %v1238
      %v1247 = vadd.f32 %v1228, %v1238
      %v1248 = vadd.f32 %v1229, %v1243
      %v1249 = vadd.f32 %v1230, %v1243
      %v1250 = vadd.f32 %v1231, %v1243
      %v1251 = vmax.f32 %v1245, 0.0
      %v1252 = vmax.f32 %v1246, 0.0
      %v1253 = vmax.f32 %v1247, 0.0
      %v1254 = vmax.f32 %v1248, 0.0
      %v1255 = vmax.f32 %v1249, 0.0
      %v1256 = vmax.f32 %v1250, 0.0
      %v1257 = vld [vmem:[%s7] sm:$0xff]
      %v1258 = vld [vmem:[%s7 + $0x8] sm:$0xff]
      %v1259 = vld [vmem:[%s7 + $0x10] sm:$0x3]
      %s1260 = scalar_lea.vmem %s7, 24
      %v1261 = vld [vmem:[%s1260] sm:$0xff]
      %v1262 = vld [vmem:[%s1260 + $0x8] sm:$0xff]
      %v1263 = vld [vmem:[%s1260 + $0x10] sm:$0x3]
      %1265 = vrot.lane.b32.xlu0 %v1254, 110
      %v1266 = vpop.permute.xlu0 %1265
      %vm1267 = vcmask 146432
      %v1268 = vsel %vm1267, %v1266, 0
      %vm1270 = vcmask 1041408
      %v1272 = vsel %vm1270, %v1263, 0
      %1274 = vmatpush.msra.mxu0 0.0
      %1275 = vmatpush.msra.mxu0 0.0
      %1276 = vmatpush.msra.mxu0 0.0
      %1277 = vmatpush.msra.mxu0 0.0
      %1278 = vmatpush.msra.mxu0 0.0
      %1279 = vmatpush.msra.mxu0 0.0
      %1280 = vmatpush.msra.mxu0 0.0
      %1281 = vmatpush.msra.mxu0 0.0
      %1282 = vmatpush.msra.mxu0 0.0
      %1283 = vmatpush.msra.mxu0 0.0
      %1284 = vmatpush.msra.mxu0 0.0
      %1285 = vmatpush.msra.mxu0 0.0
      %1286 = vmatpush.msra.mxu0 0.0
      %1287 = vmatpush.msra.mxu0 %v1272
      %1288 = vmatpush.msra.mxu0 %v1262
      %1289 = vmatpush.msra.mxu0 %v1261
      %1290 = vmatmul.f32.gmra.mxu0 %v1268
      %v1291 = vpop.f32.mrf.mxu0
      %v1292 = vadd.f32 0.0, %v1291
      %1293 = vdwg.mxu0
      %1295 = vrot.lane.b32.xlu0 %v1251, 110
      %v1296 = vpop.permute.xlu0 %1295
      %v1297 = vsel %vm1267, %v1296, 0
      %v1300 = vsel %vm1270, %v1259, 0
      %1302 = vmatpush.msra.mxu0 0.0
      %1303 = vmatpush.msra.mxu0 0.0
      %1304 = vmatpush.msra.mxu0 0.0
      %1305 = vmatpush.msra.mxu0 0.0
      %1306 = vmatpush.msra.mxu0 0.0
      %1307 = vmatpush.msra.mxu0 0.0
      %1308 = vmatpush.msra.mxu0 0.0
      %1309 = vmatpush.msra.mxu0 0.0
      %1310 = vmatpush.msra.mxu0 0.0
      %1311 = vmatpush.msra.mxu0 0.0
      %1312 = vmatpush.msra.mxu0 0.0
      %1313 = vmatpush.msra.mxu0 0.0
      %1314 = vmatpush.msra.mxu0 0.0
      %1315 = vmatpush.msra.mxu0 %v1300
      %1316 = vmatpush.msra.mxu0 %v1258
      %1317 = vmatpush.msra.mxu0 %v1257
      %1318 = vmatmul.f32.gmra.mxu0 %v1297
      %v1319 = vpop.f32.mrf.mxu0
      %v1320 = vadd.f32 %v1292, %v1319
      %1321 = vdwg.mxu0
      %vm1322 = vcmask 257024
      %1323 = vst.msk [vmem:[%s379] sm:$0xf] %vm1322, %v1320
      %v1325 = vrot.slane %v1320, 4
      %1326 = vrot.lane.b32.xlu0 %v1325, 32
      %v1327 = vpop.permute.xlu0 %1326
      %vm1329 = vcmask 519424
      %1330 = vst.msk [vmem:[%s379] sm:$0xf] %vm1329, %v1327
      %1331 = vrot.lane.b32.xlu0 %v1254, 92
      %v1332 = vpop.permute.xlu0 %1331
      %v1333 = vsel %vm1267, %v1332, 0
      %1335 = vmatpush.msra.mxu0 0.0
      %1336 = vmatpush.msra.mxu0 0.0
      %1337 = vmatpush.msra.mxu0 0.0
      %1338 = vmatpush.msra.mxu0 0.0
      %1339 = vmatpush.msra.mxu0 0.0
      %1340 = vmatpush.msra.mxu0 0.0
      %1341 = vmatpush.msra.mxu0 0.0
      %1342 = vmatpush.msra.mxu0 0.0
      %1343 = vmatpush.msra.mxu0 0.0
      %1344 = vmatpush.msra.mxu0 0.0
      %1345 = vmatpush.msra.mxu0 0.0
      %1346 = vmatpush.msra.mxu0 0.0
      %1347 = vmatpush.msra.mxu0 0.0
      %1348 = vmatpush.msra.mxu0 %v1272
      %1349 = vmatpush.msra.mxu0 %v1262
      %1350 = vmatpush.msra.mxu0 %v1261
      %1351 = vmatmul.f32.gmra.mxu0 %v1333
      %v1352 = vpop.f32.mrf.mxu0
      %v1353 = vadd.f32 0.0, %v1352
      %1354 = vdwg.mxu0
      %1355 = vrot.lane.b32.xlu0 %v1251, 92
      %v1356 = vpop.permute.xlu0 %1355
      %v1357 = vsel %vm1267, %v1356, 0
      %1359 = vmatpush.msra.mxu0 0.0
      %1360 = vmatpush.msra.mxu0 0.0
      %1361 = vmatpush.msra.mxu0 0.0
      %1362 = vmatpush.msra.mxu0 0.0
      %1363 = vmatpush.msra.mxu0 0.0
      %1364 = vmatpush.msra.mxu0 0.0
      %1365 = vmatpush.msra.mxu0 0.0
      %1366 = vmatpush.msra.mxu0 0.0
      %1367 = vmatpush.msra.mxu0 0.0
      %1368 = vmatpush.msra.mxu0 0.0
      %1369 = vmatpush.msra.mxu0 0.0
      %1370 = vmatpush.msra.mxu0 0.0
      %1371 = vmatpush.msra.mxu0 0.0
      %1372 = vmatpush.msra.mxu0 %v1300
      %1373 = vmatpush.msra.mxu0 %v1258
      %1374 = vmatpush.msra.mxu0 %v1257
      %1375 = vmatmul.f32.gmra.mxu0 %v1357
      %v1376 = vpop.f32.mrf.mxu0
      %v1377 = vadd.f32 %v1353, %v1376
      %1378 = vdwg.mxu0
      %1380 = vrot.lane.b32.xlu0 %v1377, 64
      %v1381 = vpop.permute.xlu0 %1380
      %vm1383 = vcmask 781824
      %1384 = vst.msk [vmem:[%s379] sm:$0xf] %vm1383, %v1381
      %v1385 = vrot.slane %v1377, 4
      %1386 = vrot.lane.b32.xlu0 %v1385, 96
      %v1387 = vpop.permute.xlu0 %1386
      %vm1389 = vcmask 1044224
      %1390 = vst.msk [vmem:[%s379] sm:$0xf] %vm1389, %v1387
      %1391 = vrot.lane.b32.xlu0 %v1254, 74
      %v1392 = vpop.permute.xlu0 %1391
      %v1393 = vsel %vm1267, %v1392, 0
      %1395 = vmatpush.msra.mxu0 0.0
      %1396 = vmatpush.msra.mxu0 0.0
      %1397 = vmatpush.msra.mxu0 0.0
      %1398 = vmatpush.msra.mxu0 0.0
      %1399 = vmatpush.msra.mxu0 0.0
      %1400 = vmatpush.msra.mxu0 0.0
      %1401 = vmatpush.msra.mxu0 0.0
      %1402 = vmatpush.msra.mxu0 0.0
      %1403 = vmatpush.msra.mxu0 0.0
      %1404 = vmatpush.msra.mxu0 0.0
      %1405 = vmatpush.msra.mxu0 0.0
      %1406 = vmatpush.msra.mxu0 0.0
      %1407 = vmatpush.msra.mxu0 0.0
      %1408 = vmatpush.msra.mxu0 %v1272
      %1409 = vmatpush.msra.mxu0 %v1262
      %1410 = vmatpush.msra.mxu0 %v1261
      %1411 = vmatmul.f32.gmra.mxu0 %v1393
      %v1412 = vpop.f32.mrf.mxu0
      %v1413 = vadd.f32 0.0, %v1412
      %1414 = vdwg.mxu0
      %1415 = vrot.lane.b32.xlu0 %v1251, 74
      %v1416 = vpop.permute.xlu0 %1415
      %v1417 = vsel %vm1267, %v1416, 0
      %1419 = vmatpush.msra.mxu0 0.0
      %1420 = vmatpush.msra.mxu0 0.0
      %1421 = vmatpush.msra.mxu0 0.0
      %1422 = vmatpush.msra.mxu0 0.0
      %1423 = vmatpush.msra.mxu0 0.0
      %1424 = vmatpush.msra.mxu0 0.0
      %1425 = vmatpush.msra.mxu0 0.0
      %1426 = vmatpush.msra.mxu0 0.0
      %1427 = vmatpush.msra.mxu0 0.0
      %1428 = vmatpush.msra.mxu0 0.0
      %1429 = vmatpush.msra.mxu0 0.0
      %1430 = vmatpush.msra.mxu0 0.0
      %1431 = vmatpush.msra.mxu0 0.0
      %1432 = vmatpush.msra.mxu0 %v1300
      %1433 = vmatpush.msra.mxu0 %v1258
      %1434 = vmatpush.msra.mxu0 %v1257
      %1435 = vmatmul.f32.gmra.mxu0 %v1417
      %v1436 = vpop.f32.mrf.mxu0
      %v1437 = vadd.f32 %v1413, %v1436
      %1438 = vdwg.mxu0
      %1439 = vst.msk [vmem:[%s379 + $0x8] sm:$0xf] %vm1322, %v1437
      %v1441 = vrot.slane %v1437, 4
      %1442 = vrot.lane.b32.xlu0 %v1441, 32
      %v1443 = vpop.permute.xlu0 %1442
      %1445 = vst.msk [vmem:[%s379 + $0x8] sm:$0xf] %vm1329, %v1443
      %1446 = vrot.lane.b32.xlu0 %v1254, 56
      %v1447 = vpop.permute.xlu0 %1446
      %v1448 = vsel %vm1267, %v1447, 0
      %1450 = vmatpush.msra.mxu0 0.0
      %1451 = vmatpush.msra.mxu0 0.0
      %1452 = vmatpush.msra.mxu0 0.0
      %1453 = vmatpush.msra.mxu0 0.0
      %1454 = vmatpush.msra.mxu0 0.0
      %1455 = vmatpush.msra.mxu0 0.0
      %1456 = vmatpush.msra.mxu0 0.0
      %1457 = vmatpush.msra.mxu0 0.0
      %1458 = vmatpush.msra.mxu0 0.0
      %1459 = vmatpush.msra.mxu0 0.0
      %1460 = vmatpush.msra.mxu0 0.0
      %1461 = vmatpush.msra.mxu0 0.0
      %1462 = vmatpush.msra.mxu0 0.0
      %1463 = vmatpush.msra.mxu0 %v1272
      %1464 = vmatpush.msra.mxu0 %v1262
      %1465 = vmatpush.msra.mxu0 %v1261
      %1466 = vmatmul.f32.gmra.mxu0 %v1448
      %v1467 = vpop.f32.mrf.mxu0
      %v1468 = vadd.f32 0.0, %v1467
      %1469 = vdwg.mxu0
      %1470 = vrot.lane.b32.xlu0 %v1251, 56
      %v1471 = vpop.permute.xlu0 %1470
      %v1472 = vsel %vm1267, %v1471, 0
      %1474 = vmatpush.msra.mxu0 0.0
      %1475 = vmatpush.msra.mxu0 0.0
      %1476 = vmatpush.msra.mxu0 0.0
      %1477 = vmatpush.msra.mxu0 0.0
      %1478 = vmatpush.msra.mxu0 0.0
      %1479 = vmatpush.msra.mxu0 0.0
      %1480 = vmatpush.msra.mxu0 0.0
      %1481 = vmatpush.msra.mxu0 0.0
      %1482 = vmatpush.msra.mxu0 0.0
      %1483 = vmatpush.msra.mxu0 0.0
      %1484 = vmatpush.msra.mxu0 0.0
      %1485 = vmatpush.msra.mxu0 0.0
      %1486 = vmatpush.msra.mxu0 0.0
      %1487 = vmatpush.msra.mxu0 %v1300
      %1488 = vmatpush.msra.mxu0 %v1258
      %1489 = vmatpush.msra.mxu0 %v1257
      %1490 = vmatmul.f32.gmra.mxu0 %v1472
      %v1491 = vpop.f32.mrf.mxu0
      %v1492 = vadd.f32 %v1468, %v1491
      %1493 = vdwg.mxu0
      %1495 = vrot.lane.b32.xlu0 %v1492, 64
      %v1496 = vpop.permute.xlu0 %1495
      %1498 = vst.msk [vmem:[%s379 + $0x8] sm:$0xf] %vm1383, %v1496
      %v1499 = vrot.slane %v1492, 4
      %1500 = vrot.lane.b32.xlu0 %v1499, 96
      %v1501 = vpop.permute.xlu0 %1500
      %1503 = vst.msk [vmem:[%s379 + $0x8] sm:$0xf] %vm1389, %v1501
      %1504 = vrot.lane.b32.xlu0 %v1254, 38
      %v1505 = vpop.permute.xlu0 %1504
      %v1506 = vsel %vm1267, %v1505, 0
      %1508 = vmatpush.msra.mxu0 0.0
      %1509 = vmatpush.msra.mxu0 0.0
      %1510 = vmatpush.msra.mxu0 0.0
      %1511 = vmatpush.msra.mxu0 0.0
      %1512 = vmatpush.msra.mxu0 0.0
      %1513 = vmatpush.msra.mxu0 0.0
      %1514 = vmatpush.msra.mxu0 0.0
      %1515 = vmatpush.msra.mxu0 0.0
      %1516 = vmatpush.msra.mxu0 0.0
      %1517 = vmatpush.msra.mxu0 0.0
      %1518 = vmatpush.msra.mxu0 0.0
      %1519 = vmatpush.msra.mxu0 0.0
      %1520 = vmatpush.msra.mxu0 0.0
      %1521 = vmatpush.msra.mxu0 %v1272
      %1522 = vmatpush.msra.mxu0 %v1262
      %1523 = vmatpush.msra.mxu0 %v1261
      %1524 = vmatmul.f32.gmra.mxu0 %v1506
      %v1525 = vpop.f32.mrf.mxu0
      %v1526 = vadd.f32 0.0, %v1525
      %1527 = vdwg.mxu0
      %1528 = vrot.lane.b32.xlu0 %v1251, 38
      %v1529 = vpop.permute.xlu0 %1528
      %v1530 = vsel %vm1267, %v1529, 0
      %1532 = vmatpush.msra.mxu0 0.0
      %1533 = vmatpush.msra.mxu0 0.0
      %1534 = vmatpush.msra.mxu0 0.0
      %1535 = vmatpush.msra.mxu0 0.0
      %1536 = vmatpush.msra.mxu0 0.0
      %1537 = vmatpush.msra.mxu0 0.0
      %1538 = vmatpush.msra.mxu0 0.0
      %1539 = vmatpush.msra.mxu0 0.0
      %1540 = vmatpush.msra.mxu0 0.0
      %1541 = vmatpush.msra.mxu0 0.0
      %1542 = vmatpush.msra.mxu0 0.0
      %1543 = vmatpush.msra.mxu0 0.0
      %1544 = vmatpush.msra.mxu0 0.0
      %1545 = vmatpush.msra.mxu0 %v1300
      %1546 = vmatpush.msra.mxu0 %v1258
      %1547 = vmatpush.msra.mxu0 %v1257
      %1548 = vmatmul.f32.gmra.mxu0 %v1530
      %v1549 = vpop.f32.mrf.mxu0
      %v1550 = vadd.f32 %v1526, %v1549
      %1551 = vdwg.mxu0
      %1552 = vst.msk [vmem:[%s379 + $0x10] sm:$0xf] %vm1322, %v1550
      %v1554 = vrot.slane %v1550, 4
      %1555 = vrot.lane.b32.xlu0 %v1554, 32
      %v1556 = vpop.permute.xlu0 %1555
      %1558 = vst.msk [vmem:[%s379 + $0x10] sm:$0xf] %vm1329, %v1556
      %1559 = vrot.lane.b32.xlu0 %v1254, 20
      %v1560 = vpop.permute.xlu0 %1559
      %v1561 = vsel %vm1267, %v1560, 0
      %1563 = vmatpush.msra.mxu0 0.0
      %1564 = vmatpush.msra.mxu0 0.0
      %1565 = vmatpush.msra.mxu0 0.0
      %1566 = vmatpush.msra.mxu0 0.0
      %1567 = vmatpush.msra.mxu0 0.0
      %1568 = vmatpush.msra.mxu0 0.0
      %1569 = vmatpush.msra.mxu0 0.0
      %1570 = vmatpush.msra.mxu0 0.0
      %1571 = vmatpush.msra.mxu0 0.0
      %1572 = vmatpush.msra.mxu0 0.0
      %1573 = vmatpush.msra.mxu0 0.0
      %1574 = vmatpush.msra.mxu0 0.0
      %1575 = vmatpush.msra.mxu0 0.0
      %1576 = vmatpush.msra.mxu0 %v1272
      %1577 = vmatpush.msra.mxu0 %v1262
      %1578 = vmatpush.msra.mxu0 %v1261
      %1579 = vmatmul.f32.gmra.mxu0 %v1561
      %v1580 = vpop.f32.mrf.mxu0
      %v1581 = vadd.f32 0.0, %v1580
      %1582 = vdwg.mxu0
      %1583 = vrot.lane.b32.xlu0 %v1251, 20
      %v1584 = vpop.permute.xlu0 %1583
      %v1585 = vsel %vm1267, %v1584, 0
      %1587 = vmatpush.msra.mxu0 0.0
      %1588 = vmatpush.msra.mxu0 0.0
      %1589 = vmatpush.msra.mxu0 0.0
      %1590 = vmatpush.msra.mxu0 0.0
      %1591 = vmatpush.msra.mxu0 0.0
      %1592 = vmatpush.msra.mxu0 0.0
      %1593 = vmatpush.msra.mxu0 0.0
      %1594 = vmatpush.msra.mxu0 0.0
      %1595 = vmatpush.msra.mxu0 0.0
      %1596 = vmatpush.msra.mxu0 0.0
      %1597 = vmatpush.msra.mxu0 0.0
      %1598 = vmatpush.msra.mxu0 0.0
      %1599 = vmatpush.msra.mxu0 0.0
      %1600 = vmatpush.msra.mxu0 %v1300
      %1601 = vmatpush.msra.mxu0 %v1258
      %1602 = vmatpush.msra.mxu0 %v1257
      %1603 = vmatmul.f32.gmra.mxu0 %v1585
      %v1604 = vpop.f32.mrf.mxu0
      %v1605 = vadd.f32 %v1581, %v1604
      %1606 = vdwg.mxu0
      %1608 = vrot.lane.b32.xlu0 %v1605, 64
      %v1609 = vpop.permute.xlu0 %1608
      %1611 = vst.msk [vmem:[%s379 + $0x10] sm:$0xf] %vm1383, %v1609
      %v1612 = vrot.slane %v1605, 4
      %1613 = vrot.lane.b32.xlu0 %v1612, 96
      %v1614 = vpop.permute.xlu0 %1613
      %1616 = vst.msk [vmem:[%s379 + $0x10] sm:$0xf] %vm1389, %v1614
      %1618 = vrot.lane.b32.xlu0 %v1254, 2
      %v1619 = vpop.permute.xlu0 %1618
      %1620 = vrot.lane.b32.xlu0 %v1255, 2
      %v1621 = vpop.permute.xlu0 %1620
      %vm1622 = vcmask 15360
      %v1623 = vsel %vm1622, %v1619, %v1621
      %v1624 = vsel %vm1267, %v1623, 0
      %1626 = vmatpush.msra.mxu0 0.0
      %1627 = vmatpush.msra.mxu0 0.0
      %1628 = vmatpush.msra.mxu0 0.0
      %1629 = vmatpush.msra.mxu0 0.0
      %1630 = vmatpush.msra.mxu0 0.0
      %1631 = vmatpush.msra.mxu0 0.0
      %1632 = vmatpush.msra.mxu0 0.0
      %1633 = vmatpush.msra.mxu0 0.0
      %1634 = vmatpush.msra.mxu0 0.0
      %1635 = vmatpush.msra.mxu0 0.0
      %1636 = vmatpush.msra.mxu0 0.0
      %1637 = vmatpush.msra.mxu0 0.0
      %1638 = vmatpush.msra.mxu0 0.0
      %1639 = vmatpush.msra.mxu0 %v1272
      %1640 = vmatpush.msra.mxu0 %v1262
      %1641 = vmatpush.msra.mxu0 %v1261
      %1642 = vmatmul.f32.gmra.mxu0 %v1624
      %v1643 = vpop.f32.mrf.mxu0
      %v1644 = vadd.f32 0.0, %v1643
      %1645 = vdwg.mxu0
      %1647 = vrot.lane.b32.xlu0 %v1251, 2
      %v1648 = vpop.permute.xlu0 %1647
      %1649 = vrot.lane.b32.xlu0 %v1252, 2
      %v1650 = vpop.permute.xlu0 %1649
      %v1651 = vsel %vm1622, %v1648, %v1650
      %v1652 = vsel %vm1267, %v1651, 0
      %1654 = vmatpush.msra.mxu0 0.0
      %1655 = vmatpush.msra.mxu0 0.0
      %1656 = vmatpush.msra.mxu0 0.0
      %1657 = vmatpush.msra.mxu0 0.0
      %1658 = vmatpush.msra.mxu0 0.0
      %1659 = vmatpush.msra.mxu0 0.0
      %1660 = vmatpush.msra.mxu0 0.0
      %1661 = vmatpush.msra.mxu0 0.0
      %1662 = vmatpush.msra.mxu0 0.0
      %1663 = vmatpush.msra.mxu0 0.0
      %1664 = vmatpush.msra.mxu0 0.0
      %1665 = vmatpush.msra.mxu0 0.0
      %1666 = vmatpush.msra.mxu0 0.0
      %1667 = vmatpush.msra.mxu0 %v1300
      %1668 = vmatpush.msra.mxu0 %v1258
      %1669 = vmatpush.msra.mxu0 %v1257
      %1670 = vmatmul.f32.gmra.mxu0 %v1652
      %v1671 = vpop.f32.mrf.mxu0
      %v1672 = vadd.f32 %v1644, %v1671
      %1673 = vdwg.mxu0
      %1674 = vst.msk [vmem:[%s379 + $0x18] sm:$0xf] %vm1322, %v1672
      %v1676 = vrot.slane %v1672, 4
      %1677 = vrot.lane.b32.xlu0 %v1676, 32
      %v1678 = vpop.permute.xlu0 %1677
      %1680 = vst.msk [vmem:[%s379 + $0x18] sm:$0xf] %vm1329, %v1678
      %1681 = vrot.lane.b32.xlu0 %v1255, 112
      %v1682 = vpop.permute.xlu0 %1681
      %v1683 = vsel %vm1267, %v1682, 0
      %1685 = vmatpush.msra.mxu0 0.0
      %1686 = vmatpush.msra.mxu0 0.0
      %1687 = vmatpush.msra.mxu0 0.0
      %1688 = vmatpush.msra.mxu0 0.0
      %1689 = vmatpush.msra.mxu0 0.0
      %1690 = vmatpush.msra.mxu0 0.0
      %1691 = vmatpush.msra.mxu0 0.0
      %1692 = vmatpush.msra.mxu0 0.0
      %1693 = vmatpush.msra.mxu0 0.0
      %1694 = vmatpush.msra.mxu0 0.0
      %1695 = vmatpush.msra.mxu0 0.0
      %1696 = vmatpush.msra.mxu0 0.0
      %1697 = vmatpush.msra.mxu0 0.0
      %1698 = vmatpush.msra.mxu0 %v1272
      %1699 = vmatpush.msra.mxu0 %v1262
      %1700 = vmatpush.msra.mxu0 %v1261
      %1701 = vmatmul.f32.gmra.mxu0 %v1683
      %v1702 = vpop.f32.mrf.mxu0
      %v1703 = vadd.f32 0.0, %v1702
      %1704 = vdwg.mxu0
      %1705 = vrot.lane.b32.xlu0 %v1252, 112
      %v1706 = vpop.permute.xlu0 %1705
      %v1707 = vsel %vm1267, %v1706, 0
      %1709 = vmatpush.msra.mxu0 0.0
      %1710 = vmatpush.msra.mxu0 0.0
      %1711 = vmatpush.msra.mxu0 0.0
      %1712 = vmatpush.msra.mxu0 0.0
      %1713 = vmatpush.msra.mxu0 0.0
      %1714 = vmatpush.msra.mxu0 0.0
      %1715 = vmatpush.msra.mxu0 0.0
      %1716 = vmatpush.msra.mxu0 0.0
      %1717 = vmatpush.msra.mxu0 0.0
      %1718 = vmatpush.msra.mxu0 0.0
      %1719 = vmatpush.msra.mxu0 0.0
      %1720 = vmatpush.msra.mxu0 0.0
      %1721 = vmatpush.msra.mxu0 0.0
      %1722 = vmatpush.msra.mxu0 %v1300
      %1723 = vmatpush.msra.mxu0 %v1258
      %1724 = vmatpush.msra.mxu0 %v1257
      %1725 = vmatmul.f32.gmra.mxu0 %v1707
      %v1726 = vpop.f32.mrf.mxu0
      %v1727 = vadd.f32 %v1703, %v1726
      %1728 = vdwg.mxu0
      %1730 = vrot.lane.b32.xlu0 %v1727, 64
      %v1731 = vpop.permute.xlu0 %1730
      %1733 = vst.msk [vmem:[%s379 + $0x18] sm:$0xf] %vm1383, %v1731
      %v1734 = vrot.slane %v1727, 4
      %1735 = vrot.lane.b32.xlu0 %v1734, 96
      %v1736 = vpop.permute.xlu0 %1735
      %1738 = vst.msk [vmem:[%s379 + $0x18] sm:$0xf] %vm1389, %v1736
      %1739 = vrot.lane.b32.xlu0 %v1255, 94
      %v1740 = vpop.permute.xlu0 %1739
      %v1741 = vsel %vm1267, %v1740, 0
      %1743 = vmatpush.msra.mxu0 0.0
      %1744 = vmatpush.msra.mxu0 0.0
      %1745 = vmatpush.msra.mxu0 0.0
      %1746 = vmatpush.msra.mxu0 0.0
      %1747 = vmatpush.msra.mxu0 0.0
      %1748 = vmatpush.msra.mxu0 0.0
      %1749 = vmatpush.msra.mxu0 0.0
      %1750 = vmatpush.msra.mxu0 0.0
      %1751 = vmatpush.msra.mxu0 0.0
      %1752 = vmatpush.msra.mxu0 0.0
      %1753 = vmatpush.msra.mxu0 0.0
      %1754 = vmatpush.msra.mxu0 0.0
      %1755 = vmatpush.msra.mxu0 0.0
      %1756 = vmatpush.msra.mxu0 %v1272
      %1757 = vmatpush.msra.mxu0 %v1262
      %1758 = vmatpush.msra.mxu0 %v1261
      %1759 = vmatmul.f32.gmra.mxu0 %v1741
      %v1760 = vpop.f32.mrf.mxu0
      %v1761 = vadd.f32 0.0, %v1760
      %1762 = vdwg.mxu0
      %1763 = vrot.lane.b32.xlu0 %v1252, 94
      %v1764 = vpop.permute.xlu0 %1763
      %v1765 = vsel %vm1267, %v1764, 0
      %1767 = vmatpush.msra.mxu0 0.0
      %1768 = vmatpush.msra.mxu0 0.0
      %1769 = vmatpush.msra.mxu0 0.0
      %1770 = vmatpush.msra.mxu0 0.0
      %1771 = vmatpush.msra.mxu0 0.0
      %1772 = vmatpush.msra.mxu0 0.0
      %1773 = vmatpush.msra.mxu0 0.0
      %1774 = vmatpush.msra.mxu0 0.0
      %1775 = vmatpush.msra.mxu0 0.0
      %1776 = vmatpush.msra.mxu0 0.0
      %1777 = vmatpush.msra.mxu0 0.0
      %1778 = vmatpush.msra.mxu0 0.0
      %1779 = vmatpush.msra.mxu0 0.0
      %1780 = vmatpush.msra.mxu0 %v1300
      %1781 = vmatpush.msra.mxu0 %v1258
      %1782 = vmatpush.msra.mxu0 %v1257
      %1783 = vmatmul.f32.gmra.mxu0 %v1765
      %v1784 = vpop.f32.mrf.mxu0
      %v1785 = vadd.f32 %v1761, %v1784
      %1786 = vdwg.mxu0
      %1787 = vst.msk [vmem:[%s379 + $0x20] sm:$0xf] %vm1322, %v1785
      %v1789 = vrot.slane %v1785, 4
      %1790 = vrot.lane.b32.xlu0 %v1789, 32
      %v1791 = vpop.permute.xlu0 %1790
      %1793 = vst.msk [vmem:[%s379 + $0x20] sm:$0xf] %vm1329, %v1791
      %1794 = vrot.lane.b32.xlu0 %v1255, 76
      %v1795 = vpop.permute.xlu0 %1794
      %v1796 = vsel %vm1267, %v1795, 0
      %1798 = vmatpush.msra.mxu0 0.0
      %1799 = vmatpush.msra.mxu0 0.0
      %1800 = vmatpush.msra.mxu0 0.0
      %1801 = vmatpush.msra.mxu0 0.0
      %1802 = vmatpush.msra.mxu0 0.0
      %1803 = vmatpush.msra.mxu0 0.0
      %1804 = vmatpush.msra.mxu0 0.0
      %1805 = vmatpush.msra.mxu0 0.0
      %1806 = vmatpush.msra.mxu0 0.0
      %1807 = vmatpush.msra.mxu0 0.0
      %1808 = vmatpush.msra.mxu0 0.0
      %1809 = vmatpush.msra.mxu0 0.0
      %1810 = vmatpush.msra.mxu0 0.0
      %1811 = vmatpush.msra.mxu0 %v1272
      %1812 = vmatpush.msra.mxu0 %v1262
      %1813 = vmatpush.msra.mxu0 %v1261
      %1814 = vmatmul.f32.gmra.mxu0 %v1796
      %v1815 = vpop.f32.mrf.mxu0
      %v1816 = vadd.f32 0.0, %v1815
      %1817 = vdwg.mxu0
      %1818 = vrot.lane.b32.xlu0 %v1252, 76
      %v1819 = vpop.permute.xlu0 %1818
      %v1820 = vsel %vm1267, %v1819, 0
      %1822 = vmatpush.msra.mxu0 0.0
      %1823 = vmatpush.msra.mxu0 0.0
      %1824 = vmatpush.msra.mxu0 0.0
      %1825 = vmatpush.msra.mxu0 0.0
      %1826 = vmatpush.msra.mxu0 0.0
      %1827 = vmatpush.msra.mxu0 0.0
      %1828 = vmatpush.msra.mxu0 0.0
      %1829 = vmatpush.msra.mxu0 0.0
      %1830 = vmatpush.msra.mxu0 0.0
      %1831 = vmatpush.msra.mxu0 0.0
      %1832 = vmatpush.msra.mxu0 0.0
      %1833 = vmatpush.msra.mxu0 0.0
      %1834 = vmatpush.msra.mxu0 0.0
      %1835 = vmatpush.msra.mxu0 %v1300
      %1836 = vmatpush.msra.mxu0 %v1258
      %1837 = vmatpush.msra.mxu0 %v1257
      %1838 = vmatmul.f32.gmra.mxu0 %v1820
      %v1839 = vpop.f32.mrf.mxu0
      %v1840 = vadd.f32 %v1816, %v1839
      %1841 = vdwg.mxu0
      %1843 = vrot.lane.b32.xlu0 %v1840, 64
      %v1844 = vpop.permute.xlu0 %1843
      %1846 = vst.msk [vmem:[%s379 + $0x20] sm:$0xf] %vm1383, %v1844
      %v1847 = vrot.slane %v1840, 4
      %1848 = vrot.lane.b32.xlu0 %v1847, 96
      %v1849 = vpop.permute.xlu0 %1848
      %1851 = vst.msk [vmem:[%s379 + $0x20] sm:$0xf] %vm1389, %v1849
      %1852 = vrot.lane.b32.xlu0 %v1255, 58
      %v1853 = vpop.permute.xlu0 %1852
      %v1854 = vsel %vm1267, %v1853, 0
      %1856 = vmatpush.msra.mxu0 0.0
      %1857 = vmatpush.msra.mxu0 0.0
      %1858 = vmatpush.msra.mxu0 0.0
      %1859 = vmatpush.msra.mxu0 0.0
      %1860 = vmatpush.msra.mxu0 0.0
      %1861 = vmatpush.msra.mxu0 0.0
      %1862 = vmatpush.msra.mxu0 0.0
      %1863 = vmatpush.msra.mxu0 0.0
      %1864 = vmatpush.msra.mxu0 0.0
      %1865 = vmatpush.msra.mxu0 0.0
      %1866 = vmatpush.msra.mxu0 0.0
      %1867 = vmatpush.msra.mxu0 0.0
      %1868 = vmatpush.msra.mxu0 0.0
      %1869 = vmatpush.msra.mxu0 %v1272
      %1870 = vmatpush.msra.mxu0 %v1262
      %1871 = vmatpush.msra.mxu0 %v1261
      %1872 = vmatmul.f32.gmra.mxu0 %v1854
      %v1873 = vpop.f32.mrf.mxu0
      %v1874 = vadd.f32 0.0, %v1873
      %1875 = vdwg.mxu0
      %1876 = vrot.lane.b32.xlu0 %v1252, 58
      %v1877 = vpop.permute.xlu0 %1876
      %v1878 = vsel %vm1267, %v1877, 0
      %1880 = vmatpush.msra.mxu0 0.0
      %1881 = vmatpush.msra.mxu0 0.0
      %1882 = vmatpush.msra.mxu0 0.0
      %1883 = vmatpush.msra.mxu0 0.0
      %1884 = vmatpush.msra.mxu0 0.0
      %1885 = vmatpush.msra.mxu0 0.0
      %1886 = vmatpush.msra.mxu0 0.0
      %1887 = vmatpush.msra.mxu0 0.0
      %1888 = vmatpush.msra.mxu0 0.0
      %1889 = vmatpush.msra.mxu0 0.0
      %1890 = vmatpush.msra.mxu0 0.0
      %1891 = vmatpush.msra.mxu0 0.0
      %1892 = vmatpush.msra.mxu0 0.0
      %1893 = vmatpush.msra.mxu0 %v1300
      %1894 = vmatpush.msra.mxu0 %v1258
      %1895 = vmatpush.msra.mxu0 %v1257
      %1896 = vmatmul.f32.gmra.mxu0 %v1878
      %v1897 = vpop.f32.mrf.mxu0
      %v1898 = vadd.f32 %v1874, %v1897
      %1899 = vdwg.mxu0
      %1900 = vst.msk [vmem:[%s379 + $0x28] sm:$0xf] %vm1322, %v1898
      %v1902 = vrot.slane %v1898, 4
      %1903 = vrot.lane.b32.xlu0 %v1902, 32
      %v1904 = vpop.permute.xlu0 %1903
      %1906 = vst.msk [vmem:[%s379 + $0x28] sm:$0xf] %vm1329, %v1904
      %1907 = vrot.lane.b32.xlu0 %v1255, 40
      %v1908 = vpop.permute.xlu0 %1907
      %v1909 = vsel %vm1267, %v1908, 0
      %1911 = vmatpush.msra.mxu0 0.0
      %1912 = vmatpush.msra.mxu0 0.0
      %1913 = vmatpush.msra.mxu0 0.0
      %1914 = vmatpush.msra.mxu0 0.0
      %1915 = vmatpush.msra.mxu0 0.0
      %1916 = vmatpush.msra.mxu0 0.0
      %1917 = vmatpush.msra.mxu0 0.0
      %1918 = vmatpush.msra.mxu0 0.0
      %1919 = vmatpush.msra.mxu0 0.0
      %1920 = vmatpush.msra.mxu0 0.0
      %1921 = vmatpush.msra.mxu0 0.0
      %1922 = vmatpush.msra.mxu0 0.0
      %1923 = vmatpush.msra.mxu0 0.0
      %1924 = vmatpush.msra.mxu0 %v1272
      %1925 = vmatpush.msra.mxu0 %v1262
      %1926 = vmatpush.msra.mxu0 %v1261
      %1927 = vmatmul.f32.gmra.mxu0 %v1909
      %v1928 = vpop.f32.mrf.mxu0
      %v1929 = vadd.f32 0.0, %v1928
      %1930 = vdwg.mxu0
      %1931 = vrot.lane.b32.xlu0 %v1252, 40
      %v1932 = vpop.permute.xlu0 %1931
      %v1933 = vsel %vm1267, %v1932, 0
      %1935 = vmatpush.msra.mxu0 0.0
      %1936 = vmatpush.msra.mxu0 0.0
      %1937 = vmatpush.msra.mxu0 0.0
      %1938 = vmatpush.msra.mxu0 0.0
      %1939 = vmatpush.msra.mxu0 0.0
      %1940 = vmatpush.msra.mxu0 0.0
      %1941 = vmatpush.msra.mxu0 0.0
      %1942 = vmatpush.msra.mxu0 0.0
      %1943 = vmatpush.msra.mxu0 0.0
      %1944 = vmatpush.msra.mxu0 0.0
      %1945 = vmatpush.msra.mxu0 0.0
      %1946 = vmatpush.msra.mxu0 0.0
      %1947 = vmatpush.msra.mxu0 0.0
      %1948 = vmatpush.msra.mxu0 %v1300
      %1949 = vmatpush.msra.mxu0 %v1258
      %1950 = vmatpush.msra.mxu0 %v1257
      %1951 = vmatmul.f32.gmra.mxu0 %v1933
      %v1952 = vpop.f32.mrf.mxu0
      %v1953 = vadd.f32 %v1929, %v1952
      %1954 = vdwg.mxu0
      %1956 = vrot.lane.b32.xlu0 %v1953, 64
      %v1957 = vpop.permute.xlu0 %1956
      %1959 = vst.msk [vmem:[%s379 + $0x28] sm:$0xf] %vm1383, %v1957
      %v1960 = vrot.slane %v1953, 4
      %1961 = vrot.lane.b32.xlu0 %v1960, 96
      %v1962 = vpop.permute.xlu0 %1961
      %1964 = vst.msk [vmem:[%s379 + $0x28] sm:$0xf] %vm1389, %v1962
      %1965 = vrot.lane.b32.xlu0 %v1255, 22
      %v1966 = vpop.permute.xlu0 %1965
      %v1967 = vsel %vm1267, %v1966, 0
      %1969 = vmatpush.msra.mxu0 0.0
      %1970 = vmatpush.msra.mxu0 0.0
      %1971 = vmatpush.msra.mxu0 0.0
      %1972 = vmatpush.msra.mxu0 0.0
      %1973 = vmatpush.msra.mxu0 0.0
      %1974 = vmatpush.msra.mxu0 0.0
      %1975 = vmatpush.msra.mxu0 0.0
      %1976 = vmatpush.msra.mxu0 0.0
      %1977 = vmatpush.msra.mxu0 0.0
      %1978 = vmatpush.msra.mxu0 0.0
      %1979 = vmatpush.msra.mxu0 0.0
      %1980 = vmatpush.msra.mxu0 0.0
      %1981 = vmatpush.msra.mxu0 0.0
      %1982 = vmatpush.msra.mxu0 %v1272
      %1983 = vmatpush.msra.mxu0 %v1262
      %1984 = vmatpush.msra.mxu0 %v1261
      %1985 = vmatmul.f32.gmra.mxu0 %v1967
      %v1986 = vpop.f32.mrf.mxu0
      %v1987 = vadd.f32 0.0, %v1986
      %1988 = vdwg.mxu0
      %1989 = vrot.lane.b32.xlu0 %v1252, 22
      %v1990 = vpop.permute.xlu0 %1989
      %v1991 = vsel %vm1267, %v1990, 0
      %1993 = vmatpush.msra.mxu0 0.0
      %1994 = vmatpush.msra.mxu0 0.0
      %1995 = vmatpush.msra.mxu0 0.0
      %1996 = vmatpush.msra.mxu0 0.0
      %1997 = vmatpush.msra.mxu0 0.0
      %1998 = vmatpush.msra.mxu0 0.0
      %1999 = vmatpush.msra.mxu0 0.0
      %2000 = vmatpush.msra.mxu0 0.0
      %2001 = vmatpush.msra.mxu0 0.0
      %2002 = vmatpush.msra.mxu0 0.0
      %2003 = vmatpush.msra.mxu0 0.0
      %2004 = vmatpush.msra.mxu0 0.0
      %2005 = vmatpush.msra.mxu0 0.0
      %2006 = vmatpush.msra.mxu0 %v1300
      %2007 = vmatpush.msra.mxu0 %v1258
      %2008 = vmatpush.msra.mxu0 %v1257
      %2009 = vmatmul.f32.gmra.mxu0 %v1991
      %v2010 = vpop.f32.mrf.mxu0
      %v2011 = vadd.f32 %v1987, %v2010
      %2012 = vdwg.mxu0
      %2013 = vst.msk [vmem:[%s379 + $0x30] sm:$0xf] %vm1322, %v2011
      %v2015 = vrot.slane %v2011, 4
      %2016 = vrot.lane.b32.xlu0 %v2015, 32
      %v2017 = vpop.permute.xlu0 %2016
      %2019 = vst.msk [vmem:[%s379 + $0x30] sm:$0xf] %vm1329, %v2017
      %2021 = vrot.lane.b32.xlu0 %v1255, 4
      %v2022 = vpop.permute.xlu0 %2021
      %2023 = vrot.lane.b32.xlu0 %v1256, 4
      %v2024 = vpop.permute.xlu0 %2023
      %vm2025 = vcmask 31744
      %v2026 = vsel %vm2025, %v2022, %v2024
      %v2027 = vsel %vm1267, %v2026, 0
      %2029 = vmatpush.msra.mxu0 0.0
      %2030 = vmatpush.msra.mxu0 0.0
      %2031 = vmatpush.msra.mxu0 0.0
      %2032 = vmatpush.msra.mxu0 0.0
      %2033 = vmatpush.msra.mxu0 0.0
      %2034 = vmatpush.msra.mxu0 0.0
      %2035 = vmatpush.msra.mxu0 0.0
      %2036 = vmatpush.msra.mxu0 0.0
      %2037 = vmatpush.msra.mxu0 0.0
      %2038 = vmatpush.msra.mxu0 0.0
      %2039 = vmatpush.msra.mxu0 0.0
      %2040 = vmatpush.msra.mxu0 0.0
      %2041 = vmatpush.msra.mxu0 0.0
      %2042 = vmatpush.msra.mxu0 %v1272
      %2043 = vmatpush.msra.mxu0 %v1262
      %2044 = vmatpush.msra.mxu0 %v1261
      %2045 = vmatmul.f32.gmra.mxu0 %v2027
      %v2046 = vpop.f32.mrf.mxu0
      %v2047 = vadd.f32 0.0, %v2046
      %2048 = vdwg.mxu0
      %2050 = vrot.lane.b32.xlu0 %v1252, 4
      %v2051 = vpop.permute.xlu0 %2050
      %2052 = vrot.lane.b32.xlu0 %v1253, 4
      %v2053 = vpop.permute.xlu0 %2052
      %v2054 = vsel %vm2025, %v2051, %v2053
      %v2055 = vsel %vm1267, %v2054, 0
      %2057 = vmatpush.msra.mxu0 0.0
      %2058 = vmatpush.msra.mxu0 0.0
      %2059 = vmatpush.msra.mxu0 0.0
      %2060 = vmatpush.msra.mxu0 0.0
      %2061 = vmatpush.msra.mxu0 0.0
      %2062 = vmatpush.msra.mxu0 0.0
      %2063 = vmatpush.msra.mxu0 0.0
      %2064 = vmatpush.msra.mxu0 0.0
      %2065 = vmatpush.msra.mxu0 0.0
      %2066 = vmatpush.msra.mxu0 0.0
      %2067 = vmatpush.msra.mxu0 0.0
      %2068 = vmatpush.msra.mxu0 0.0
      %2069 = vmatpush.msra.mxu0 0.0
      %2070 = vmatpush.msra.mxu0 %v1300
      %2071 = vmatpush.msra.mxu0 %v1258
      %2072 = vmatpush.msra.mxu0 %v1257
      %2073 = vmatmul.f32.gmra.mxu0 %v2055
      %v2074 = vpop.f32.mrf.mxu0
      %v2075 = vadd.f32 %v2047, %v2074
      %2076 = vdwg.mxu0
      %2078 = vrot.lane.b32.xlu0 %v2075, 64
      %v2079 = vpop.permute.xlu0 %2078
      %2081 = vst.msk [vmem:[%s379 + $0x30] sm:$0xf] %vm1383, %v2079
      %v2082 = vrot.slane %v2075, 4
      %2083 = vrot.lane.b32.xlu0 %v2082, 96
      %v2084 = vpop.permute.xlu0 %2083
      %2086 = vst.msk [vmem:[%s379 + $0x30] sm:$0xf] %vm1389, %v2084
      %2087 = vrot.lane.b32.xlu0 %v1256, 114
      %v2088 = vpop.permute.xlu0 %2087
      %v2089 = vsel %vm1267, %v2088, 0
      %2091 = vmatpush.msra.mxu0 0.0
      %2092 = vmatpush.msra.mxu0 0.0
      %2093 = vmatpush.msra.mxu0 0.0
      %2094 = vmatpush.msra.mxu0 0.0
      %2095 = vmatpush.msra.mxu0 0.0
      %2096 = vmatpush.msra.mxu0 0.0
      %2097 = vmatpush.msra.mxu0 0.0
      %2098 = vmatpush.msra.mxu0 0.0
      %2099 = vmatpush.msra.mxu0 0.0
      %2100 = vmatpush.msra.mxu0 0.0
      %2101 = vmatpush.msra.mxu0 0.0
      %2102 = vmatpush.msra.mxu0 0.0
      %2103 = vmatpush.msra.mxu0 0.0
      %2104 = vmatpush.msra.mxu0 %v1272
      %2105 = vmatpush.msra.mxu0 %v1262
      %2106 = vmatpush.msra.mxu0 %v1261
      %2107 = vmatmul.f32.gmra.mxu0 %v2089
      %v2108 = vpop.f32.mrf.mxu0
      %v2109 = vadd.f32 0.0, %v2108
      %2110 = vdwg.mxu0
      %2111 = vrot.lane.b32.xlu0 %v1253, 114
      %v2112 = vpop.permute.xlu0 %2111
      %v2113 = vsel %vm1267, %v2112, 0
      %2115 = vmatpush.msra.mxu0 0.0
      %2116 = vmatpush.msra.mxu0 0.0
      %2117 = vmatpush.msra.mxu0 0.0
      %2118 = vmatpush.msra.mxu0 0.0
      %2119 = vmatpush.msra.mxu0 0.0
      %2120 = vmatpush.msra.mxu0 0.0
      %2121 = vmatpush.msra.mxu0 0.0
      %2122 = vmatpush.msra.mxu0 0.0
      %2123 = vmatpush.msra.mxu0 0.0
      %2124 = vmatpush.msra.mxu0 0.0
      %2125 = vmatpush.msra.mxu0 0.0
      %2126 = vmatpush.msra.mxu0 0.0
      %2127 = vmatpush.msra.mxu0 0.0
      %2128 = vmatpush.msra.mxu0 %v1300
      %2129 = vmatpush.msra.mxu0 %v1258
      %2130 = vmatpush.msra.mxu0 %v1257
      %2131 = vmatmul.f32.gmra.mxu0 %v2113
      %v2132 = vpop.f32.mrf.mxu0
      %v2133 = vadd.f32 %v2109, %v2132
      %2134 = vdwg.mxu0
      %2135 = vst.msk [vmem:[%s379 + $0x38] sm:$0xf] %vm1322, %v2133
      %v2137 = vrot.slane %v2133, 4
      %2138 = vrot.lane.b32.xlu0 %v2137, 32
      %v2139 = vpop.permute.xlu0 %2138
      %2141 = vst.msk [vmem:[%s379 + $0x38] sm:$0xf] %vm1329, %v2139
      %2142 = vrot.lane.b32.xlu0 %v1256, 96
      %v2143 = vpop.permute.xlu0 %2142
      %v2144 = vsel %vm1267, %v2143, 0
      %2146 = vmatpush.msra.mxu0 0.0
      %2147 = vmatpush.msra.mxu0 0.0
      %2148 = vmatpush.msra.mxu0 0.0
      %2149 = vmatpush.msra.mxu0 0.0
      %2150 = vmatpush.msra.mxu0 0.0
      %2151 = vmatpush.msra.mxu0 0.0
      %2152 = vmatpush.msra.mxu0 0.0
      %2153 = vmatpush.msra.mxu0 0.0
      %2154 = vmatpush.msra.mxu0 0.0
      %2155 = vmatpush.msra.mxu0 0.0
      %2156 = vmatpush.msra.mxu0 0.0
      %2157 = vmatpush.msra.mxu0 0.0
      %2158 = vmatpush.msra.mxu0 0.0
      %2159 = vmatpush.msra.mxu0 %v1272
      %2160 = vmatpush.msra.mxu0 %v1262
      %2161 = vmatpush.msra.mxu0 %v1261
      %2162 = vmatmul.f32.gmra.mxu0 %v2144
      %v2163 = vpop.f32.mrf.mxu0
      %v2164 = vadd.f32 0.0, %v2163
      %2165 = vdwg.mxu0
      %2166 = vrot.lane.b32.xlu0 %v1253, 96
      %v2167 = vpop.permute.xlu0 %2166
      %v2168 = vsel %vm1267, %v2167, 0
      %2170 = vmatpush.msra.mxu0 0.0
      %2171 = vmatpush.msra.mxu0 0.0
      %2172 = vmatpush.msra.mxu0 0.0
      %2173 = vmatpush.msra.mxu0 0.0
      %2174 = vmatpush.msra.mxu0 0.0
      %2175 = vmatpush.msra.mxu0 0.0
      %2176 = vmatpush.msra.mxu0 0.0
      %2177 = vmatpush.msra.mxu0 0.0
      %2178 = vmatpush.msra.mxu0 0.0
      %2179 = vmatpush.msra.mxu0 0.0
      %2180 = vmatpush.msra.mxu0 0.0
      %2181 = vmatpush.msra.mxu0 0.0
      %2182 = vmatpush.msra.mxu0 0.0
      %2183 = vmatpush.msra.mxu0 %v1300
      %2184 = vmatpush.msra.mxu0 %v1258
      %2185 = vmatpush.msra.mxu0 %v1257
      %2186 = vmatmul.f32.gmra.mxu0 %v2168
      %v2187 = vpop.f32.mrf.mxu0
      %v2188 = vadd.f32 %v2164, %v2187
      %2189 = vdwg.mxu0
      %2191 = vrot.lane.b32.xlu0 %v2188, 64
      %v2192 = vpop.permute.xlu0 %2191
      %2194 = vst.msk [vmem:[%s379 + $0x38] sm:$0xf] %vm1383, %v2192
      %v2195 = vrot.slane %v2188, 4
      %2196 = vrot.lane.b32.xlu0 %v2195, 96
      %v2197 = vpop.permute.xlu0 %2196
      %2199 = vst.msk [vmem:[%s379 + $0x38] sm:$0xf] %vm1389, %v2197
      %v2200 = vld [vmem:[%s374] sm:$0xff]
      %v2201 = vld [vmem:[%s374 + $0x8] sm:$0xff]
      %v2202 = vld [vmem:[%s374 + $0x10] sm:$0xff]
      %v2203 = vld [vmem:[%s374 + $0x18] sm:$0xff]
      %s2208 = scalar_lea.vmem [#allocation1], 1
      %2209 = vst [vmem:[%s2208] ss:$2 sm:$0xff] %v2200
      %s2210 = scalar_lea.vmem [#allocation1], 17
      %2211 = vst [vmem:[%s2210] ss:$2 sm:$0xff] %v2201
      %s2212 = scalar_lea.vmem [#allocation1], 33
      %2213 = vst [vmem:[%s2212] ss:$2 sm:$0xff] %v2202
      %s2214 = scalar_lea.vmem [#allocation1], 49
      %2215 = vst [vmem:[%s2214] ss:$2 sm:$0xff] %v2203
      %v2216 = vld.sshfl [vmem:[#allocation1] sm:$0xff pattern:$0x75316420]
      %v2217 = vld.sshfl [vmem:[#allocation1 + $0x8] sm:$0xff pattern:$0x75316420]
      %v2218 = vld.sshfl [vmem:[#allocation1 + $0x10] sm:$0xff pattern:$0x75316420]
      %v2219 = vld.sshfl [vmem:[#allocation1 + $0x18] sm:$0xff pattern:$0x75316420]
      %v2220 = vld.sshfl [vmem:[#allocation1 + $0x20] sm:$0xff pattern:$0x75316420]
      %v2221 = vld.sshfl [vmem:[#allocation1 + $0x28] sm:$0xff pattern:$0x75316420]
      %v2222 = vld.sshfl [vmem:[#allocation1 + $0x30] sm:$0xff pattern:$0x75316420]
      %v2223 = vld.sshfl [vmem:[#allocation1 + $0x38] sm:$0xff pattern:$0x75316420]
      %2232 = vst [vmem:[%s379] sm:$0xf0] %v2216
      %2233 = vst [vmem:[%s379 + $0x8] sm:$0xf0] %v2217
      %2234 = vst [vmem:[%s379 + $0x10] sm:$0xf0] %v2218
      %2235 = vst [vmem:[%s379 + $0x18] sm:$0xf0] %v2219
      %2236 = vst [vmem:[%s379 + $0x20] sm:$0xf0] %v2220
      %2237 = vst [vmem:[%s379 + $0x28] sm:$0xf0] %v2221
      %2238 = vst [vmem:[%s379 + $0x30] sm:$0xf0] %v2222
      %2239 = vst [vmem:[%s379 + $0x38] sm:$0xf0] %v2223
      %p2240 = scmp.lt.s32.totalorder %s21, 1
      %s2241 = scalar_select %p2240, %s21, 1
      %s2242 = smul.addr %s2241, 8
      %s2243 = smul.addr %s2242, 8
      %s2244 = scalar_lea.vmem %s10, %s2243
      // Predicated region
      $region61: #{upsample_layer_forward.1} parent=59 // pred_check
        %p2245 = pneg %p259
      $region62: #{upsample_layer_forward.1} parent=59 // pred_check_branch
        %2247 = sbr.rel (%p2245) target = $region64
      $region63: #{upsample_layer_forward.1} parent=59 // pred_region
        _
      $region64: #{upsample_layer_forward.1} parent=59 // pred_fallthru
        _
    $region60: #{upsample_layer_forward.1} parent=5 // pred_fallthru
      _
    %p2248 = scmp.le.s32.totalorder 2, %s16
    // Predicated region
    $region65: #{upsample_layer_forward.1} parent=5 // pred_check
      %p2249 = pneg %p2248
    $region66: #{upsample_layer_forward.1} parent=5 // pred_check_branch
      %2251 = sbr.rel (%p2249) target = $region68
    $region67: #{upsample_layer_forward.1} parent=5 // pred_region
      %s2252 = ssub.s32 %s16, 2
      // Predicated region
      $region69: #{upsample_layer_forward.1} parent=67 // pred_check
        %p2253 = pneg %p265
      $region70: #{upsample_layer_forward.1} parent=67 // pred_check_branch
        %2255 = sbr.rel (%p2253) target = $region72
      $region71: #{upsample_layer_forward.1} parent=67 // pred_region
        %p2256 = scmp.lt.s32.totalorder %s22, 1
        %s2257 = scalar_select %p2256, %s22, 1
        %s2258 = smul.addr %s2257, 8
        %s2259 = smul.addr %s2258, 8
        %s2260 = scalar_lea.vmem %s10, %s2259
      $region72: #{upsample_layer_forward.1} parent=67 // pred_fallthru
        _
    $region68: #{upsample_layer_forward.1} parent=5 // pred_fallthru
      _
  $region6: #{upsample_layer_forward.1} parent=0 // loop_footer
    %s20 = sadd.s32 1, %s16
  $region7: #{upsample_layer_forward.1} parent=0 // loop_footer_branch
    %15 = sbr.rel target = $region3
  $region8: #{upsample_layer_forward.1} parent=0 // loop_exit
    _

</llo_original>
